<compile_context>
chip_gen: v7x
topology: tpu7x:2x2x1
jax: 0.10.0
libtpu: 0.0.40
codegen_flags: <defaults>
</compile_context>

<pallas_src>
import jax
import jax.numpy as jnp
from jax.experimental import pallas as pl
from jax.experimental.pallas import tpu as pltpu


# -----------------------------------------------------------------------------
# Pallas kernels
# -----------------------------------------------------------------------------
def _gemm_bias(x, w, b):
    """out = w @ x + b[:, None]   (single GEMM, lane-dense (R, M) output).

    x : (Kc, M)   taps folded into the contraction dim, batch folded into M
    w : (R, Kc)
    b : (R,)
    """
    Kc, M = x.shape
    R = w.shape[0]
    tm = 256 if (M % 256 == 0) else M          # tile the pixel/lane dim

    def kernel(x_ref, w_ref, b_ref, o_ref):
        o_ref[...] = (jnp.dot(w_ref[...], x_ref[...],
                              preferred_element_type=jnp.float32)
                      + b_ref[...]).astype(o_ref.dtype)

    return pl.pallas_call(
        kernel,
        out_shape=jax.ShapeDtypeStruct((R, M), jnp.float32),
        grid=(M // tm,),
        in_specs=[pl.BlockSpec((Kc, tm), lambda i: (0, i)),
                  pl.BlockSpec((R, Kc), lambda i: (0, 0)),
                  pl.BlockSpec((R, 1), lambda i: (0, 0))],
        out_specs=pl.BlockSpec((R, tm), lambda i: (0, i)),
        compiler_params=pltpu.CompilerParams(
            dimension_semantics=("parallel",)),
    )(x, w, b.reshape(R, 1))


def _multi_gemm_bias(xs, ws, bs):
    """n independent GEMMs (w_i @ x_i + b_i) fused into ONE pallas_call."""
    n = len(xs)

    def kernel(*refs):
        for i in range(n):
            x_ref, w_ref, b_ref = refs[i], refs[n + i], refs[2 * n + i]
            o_ref = refs[3 * n + i]
            o_ref[...] = (jnp.dot(w_ref[...], x_ref[...],
                                  preferred_element_type=jnp.float32)
                          + b_ref[...]).astype(o_ref.dtype)

    ins = list(xs) + list(ws) + list(bs)
    out_shape = [jax.ShapeDtypeStruct((ws[i].shape[0], xs[i].shape[1]),
                                      jnp.float32) for i in range(n)]
    return pl.pallas_call(
        kernel,
        out_shape=out_shape,
        grid=(1,),
        in_specs=[pl.BlockSpec(a.shape, lambda i: (0, 0)) for a in ins],
        out_specs=[pl.BlockSpec(s.shape, lambda i: (0, 0)) for s in out_shape],
        compiler_params=pltpu.CompilerParams(
            dimension_semantics=("arbitrary",)),
    )(*ins)


def _head_sum_tanh(xs, ws, bcol):
    """tanh(sum_i w_i @ x_i + b) — all five final convs fused in one kernel."""
    n = len(xs)
    R, M = ws[0].shape[0], xs[0].shape[1]

    def kernel(*refs):
        acc = refs[2 * n][...] + jnp.dot(refs[n][...], refs[0][...],
                                         preferred_element_type=jnp.float32)
        for i in range(1, n):
            acc = acc + jnp.dot(refs[n + i][...], refs[i][...],
                                preferred_element_type=jnp.float32)
        refs[2 * n + 1][...] = jnp.tanh(acc).astype(refs[2 * n + 1].dtype)

    ins = list(xs) + list(ws) + [bcol]
    return pl.pallas_call(
        kernel,
        out_shape=jax.ShapeDtypeStruct((R, M), jnp.float32),
        grid=(1,),
        in_specs=[pl.BlockSpec(a.shape, lambda i: (0, 0)) for a in ins],
        out_specs=pl.BlockSpec((R, M), lambda i: (0, 0)),
        compiler_params=pltpu.CompilerParams(
            dimension_semantics=("arbitrary",)),
    )(*ins)


# -----------------------------------------------------------------------------
# Plain-JAX layout glue: tap slabs, weight packing, pixel shuffle
# -----------------------------------------------------------------------------
def _conv_slab(x_cnhw, K, stride, pad):
    """Tap-stacked GEMM operand for a KxK conv.

    x_cnhw: (C, N, H, W) -> slab (K*K*C, N*Ho*Wo)
    row = (kh*K + kw)*C + c ; col = (n*Ho + i)*Wo + j
    """
    C, N, H, W = x_cnhw.shape
    xp = jnp.pad(x_cnhw, ((0, 0), (0, 0), (pad, pad), (pad, pad)))
    Ho = (H + 2 * pad - K) // stride + 1
    Wo = (W + 2 * pad - K) // stride + 1
    taps = []
    for kh in range(K):
        for kw in range(K):
            t = xp[:, :, kh:kh + stride * (Ho - 1) + 1:stride,
                         kw:kw + stride * (Wo - 1) + 1:stride]
            taps.append(t)
    slab = jnp.stack(taps, axis=0)               # (K*K, C, N, Ho, Wo)
    return slab.reshape(K * K * C, N * Ho * Wo), Ho, Wo


def _conv_weight_2d(w_oihw):
    """nn.Conv2d weight (Cout, Cin, K, K) -> (Cout, K*K*Cin)."""
    Cout, Cin, K, _ = w_oihw.shape
    return jnp.transpose(w_oihw, (0, 2, 3, 1)).reshape(Cout, K * K * Cin)


def _convT_phase_weight(w_iohw):
    """Phase-packed ConvTranspose2d(4,2,1) weight -> (4*Cout, 9*Cin).

    y[oc, 2i+r, 2j+s] = sum_{ic,ty,tx} x_pad1[ic, i+ty, j+tx] * Wp[row, col]
    row = (r*2+s)*Cout + oc ; col = (ty*3+tx)*Cin + ic
    with ky = r + 3 - 2*ty, kx = s + 3 - 2*tx (zero weight if out of range).
    """
    Cin, Cout = w_iohw.shape[0], w_iohw.shape[1]
    zero = jnp.zeros((Cout, Cin), w_iohw.dtype)
    rows = []
    for r in range(2):
        for s in range(2):
            blocks = []
            for ty in range(3):
                ky = r + 3 - 2 * ty
                for tx in range(3):
                    kx = s + 3 - 2 * tx
                    if 0 <= ky < 4 and 0 <= kx < 4:
                        blocks.append(w_iohw[:, :, ky, kx].T)   # (Cout, Cin)
                    else:
                        blocks.append(zero)
            rows.append(jnp.concatenate(blocks, axis=1))
    return jnp.concatenate(rows, axis=0)


def _conv3_phase_weight(w_oihw):
    """Phase-packed 3x3/s1/p1 Conv2d weight -> (4*Cout, 16*Cin).

    Lets dconv1 produce its output directly in the same (phase, channel) x
    (N*H/2*W/2) layout as the transposed-conv branches, so the head kernel can
    sum all five branches before tanh.  Columns index a 4x4 stride-2 tap of
    the padded input: d[oc,2i+r,2j+s] = sum x_pad1[ic,2i+ty,2j+tx]*W[oc,ic,ty-r,tx-s].
    """
    Cout, Cin = w_oihw.shape[0], w_oihw.shape[1]
    zero = jnp.zeros((Cout, Cin), w_oihw.dtype)
    rows = []
    for r in range(2):
        for s in range(2):
            blocks = []
            for ty in range(4):
                for tx in range(4):
                    ky, kx = ty - r, tx - s
                    if 0 <= ky < 3 and 0 <= kx < 3:
                        blocks.append(w_oihw[:, :, ky, kx])     # (Cout, Cin)
                    else:
                        blocks.append(zero)
            rows.append(jnp.concatenate(blocks, axis=1))
    return jnp.concatenate(rows, axis=0)


def _pixel_shuffle(yp, Cout, N, H, W):
    """(4*Cout, N*H*W) phase-layout output -> (Cout, N, 2H, 2W)."""
    y = yp.reshape(2, 2, Cout, N, H, W)
    y = jnp.transpose(y, (2, 3, 4, 0, 5, 1))     # (Cout, N, H, r, W, s)
    return y.reshape(Cout, N, 2 * H, 2 * W)


# -----------------------------------------------------------------------------
# Layer wrappers
# -----------------------------------------------------------------------------
def conv2d(x_cnhw, w_oihw, b, stride, pad):
    """nn.Conv2d equivalent; x in CNHW layout."""
    Cout, _, K, _ = w_oihw.shape
    slab, Ho, Wo = _conv_slab(x_cnhw, K, stride, pad)
    y = _gemm_bias(slab, _conv_weight_2d(w_oihw), b)
    return y.reshape(Cout, x_cnhw.shape[1], Ho, Wo)


def conv_transpose2d_group(xs_cnhw, ws_iohw, bs):
    """A group of independent ConvTranspose2d(4,2,1) layers in ONE pallas_call."""
    slabs, wps, bcols, meta = [], [], [], []
    for xc, w, b in zip(xs_cnhw, ws_iohw, bs):
        _, N, H, W = xc.shape
        slab, _, _ = _conv_slab(xc, 3, 1, 1)
        Cout = w.shape[1]
        slabs.append(slab)
        wps.append(_convT_phase_weight(w))
        bcols.append(jnp.tile(b, 4).reshape(4 * Cout, 1))
        meta.append((Cout, N, H, W))
    outs = _multi_gemm_bias(slabs, wps, bcols)
    return [_pixel_shuffle(yp, *m) for yp, m in zip(outs, meta)]


# -----------------------------------------------------------------------------
# Generator
# -----------------------------------------------------------------------------
def init_generator_params(key, input_nc, output_nc, ngf):
    """Deterministic synthetic parameters with the torch __init__ shapes."""
    params = {}

    def conv_p(key, name, cout, cin, k):
        kw, kb = jax.random.split(key)
        params[name + "_w"] = 0.05 * jax.random.normal(kw, (cout, cin, k, k),
                                                       jnp.float32)
        params[name + "_b"] = 0.05 * jax.random.normal(kb, (cout,), jnp.float32)

    def convT_p(key, name, cin, cout, k=4):
        kw, kb = jax.random.split(key)
        params[name + "_w"] = 0.05 * jax.random.normal(kw, (cin, cout, k, k),
                                                       jnp.float32)
        params[name + "_b"] = 0.05 * jax.random.normal(kb, (cout,), jnp.float32)

    keys = jax.random.split(key, 16)
    conv_p(keys[0], "conv0", input_nc * 3, input_nc, 1)
    conv_p(keys[1], "conv1", ngf, input_nc * 3, 3)
    conv_p(keys[2], "conv2", ngf, ngf, 4)
    # conv3 is defined in __init__ but unused in forward(); omitted.
    conv_p(keys[3], "conv4", ngf, ngf, 4)
    conv_p(keys[4], "conv5", ngf, ngf, 4)
    conv_p(keys[5], "dconv1", output_nc, ngf, 3)
    convT_p(keys[6], "dconv2", ngf, output_nc)
    convT_p(keys[7], "dconv3_0", ngf, ngf)
    convT_p(keys[8], "dconv3_1", ngf, output_nc)
    convT_p(keys[9], "dconv4_0", ngf, ngf)
    convT_p(keys[10], "dconv4_1", ngf, ngf)
    convT_p(keys[11], "dconv4_2", ngf, output_nc)
    convT_p(keys[12], "dconv5_0", ngf, ngf)
    convT_p(keys[13], "dconv5_1", ngf, ngf)
    convT_p(keys[14], "dconv5_2", ngf, ngf)
    convT_p(keys[15], "dconv5_3", ngf, output_nc)
    return params


@jax.jit
def generator_forward(x_nchw, params):
    p = params
    x = jnp.transpose(x_nchw, (1, 0, 2, 3))                  # NCHW -> CNHW
    N = x.shape[1]

    # ---- encoder (chained on the raw c_i, exactly like the reference) ----
    c0 = conv2d(x,  p["conv0_w"], p["conv0_b"], 1, 0)
    c1 = conv2d(c0, p["conv1_w"], p["conv1_b"], 1, 1)
    c2 = conv2d(c1, p["conv2_w"], p["conv2_b"], 2, 1)
    c3 = conv2d(c2, p["conv4_w"], p["conv4_b"], 2, 1)        # conv4
    c4 = conv2d(c3, p["conv5_w"], p["conv5_b"], 2, 1)        # conv5
    c5 = conv2d(c4, p["conv5_w"], p["conv5_b"], 2, 1)        # conv5 (reused)

    # ReLU applied once per feature map (e_i = relu(c_i)).
    e1, e2, e3, e4, e5 = (jnp.maximum(c, 0.0) for c in (c1, c2, c3, c4, c5))

    # ---- decoder: fused waves of independent transposed convolutions ----
    t3, t4, t5 = conv_transpose2d_group(
        [e3, e4, e5],
        [p["dconv3_0_w"], p["dconv4_0_w"], p["dconv5_0_w"]],
        [p["dconv3_0_b"], p["dconv4_0_b"], p["dconv5_0_b"]])
    t4, t5 = conv_transpose2d_group(
        [t4, t5],
        [p["dconv4_1_w"], p["dconv5_1_w"]],
        [p["dconv4_1_b"], p["dconv5_1_b"]])
    (t5,) = conv_transpose2d_group([t5], [p["dconv5_2_w"]], [p["dconv5_2_b"]])

    # ---- fused head: d1..d5 final convs + bias + 5-way sum + tanh ----
    out_nc = p["dconv1_w"].shape[0]
    slab1, Ho, Wo = _conv_slab(e1, 4, 2, 1)       # phase-form slab for dconv1
    slabs = [slab1]
    ws = [_conv3_phase_weight(p["dconv1_w"])]
    for xc, wname in ((e2, "dconv2_w"), (t3, "dconv3_1_w"),
                      (t4, "dconv4_2_w"), (t5, "dconv5_3_w")):
        s, _, _ = _conv_slab(xc, 3, 1, 1)
        slabs.append(s)
        ws.append(_convT_phase_weight(p[wname]))
    b_total = (p["dconv1_b"] + p["dconv2_b"] + p["dconv3_1_b"]
               + p["dconv4_2_b"] + p["dconv5_3_b"])
    yp = _head_sum_tanh(slabs, ws, jnp.tile(b_total, 4).reshape(4 * out_nc, 1))
    y = _pixel_shuffle(yp, out_nc, N, Ho, Wo)     # (out_nc, N, H, W)
    return jnp.transpose(y, (1, 0, 2, 3))         # -> NCHW


# -----------------------------------------------------------------------------
# Pure-JAX reference (lax convolutions) for a correctness cross-check
# -----------------------------------------------------------------------------
def _reference_forward(x, p):
    dn = ("NCHW", "OIHW", "NCHW")
    hp = jax.lax.Precision.HIGHEST

    def conv(x, w, b, s, pad):
        y = jax.lax.conv_general_dilated(
            x, w, (s, s), [(pad, pad), (pad, pad)],
            dimension_numbers=dn, precision=hp)
        return y + b.reshape(1, -1, 1, 1)

    def convT(x, w, b):
        wf = jnp.transpose(w[:, :, ::-1, ::-1], (1, 0, 2, 3))
        y = jax.lax.conv_general_dilated(
            x, wf, (1, 1), [(2, 2), (2, 2)], lhs_dilation=(2, 2),
            dimension_numbers=dn, precision=hp)
        return y + b.reshape(1, -1, 1, 1)

    relu = lambda v: jnp.maximum(v, 0.0)
    c0 = conv(x, p["conv0_w"], p["conv0_b"], 1, 0)
    c1 = conv(c0, p["conv1_w"], p["conv1_b"], 1, 1)
    c2 = conv(c1, p["conv2_w"], p["conv2_b"], 2, 1)
    c3 = conv(c2, p["conv4_w"], p["conv4_b"], 2, 1)
    c4 = conv(c3, p["conv5_w"], p["conv5_b"], 2, 1)
    c5 = conv(c4, p["conv5_w"], p["conv5_b"], 2, 1)
    d1 = conv(relu(c1), p["dconv1_w"], p["dconv1_b"], 1, 1)
    d2 = convT(relu(c2), p["dconv2_w"], p["dconv2_b"])
    d3 = convT(convT(relu(c3), p["dconv3_0_w"], p["dconv3_0_b"]),
               p["dconv3_1_w"], p["dconv3_1_b"])
    d4 = convT(convT(convT(relu(c4), p["dconv4_0_w"], p["dconv4_0_b"]),
                     p["dconv4_1_w"], p["dconv4_1_b"]),
               p["dconv4_2_w"], p["dconv4_2_b"])
    d5 = convT(convT(convT(convT(relu(c5), p["dconv5_0_w"], p["dconv5_0_b"]),
                           p["dconv5_1_w"], p["dconv5_1_b"]),
                     p["dconv5_2_w"], p["dconv5_2_b"]),
               p["dconv5_3_w"], p["dconv5_3_b"])
    return jnp.tanh(d1 + d2 + d3 + d4 + d5)


if __name__ == "__main__":
    N, input_nc, output_nc, ngf, H, W = 2, 4, 3, 8, 16, 16

    key = jax.random.PRNGKey(0)
    k_params, k_input = jax.random.split(key)
    params = init_generator_params(k_params, input_nc, output_nc, ngf)
    x = jax.random.normal(k_input, (N, input_nc, H, W), jnp.float32)

    out = generator_forward(x, params)
    out = jax.block_until_ready(out)

    assert out.shape == (N, output_nc, H, W), out.shape
    assert bool(jnp.all(jnp.isfinite(out)))

    # Cross-check against the pure-JAX lax.conv reference of the same forward.
    ref = _reference_forward(x, params)
    err = float(jnp.max(jnp.abs(out - ref)))
    assert err < 5e-2, f"mismatch vs lax reference: max|diff| = {err}"

    print("KERNEL_OK")
</pallas_src>

<mosaic_0001>
module attributes {stable_mosaic.version = 11 : i64} {
  func.func @kernel(%arg0: i32, %arg1: memref<4x256xf32, #tpu.memory_space<vmem>>, %arg2: memref<12x4xf32, #tpu.memory_space<vmem>>, %arg3: memref<12x1xf32, #tpu.memory_space<vmem>>, %arg4: memref<12x256xf32, #tpu.memory_space<vmem>>) attributes {dimension_semantics = [#tpu.dimension_semantics<parallel>], iteration_bounds = array<i64: 2>, scalar_prefetch = 0 : i64, scratch_operands = 0 : i64, tpu.core_type = #tpu.core_type<tc>, window_params = [{transform_indices = @transform_0, window_bounds = array<i64: 4, 256>}, {pipeline_mode = #tpu.pipeline_mode<synchronous>, transform_indices = @transform_1, window_bounds = array<i64: 12, 4>}, {pipeline_mode = #tpu.pipeline_mode<synchronous>, transform_indices = @transform_2, window_bounds = array<i64: 12, 1>}, {transform_indices = @transform_3, window_bounds = array<i64: 12, 256>}]} {
    %c0 = arith.constant 0 : index
    %c0_0 = arith.constant 0 : index
    %0 = vector.load %arg2[%c0, %c0_0] : memref<12x4xf32, #tpu.memory_space<vmem>>, vector<12x4xf32>
    %c0_1 = arith.constant 0 : index
    %c0_2 = arith.constant 0 : index
    %1 = vector.load %arg1[%c0_1, %c0_2] : memref<4x256xf32, #tpu.memory_space<vmem>>, vector<4x256xf32>
    %cst = arith.constant dense<0.000000e+00> : vector<12x256xf32>
    %2 = tpu.matmul %0, %1, %cst {dimension_numbers = #tpu.dot_dimension_numbers<[1], [0], [0], [1], [0, 0, 1, 1], [], []>} : vector<12x4xf32>, vector<4x256xf32>, vector<12x256xf32> -> vector<12x256xf32>
    %c0_3 = arith.constant 0 : index
    %c0_4 = arith.constant 0 : index
    %3 = vector.load %arg3[%c0_3, %c0_4] : memref<12x1xf32, #tpu.memory_space<vmem>>, vector<12x1xf32>
    %4 = vector.broadcast %3 : vector<12x1xf32> to vector<12x256xf32>
    %5 = arith.addf %2, %4 : vector<12x256xf32>
    %c0_5 = arith.constant 0 : index
    %c0_6 = arith.constant 0 : index
    %6 = vector.load %arg4[%c0_5, %c0_6] : memref<12x256xf32, #tpu.memory_space<vmem>>, vector<12x256xf32>
    tpu.vector_store %arg4[%c0_5, %c0_6], %5 {strides = array<i32>} : memref<12x256xf32, #tpu.memory_space<vmem>>, vector<12x256xf32>,
    return
  }
  func.func @transform_0(%arg0: i32) -> (i32, i32) {
    %c0_i32 = arith.constant 0 : i32
    %c0_i32_0 = arith.constant 0 : i32
    return %c0_i32, %arg0 : i32, i32
  }
  func.func @transform_1(%arg0: i32) -> (i32, i32) {
    %c0_i32 = arith.constant 0 : i32
    %c0_i32_0 = arith.constant 0 : i32
    %c0_i32_1 = arith.constant 0 : i32
    return %c0_i32, %c0_i32_0 : i32, i32
  }
  func.func @transform_2(%arg0: i32) -> (i32, i32) {
    %c0_i32 = arith.constant 0 : i32
    %c0_i32_0 = arith.constant 0 : i32
    %c0_i32_1 = arith.constant 0 : i32
    return %c0_i32, %c0_i32_0 : i32, i32
  }
  func.func @transform_3(%arg0: i32) -> (i32, i32) {
    %c0_i32 = arith.constant 0 : i32
    %c0_i32_0 = arith.constant 0 : i32
    return %c0_i32, %arg0 : i32, i32
  }
}

module attributes {stable_mosaic.version = 11 : i64} {
  func.func @kernel(%arg0: i32, %arg1: memref<108x256xf32, #tpu.memory_space<vmem>>, %arg2: memref<8x108xf32, #tpu.memory_space<vmem>>, %arg3: memref<8x1xf32, #tpu.memory_space<vmem>>, %arg4: memref<8x256xf32, #tpu.memory_space<vmem>>) attributes {dimension_semantics = [#tpu.dimension_semantics<parallel>], iteration_bounds = array<i64: 2>, scalar_prefetch = 0 : i64, scratch_operands = 0 : i64, tpu.core_type = #tpu.core_type<tc>, window_params = [{transform_indices = @transform_0, window_bounds = array<i64: 108, 256>}, {pipeline_mode = #tpu.pipeline_mode<synchronous>, transform_indices = @transform_1, window_bounds = array<i64: 8, 108>}, {pipeline_mode = #tpu.pipeline_mode<synchronous>, transform_indices = @transform_2, window_bounds = array<i64: 8, 1>}, {transform_indices = @transform_3, window_bounds = array<i64: 8, 256>}]} {
    %c0 = arith.constant 0 : index
    %c0_0 = arith.constant 0 : index
    %0 = vector.load %arg2[%c0, %c0_0] : memref<8x108xf32, #tpu.memory_space<vmem>>, vector<8x108xf32>
    %c0_1 = arith.constant 0 : index
    %c0_2 = arith.constant 0 : index
    %1 = vector.load %arg1[%c0_1, %c0_2] : memref<108x256xf32, #tpu.memory_space<vmem>>, vector<108x256xf32>
    %cst = arith.constant dense<0.000000e+00> : vector<8x256xf32>
    %2 = tpu.matmul %0, %1, %cst {dimension_numbers = #tpu.dot_dimension_numbers<[1], [0], [0], [1], [0, 0, 1, 1], [], []>} : vector<8x108xf32>, vector<108x256xf32>, vector<8x256xf32> -> vector<8x256xf32>
    %c0_3 = arith.constant 0 : index
    %c0_4 = arith.constant 0 : index
    %3 = vector.load %arg3[%c0_3, %c0_4] : memref<8x1xf32, #tpu.memory_space<vmem>>, vector<8x1xf32>
    %4 = vector.broadcast %3 : vector<8x1xf32> to vector<8x256xf32>
    %5 = arith.addf %2, %4 : vector<8x256xf32>
    %c0_5 = arith.constant 0 : index
    %c0_6 = arith.constant 0 : index
    %6 = vector.load %arg4[%c0_5, %c0_6] : memref<8x256xf32, #tpu.memory_space<vmem>>, vector<8x256xf32>
    tpu.vector_store %arg4[%c0_5, %c0_6], %5 {strides = array<i32>} : memref<8x256xf32, #tpu.memory_space<vmem>>, vector<8x256xf32>,
    return
  }
  func.func @transform_0(%arg0: i32) -> (i32, i32) {
    %c0_i32 = arith.constant 0 : i32
    %c0_i32_0 = arith.constant 0 : i32
    return %c0_i32, %arg0 : i32, i32
  }
  func.func @transform_1(%arg0: i32) -> (i32, i32) {
    %c0_i32 = arith.constant 0 : i32
    %c0_i32_0 = arith.constant 0 : i32
    %c0_i32_1 = arith.constant 0 : i32
    return %c0_i32, %c0_i32_0 : i32, i32
  }
  func.func @transform_2(%arg0: i32) -> (i32, i32) {
    %c0_i32 = arith.constant 0 : i32
    %c0_i32_0 = arith.constant 0 : i32
    %c0_i32_1 = arith.constant 0 : i32
    return %c0_i32, %c0_i32_0 : i32, i32
  }
  func.func @transform_3(%arg0: i32) -> (i32, i32) {
    %c0_i32 = arith.constant 0 : i32
    %c0_i32_0 = arith.constant 0 : i32
    return %c0_i32, %arg0 : i32, i32
  }
}

module attributes {stable_mosaic.version = 11 : i64} {
  func.func @kernel(%arg0: i32, %arg1: memref<128x128xf32, #tpu.memory_space<vmem>>, %arg2: memref<8x128xf32, #tpu.memory_space<vmem>>, %arg3: memref<8x1xf32, #tpu.memory_space<vmem>>, %arg4: memref<8x128xf32, #tpu.memory_space<vmem>>) attributes {dimension_semantics = [#tpu.dimension_semantics<parallel>], iteration_bounds = array<i64: 1>, scalar_prefetch = 0 : i64, scratch_operands = 0 : i64, tpu.core_type = #tpu.core_type<tc>, window_params = [{transform_indices = @transform_0, window_bounds = array<i64: 128, 128>}, {pipeline_mode = #tpu.pipeline_mode<synchronous>, transform_indices = @transform_1, window_bounds = array<i64: 8, 128>}, {pipeline_mode = #tpu.pipeline_mode<synchronous>, transform_indices = @transform_2, window_bounds = array<i64: 8, 1>}, {transform_indices = @transform_3, window_bounds = array<i64: 8, 128>}]} {
    %c0 = arith.constant 0 : index
    %c0_0 = arith.constant 0 : index
    %0 = vector.load %arg2[%c0, %c0_0] : memref<8x128xf32, #tpu.memory_space<vmem>>, vector<8x128xf32>
    %c0_1 = arith.constant 0 : index
    %c0_2 = arith.constant 0 : index
    %1 = vector.load %arg1[%c0_1, %c0_2] : memref<128x128xf32, #tpu.memory_space<vmem>>, vector<128x128xf32>
    %cst = arith.constant dense<0.000000e+00> : vector<8x128xf32>
    %2 = tpu.matmul %0, %1, %cst {dimension_numbers = #tpu.dot_dimension_numbers<[1], [0], [0], [1], [0, 0, 1, 1], [], []>} : vector<8x128xf32>, vector<128x128xf32>, vector<8x128xf32> -> vector<8x128xf32>
    %c0_3 = arith.constant 0 : index
    %c0_4 = arith.constant 0 : index
    %3 = vector.load %arg3[%c0_3, %c0_4] : memref<8x1xf32, #tpu.memory_space<vmem>>, vector<8x1xf32>
    %4 = vector.broadcast %3 : vector<8x1xf32> to vector<8x128xf32>
    %5 = arith.addf %2, %4 : vector<8x128xf32>
    %c0_5 = arith.constant 0 : index
    %c0_6 = arith.constant 0 : index
    %6 = vector.load %arg4[%c0_5, %c0_6] : memref<8x128xf32, #tpu.memory_space<vmem>>, vector<8x128xf32>
    tpu.vector_store %arg4[%c0_5, %c0_6], %5 {strides = array<i32>} : memref<8x128xf32, #tpu.memory_space<vmem>>, vector<8x128xf32>,
    return
  }
  func.func @transform_0(%arg0: i32) -> (i32, i32) {
    %c0_i32 = arith.constant 0 : i32
    %c0_i32_0 = arith.constant 0 : i32
    return %c0_i32, %arg0 : i32, i32
  }
  func.func @transform_1(%arg0: i32) -> (i32, i32) {
    %c0_i32 = arith.constant 0 : i32
    %c0_i32_0 = arith.constant 0 : i32
    %c0_i32_1 = arith.constant 0 : i32
    return %c0_i32, %c0_i32_0 : i32, i32
  }
  func.func @transform_2(%arg0: i32) -> (i32, i32) {
    %c0_i32 = arith.constant 0 : i32
    %c0_i32_0 = arith.constant 0 : i32
    %c0_i32_1 = arith.constant 0 : i32
    return %c0_i32, %c0_i32_0 : i32, i32
  }
  func.func @transform_3(%arg0: i32) -> (i32, i32) {
    %c0_i32 = arith.constant 0 : i32
    %c0_i32_0 = arith.constant 0 : i32
    return %c0_i32, %arg0 : i32, i32
  }
}

module attributes {stable_mosaic.version = 11 : i64} {
  func.func @kernel(%arg0: i32, %arg1: memref<128x32xf32, #tpu.memory_space<vmem>>, %arg2: memref<8x128xf32, #tpu.memory_space<vmem>>, %arg3: memref<8x1xf32, #tpu.memory_space<vmem>>, %arg4: memref<8x32xf32, #tpu.memory_space<vmem>>) attributes {dimension_semantics = [#tpu.dimension_semantics<parallel>], iteration_bounds = array<i64: 1>, scalar_prefetch = 0 : i64, scratch_operands = 0 : i64, tpu.core_type = #tpu.core_type<tc>, window_params = [{transform_indices = @transform_0, window_bounds = array<i64: 128, 32>}, {pipeline_mode = #tpu.pipeline_mode<synchronous>, transform_indices = @transform_1, window_bounds = array<i64: 8, 128>}, {pipeline_mode = #tpu.pipeline_mode<synchronous>, transform_indices = @transform_2, window_bounds = array<i64: 8, 1>}, {transform_indices = @transform_3, window_bounds = array<i64: 8, 32>}]} {
    %c0 = arith.constant 0 : index
    %c0_0 = arith.constant 0 : index
    %0 = vector.load %arg2[%c0, %c0_0] : memref<8x128xf32, #tpu.memory_space<vmem>>, vector<8x128xf32>
    %c0_1 = arith.constant 0 : index
    %c0_2 = arith.constant 0 : index
    %1 = vector.load %arg1[%c0_1, %c0_2] : memref<128x32xf32, #tpu.memory_space<vmem>>, vector<128x32xf32>
    %cst = arith.constant dense<0.000000e+00> : vector<8x32xf32>
    %2 = tpu.matmul %0, %1, %cst {dimension_numbers = #tpu.dot_dimension_numbers<[1], [0], [0], [1], [0, 0, 1, 1], [], []>} : vector<8x128xf32>, vector<128x32xf32>, vector<8x32xf32> -> vector<8x32xf32>
    %c0_3 = arith.constant 0 : index
    %c0_4 = arith.constant 0 : index
    %3 = vector.load %arg3[%c0_3, %c0_4] : memref<8x1xf32, #tpu.memory_space<vmem>>, vector<8x1xf32>
    %4 = vector.broadcast %3 : vector<8x1xf32> to vector<8x32xf32>
    %5 = arith.addf %2, %4 : vector<8x32xf32>
    %c0_5 = arith.constant 0 : index
    %c0_6 = arith.constant 0 : index
    %6 = vector.load %arg4[%c0_5, %c0_6] : memref<8x32xf32, #tpu.memory_space<vmem>>, vector<8x32xf32>
    tpu.vector_store %arg4[%c0_5, %c0_6], %5 {strides = array<i32>} : memref<8x32xf32, #tpu.memory_space<vmem>>, vector<8x32xf32>,
    return
  }
  func.func @transform_0(%arg0: i32) -> (i32, i32) {
    %c0_i32 = arith.constant 0 : i32
    %c0_i32_0 = arith.constant 0 : i32
    return %c0_i32, %arg0 : i32, i32
  }
  func.func @transform_1(%arg0: i32) -> (i32, i32) {
    %c0_i32 = arith.constant 0 : i32
    %c0_i32_0 = arith.constant 0 : i32
    %c0_i32_1 = arith.constant 0 : i32
    return %c0_i32, %c0_i32_0 : i32, i32
  }
  func.func @transform_2(%arg0: i32) -> (i32, i32) {
    %c0_i32 = arith.constant 0 : i32
    %c0_i32_0 = arith.constant 0 : i32
    %c0_i32_1 = arith.constant 0 : i32
    return %c0_i32, %c0_i32_0 : i32, i32
  }
  func.func @transform_3(%arg0: i32) -> (i32, i32) {
    %c0_i32 = arith.constant 0 : i32
    %c0_i32_0 = arith.constant 0 : i32
    return %c0_i32, %arg0 : i32, i32
  }
}

module attributes {stable_mosaic.version = 11 : i64} {
  func.func @kernel(%arg0: i32, %arg1: memref<128x8xf32, #tpu.memory_space<vmem>>, %arg2: memref<8x128xf32, #tpu.memory_space<vmem>>, %arg3: memref<8x1xf32, #tpu.memory_space<vmem>>, %arg4: memref<8x8xf32, #tpu.memory_space<vmem>>) attributes {dimension_semantics = [#tpu.dimension_semantics<parallel>], iteration_bounds = array<i64: 1>, scalar_prefetch = 0 : i64, scratch_operands = 0 : i64, tpu.core_type = #tpu.core_type<tc>, window_params = [{transform_indices = @transform_0, window_bounds = array<i64: 128, 8>}, {pipeline_mode = #tpu.pipeline_mode<synchronous>, transform_indices = @transform_1, window_bounds = array<i64: 8, 128>}, {pipeline_mode = #tpu.pipeline_mode<synchronous>, transform_indices = @transform_2, window_bounds = array<i64: 8, 1>}, {transform_indices = @transform_3, window_bounds = array<i64: 8, 8>}]} {
    %c0 = arith.constant 0 : index
    %c0_0 = arith.constant 0 : index
    %0 = vector.load %arg2[%c0, %c0_0] : memref<8x128xf32, #tpu.memory_space<vmem>>, vector<8x128xf32>
    %c0_1 = arith.constant 0 : index
    %c0_2 = arith.constant 0 : index
    %1 = vector.load %arg1[%c0_1, %c0_2] : memref<128x8xf32, #tpu.memory_space<vmem>>, vector<128x8xf32>
    %cst = arith.constant dense<0.000000e+00> : vector<8x8xf32>
    %2 = tpu.matmul %0, %1, %cst {dimension_numbers = #tpu.dot_dimension_numbers<[1], [0], [0], [1], [0, 0, 1, 1], [], []>} : vector<8x128xf32>, vector<128x8xf32>, vector<8x8xf32> -> vector<8x8xf32>
    %c0_3 = arith.constant 0 : index
    %c0_4 = arith.constant 0 : index
    %3 = vector.load %arg3[%c0_3, %c0_4] : memref<8x1xf32, #tpu.memory_space<vmem>>, vector<8x1xf32>
    %4 = vector.broadcast %3 : vector<8x1xf32> to vector<8x8xf32>
    %5 = arith.addf %2, %4 : vector<8x8xf32>
    %c0_5 = arith.constant 0 : index
    %c0_6 = arith.constant 0 : index
    %6 = vector.load %arg4[%c0_5, %c0_6] : memref<8x8xf32, #tpu.memory_space<vmem>>, vector<8x8xf32>
    tpu.vector_store %arg4[%c0_5, %c0_6], %5 {strides = array<i32>} : memref<8x8xf32, #tpu.memory_space<vmem>>, vector<8x8xf32>,
    return
  }
  func.func @transform_0(%arg0: i32) -> (i32, i32) {
    %c0_i32 = arith.constant 0 : i32
    %c0_i32_0 = arith.constant 0 : i32
    return %c0_i32, %arg0 : i32, i32
  }
  func.func @transform_1(%arg0: i32) -> (i32, i32) {
    %c0_i32 = arith.constant 0 : i32
    %c0_i32_0 = arith.constant 0 : i32
    %c0_i32_1 = arith.constant 0 : i32
    return %c0_i32, %c0_i32_0 : i32, i32
  }
  func.func @transform_2(%arg0: i32) -> (i32, i32) {
    %c0_i32 = arith.constant 0 : i32
    %c0_i32_0 = arith.constant 0 : i32
    %c0_i32_1 = arith.constant 0 : i32
    return %c0_i32, %c0_i32_0 : i32, i32
  }
  func.func @transform_3(%arg0: i32) -> (i32, i32) {
    %c0_i32 = arith.constant 0 : i32
    %c0_i32_0 = arith.constant 0 : i32
    return %c0_i32, %arg0 : i32, i32
  }
}

module attributes {stable_mosaic.version = 11 : i64} {
  func.func @kernel(%arg0: i32, %arg1: memref<128x2xf32, #tpu.memory_space<vmem>>, %arg2: memref<8x128xf32, #tpu.memory_space<vmem>>, %arg3: memref<8x1xf32, #tpu.memory_space<vmem>>, %arg4: memref<8x2xf32, #tpu.memory_space<vmem>>) attributes {dimension_semantics = [#tpu.dimension_semantics<parallel>], iteration_bounds = array<i64: 1>, scalar_prefetch = 0 : i64, scratch_operands = 0 : i64, tpu.core_type = #tpu.core_type<tc>, window_params = [{transform_indices = @transform_0, window_bounds = array<i64: 128, 2>}, {pipeline_mode = #tpu.pipeline_mode<synchronous>, transform_indices = @transform_1, window_bounds = array<i64: 8, 128>}, {pipeline_mode = #tpu.pipeline_mode<synchronous>, transform_indices = @transform_2, window_bounds = array<i64: 8, 1>}, {transform_indices = @transform_3, window_bounds = array<i64: 8, 2>}]} {
    %c0 = arith.constant 0 : index
    %c0_0 = arith.constant 0 : index
    %0 = vector.load %arg2[%c0, %c0_0] : memref<8x128xf32, #tpu.memory_space<vmem>>, vector<8x128xf32>
    %c0_1 = arith.constant 0 : index
    %c0_2 = arith.constant 0 : index
    %1 = vector.load %arg1[%c0_1, %c0_2] : memref<128x2xf32, #tpu.memory_space<vmem>>, vector<128x2xf32>
    %cst = arith.constant dense<0.000000e+00> : vector<8x2xf32>
    %2 = tpu.matmul %0, %1, %cst {dimension_numbers = #tpu.dot_dimension_numbers<[1], [0], [0], [1], [0, 0, 1, 1], [], []>} : vector<8x128xf32>, vector<128x2xf32>, vector<8x2xf32> -> vector<8x2xf32>
    %c0_3 = arith.constant 0 : index
    %c0_4 = arith.constant 0 : index
    %3 = vector.load %arg3[%c0_3, %c0_4] : memref<8x1xf32, #tpu.memory_space<vmem>>, vector<8x1xf32>
    %4 = vector.broadcast %3 : vector<8x1xf32> to vector<8x2xf32>
    %5 = arith.addf %2, %4 : vector<8x2xf32>
    %c0_5 = arith.constant 0 : index
    %c0_6 = arith.constant 0 : index
    %6 = vector.load %arg4[%c0_5, %c0_6] : memref<8x2xf32, #tpu.memory_space<vmem>>, vector<8x2xf32>
    tpu.vector_store %arg4[%c0_5, %c0_6], %5 {strides = array<i32>} : memref<8x2xf32, #tpu.memory_space<vmem>>, vector<8x2xf32>,
    return
  }
  func.func @transform_0(%arg0: i32) -> (i32, i32) {
    %c0_i32 = arith.constant 0 : i32
    %c0_i32_0 = arith.constant 0 : i32
    return %c0_i32, %arg0 : i32, i32
  }
  func.func @transform_1(%arg0: i32) -> (i32, i32) {
    %c0_i32 = arith.constant 0 : i32
    %c0_i32_0 = arith.constant 0 : i32
    %c0_i32_1 = arith.constant 0 : i32
    return %c0_i32, %c0_i32_0 : i32, i32
  }
  func.func @transform_2(%arg0: i32) -> (i32, i32) {
    %c0_i32 = arith.constant 0 : i32
    %c0_i32_0 = arith.constant 0 : i32
    %c0_i32_1 = arith.constant 0 : i32
    return %c0_i32, %c0_i32_0 : i32, i32
  }
  func.func @transform_3(%arg0: i32) -> (i32, i32) {
    %c0_i32 = arith.constant 0 : i32
    %c0_i32_0 = arith.constant 0 : i32
    return %c0_i32, %arg0 : i32, i32
  }
}

module attributes {stable_mosaic.version = 11 : i64} {
  func.func @kernel(%arg0: i32, %arg1: memref<72x32xf32, #tpu.memory_space<vmem>>, %arg2: memref<72x8xf32, #tpu.memory_space<vmem>>, %arg3: memref<72x2xf32, #tpu.memory_space<vmem>>, %arg4: memref<32x72xf32, #tpu.memory_space<vmem>>, %arg5: memref<32x72xf32, #tpu.memory_space<vmem>>, %arg6: memref<32x72xf32, #tpu.memory_space<vmem>>, %arg7: memref<32x1xf32, #tpu.memory_space<vmem>>, %arg8: memref<32x1xf32, #tpu.memory_space<vmem>>, %arg9: memref<32x1xf32, #tpu.memory_space<vmem>>, %arg10: memref<32x32xf32, #tpu.memory_space<vmem>>, %arg11: memref<32x8xf32, #tpu.memory_space<vmem>>, %arg12: memref<32x2xf32, #tpu.memory_space<vmem>>) attributes {dimension_semantics = [#tpu.dimension_semantics<arbitrary>], iteration_bounds = array<i64: 1>, scalar_prefetch = 0 : i64, scratch_operands = 0 : i64, tpu.core_type = #tpu.core_type<tc>, window_params = [{pipeline_mode = #tpu.pipeline_mode<synchronous>, transform_indices = @transform_0, window_bounds = array<i64: 72, 32>}, {pipeline_mode = #tpu.pipeline_mode<synchronous>, transform_indices = @transform_1, window_bounds = array<i64: 72, 8>}, {pipeline_mode = #tpu.pipeline_mode<synchronous>, transform_indices = @transform_2, window_bounds = array<i64: 72, 2>}, {pipeline_mode = #tpu.pipeline_mode<synchronous>, transform_indices = @transform_3, window_bounds = array<i64: 32, 72>}, {pipeline_mode = #tpu.pipeline_mode<synchronous>, transform_indices = @transform_4, window_bounds = array<i64: 32, 72>}, {pipeline_mode = #tpu.pipeline_mode<synchronous>, transform_indices = @transform_5, window_bounds = array<i64: 32, 72>}, {pipeline_mode = #tpu.pipeline_mode<synchronous>, transform_indices = @transform_6, window_bounds = array<i64: 32, 1>}, {pipeline_mode = #tpu.pipeline_mode<synchronous>, transform_indices = @transform_7, window_bounds = array<i64: 32, 1>}, {pipeline_mode = #tpu.pipeline_mode<synchronous>, transform_indices = @transform_8, window_bounds = array<i64: 32, 1>}, {pipeline_mode = #tpu.pipeline_mode<synchronous>, transform_indices = @transform_9, window_bounds = array<i64: 32, 32>}, {pipeline_mode = #tpu.pipeline_mode<synchronous>, transform_indices = @transform_10, window_bounds = array<i64: 32, 8>}, {pipeline_mode = #tpu.pipeline_mode<synchronous>, transform_indices = @transform_11, window_bounds = array<i64: 32, 2>}]} {
    %c0 = arith.constant 0 : index
    %c0_0 = arith.constant 0 : index
    %0 = vector.load %arg4[%c0, %c0_0] : memref<32x72xf32, #tpu.memory_space<vmem>>, vector<32x72xf32>
    %c0_1 = arith.constant 0 : index
    %c0_2 = arith.constant 0 : index
    %1 = vector.load %arg1[%c0_1, %c0_2] : memref<72x32xf32, #tpu.memory_space<vmem>>, vector<72x32xf32>
    %cst = arith.constant dense<0.000000e+00> : vector<32x32xf32>
    %2 = tpu.matmul %0, %1, %cst {dimension_numbers = #tpu.dot_dimension_numbers<[1], [0], [0], [1], [0, 0, 1, 1], [], []>} : vector<32x72xf32>, vector<72x32xf32>, vector<32x32xf32> -> vector<32x32xf32>
    %c0_3 = arith.constant 0 : index
    %c0_4 = arith.constant 0 : index
    %3 = vector.load %arg7[%c0_3, %c0_4] : memref<32x1xf32, #tpu.memory_space<vmem>>, vector<32x1xf32>
    %4 = vector.broadcast %3 : vector<32x1xf32> to vector<32x32xf32>
    %5 = arith.addf %2, %4 : vector<32x32xf32>
    %c0_5 = arith.constant 0 : index
    %c0_6 = arith.constant 0 : index
    %6 = vector.load %arg10[%c0_5, %c0_6] : memref<32x32xf32, #tpu.memory_space<vmem>>, vector<32x32xf32>
    tpu.vector_store %arg10[%c0_5, %c0_6], %5 {strides = array<i32>} : memref<32x32xf32, #tpu.memory_space<vmem>>, vector<32x32xf32>,
    %c0_7 = arith.constant 0 : index
    %c0_8 = arith.constant 0 : index
    %7 = vector.load %arg5[%c0_7, %c0_8] : memref<32x72xf32, #tpu.memory_space<vmem>>, vector<32x72xf32>
    %c0_9 = arith.constant 0 : index
    %c0_10 = arith.constant 0 : index
    %8 = vector.load %arg2[%c0_9, %c0_10] : memref<72x8xf32, #tpu.memory_space<vmem>>, vector<72x8xf32>
    %cst_11 = arith.constant dense<0.000000e+00> : vector<32x8xf32>
    %9 = tpu.matmul %7, %8, %cst_11 {dimension_numbers = #tpu.dot_dimension_numbers<[1], [0], [0], [1], [0, 0, 1, 1], [], []>} : vector<32x72xf32>, vector<72x8xf32>, vector<32x8xf32> -> vector<32x8xf32>
    %c0_12 = arith.constant 0 : index
    %c0_13 = arith.constant 0 : index
    %10 = vector.load %arg8[%c0_12, %c0_13] : memref<32x1xf32, #tpu.memory_space<vmem>>, vector<32x1xf32>
    %11 = vector.broadcast %10 : vector<32x1xf32> to vector<32x8xf32>
    %12 = arith.addf %9, %11 : vector<32x8xf32>
    %c0_14 = arith.constant 0 : index
    %c0_15 = arith.constant 0 : index
    %13 = vector.load %arg11[%c0_14, %c0_15] : memref<32x8xf32, #tpu.memory_space<vmem>>, vector<32x8xf32>
    tpu.vector_store %arg11[%c0_14, %c0_15], %12 {strides = array<i32>} : memref<32x8xf32, #tpu.memory_space<vmem>>, vector<32x8xf32>,
    %c0_16 = arith.constant 0 : index
    %c0_17 = arith.constant 0 : index
    %14 = vector.load %arg6[%c0_16, %c0_17] : memref<32x72xf32, #tpu.memory_space<vmem>>, vector<32x72xf32>
    %c0_18 = arith.constant 0 : index
    %c0_19 = arith.constant 0 : index
    %15 = vector.load %arg3[%c0_18, %c0_19] : memref<72x2xf32, #tpu.memory_space<vmem>>, vector<72x2xf32>
    %cst_20 = arith.constant dense<0.000000e+00> : vector<32x2xf32>
    %16 = tpu.matmul %14, %15, %cst_20 {dimension_numbers = #tpu.dot_dimension_numbers<[1], [0], [0], [1], [0, 0, 1, 1], [], []>} : vector<32x72xf32>, vector<72x2xf32>, vector<32x2xf32> -> vector<32x2xf32>
    %c0_21 = arith.constant 0 : index
    %c0_22 = arith.constant 0 : index
    %17 = vector.load %arg9[%c0_21, %c0_22] : memref<32x1xf32, #tpu.memory_space<vmem>>, vector<32x1xf32>
    %18 = vector.broadcast %17 : vector<32x1xf32> to vector<32x2xf32>
    %19 = arith.addf %16, %18 : vector<32x2xf32>
    %c0_23 = arith.constant 0 : index
    %c0_24 = arith.constant 0 : index
    %20 = vector.load %arg12[%c0_23, %c0_24] : memref<32x2xf32, #tpu.memory_space<vmem>>, vector<32x2xf32>
    tpu.vector_store %arg12[%c0_23, %c0_24], %19 {strides = array<i32>} : memref<32x2xf32, #tpu.memory_space<vmem>>, vector<32x2xf32>,
    return
  }
  func.func @transform_0(%arg0: i32) -> (i32, i32) {
    %c0_i32 = arith.constant 0 : i32
    %c0_i32_0 = arith.constant 0 : i32
    %c0_i32_1 = arith.constant 0 : i32
    return %c0_i32, %c0_i32_0 : i32, i32
  }
  func.func @transform_1(%arg0: i32) -> (i32, i32) {
    %c0_i32 = arith.constant 0 : i32
    %c0_i32_0 = arith.constant 0 : i32
    %c0_i32_1 = arith.constant 0 : i32
    return %c0_i32, %c0_i32_0 : i32, i32
  }
  func.func @transform_2(%arg0: i32) -> (i32, i32) {
    %c0_i32 = arith.constant 0 : i32
    %c0_i32_0 = arith.constant 0 : i32
    %c0_i32_1 = arith.constant 0 : i32
    return %c0_i32, %c0_i32_0 : i32, i32
  }
  func.func @transform_3(%arg0: i32) -> (i32, i32) {
    %c0_i32 = arith.constant 0 : i32
    %c0_i32_0 = arith.constant 0 : i32
    %c0_i32_1 = arith.constant 0 : i32
    return %c0_i32, %c0_i32_0 : i32, i32
  }
  func.func @transform_4(%arg0: i32) -> (i32, i32) {
    %c0_i32 = arith.constant 0 : i32
    %c0_i32_0 = arith.constant 0 : i32
    %c0_i32_1 = arith.constant 0 : i32
    return %c0_i32, %c0_i32_0 : i32, i32
  }
  func.func @transform_5(%arg0: i32) -> (i32, i32) {
    %c0_i32 = arith.constant 0 : i32
    %c0_i32_0 = arith.constant 0 : i32
    %c0_i32_1 = arith.constant 0 : i32
    return %c0_i32, %c0_i32_0 : i32, i32
  }
  func.func @transform_6(%arg0: i32) -> (i32, i32) {
    %c0_i32 = arith.constant 0 : i32
    %c0_i32_0 = arith.constant 0 : i32
    %c0_i32_1 = arith.constant 0 : i32
    return %c0_i32, %c0_i32_0 : i32, i32
  }
  func.func @transform_7(%arg0: i32) -> (i32, i32) {
    %c0_i32 = arith.constant 0 : i32
    %c0_i32_0 = arith.constant 0 : i32
    %c0_i32_1 = arith.constant 0 : i32
    return %c0_i32, %c0_i32_0 : i32, i32
  }
  func.func @transform_8(%arg0: i32) -> (i32, i32) {
    %c0_i32 = arith.constant 0 : i32
    %c0_i32_0 = arith.constant 0 : i32
    %c0_i32_1 = arith.constant 0 : i32
    return %c0_i32, %c0_i32_0 : i32, i32
  }
  func.func @transform_9(%arg0: i32) -> (i32, i32) {
    %c0_i32 = arith.constant 0 : i32
    %c0_i32_0 = arith.constant 0 : i32
    %c0_i32_1 = arith.constant 0 : i32
    return %c0_i32, %c0_i32_0 : i32, i32
  }
  func.func @transform_10(%arg0: i32) -> (i32, i32) {
    %c0_i32 = arith.constant 0 : i32
    %c0_i32_0 = arith.constant 0 : i32
    %c0_i32_1 = arith.constant 0 : i32
    return %c0_i32, %c0_i32_0 : i32, i32
  }
  func.func @transform_11(%arg0: i32) -> (i32, i32) {
    %c0_i32 = arith.constant 0 : i32
    %c0_i32_0 = arith.constant 0 : i32
    %c0_i32_1 = arith.constant 0 : i32
    return %c0_i32, %c0_i32_0 : i32, i32
  }
}

module attributes {stable_mosaic.version = 11 : i64} {
  func.func @kernel(%arg0: i32, %arg1: memref<72x32xf32, #tpu.memory_space<vmem>>, %arg2: memref<32x72xf32, #tpu.memory_space<vmem>>, %arg3: memref<32x1xf32, #tpu.memory_space<vmem>>, %arg4: memref<32x32xf32, #tpu.memory_space<vmem>>) attributes {dimension_semantics = [#tpu.dimension_semantics<arbitrary>], iteration_bounds = array<i64: 1>, scalar_prefetch = 0 : i64, scratch_operands = 0 : i64, tpu.core_type = #tpu.core_type<tc>, window_params = [{pipeline_mode = #tpu.pipeline_mode<synchronous>, transform_indices = @transform_0, window_bounds = array<i64: 72, 32>}, {pipeline_mode = #tpu.pipeline_mode<synchronous>, transform_indices = @transform_1, window_bounds = array<i64: 32, 72>}, {pipeline_mode = #tpu.pipeline_mode<synchronous>, transform_indices = @transform_2, window_bounds = array<i64: 32, 1>}, {pipeline_mode = #tpu.pipeline_mode<synchronous>, transform_indices = @transform_3, window_bounds = array<i64: 32, 32>}]} {
    %c0 = arith.constant 0 : index
    %c0_0 = arith.constant 0 : index
    %0 = vector.load %arg2[%c0, %c0_0] : memref<32x72xf32, #tpu.memory_space<vmem>>, vector<32x72xf32>
    %c0_1 = arith.constant 0 : index
    %c0_2 = arith.constant 0 : index
    %1 = vector.load %arg1[%c0_1, %c0_2] : memref<72x32xf32, #tpu.memory_space<vmem>>, vector<72x32xf32>
    %cst = arith.constant dense<0.000000e+00> : vector<32x32xf32>
    %2 = tpu.matmul %0, %1, %cst {dimension_numbers = #tpu.dot_dimension_numbers<[1], [0], [0], [1], [0, 0, 1, 1], [], []>} : vector<32x72xf32>, vector<72x32xf32>, vector<32x32xf32> -> vector<32x32xf32>
    %c0_3 = arith.constant 0 : index
    %c0_4 = arith.constant 0 : index
    %3 = vector.load %arg3[%c0_3, %c0_4] : memref<32x1xf32, #tpu.memory_space<vmem>>, vector<32x1xf32>
    %4 = vector.broadcast %3 : vector<32x1xf32> to vector<32x32xf32>
    %5 = arith.addf %2, %4 : vector<32x32xf32>
    %c0_5 = arith.constant 0 : index
    %c0_6 = arith.constant 0 : index
    %6 = vector.load %arg4[%c0_5, %c0_6] : memref<32x32xf32, #tpu.memory_space<vmem>>, vector<32x32xf32>
    tpu.vector_store %arg4[%c0_5, %c0_6], %5 {strides = array<i32>} : memref<32x32xf32, #tpu.memory_space<vmem>>, vector<32x32xf32>,
    return
  }
  func.func @transform_0(%arg0: i32) -> (i32, i32) {
    %c0_i32 = arith.constant 0 : i32
    %c0_i32_0 = arith.constant 0 : i32
    %c0_i32_1 = arith.constant 0 : i32
    return %c0_i32, %c0_i32_0 : i32, i32
  }
  func.func @transform_1(%arg0: i32) -> (i32, i32) {
    %c0_i32 = arith.constant 0 : i32
    %c0_i32_0 = arith.constant 0 : i32
    %c0_i32_1 = arith.constant 0 : i32
    return %c0_i32, %c0_i32_0 : i32, i32
  }
  func.func @transform_2(%arg0: i32) -> (i32, i32) {
    %c0_i32 = arith.constant 0 : i32
    %c0_i32_0 = arith.constant 0 : i32
    %c0_i32_1 = arith.constant 0 : i32
    return %c0_i32, %c0_i32_0 : i32, i32
  }
  func.func @transform_3(%arg0: i32) -> (i32, i32) {
    %c0_i32 = arith.constant 0 : i32
    %c0_i32_0 = arith.constant 0 : i32
    %c0_i32_1 = arith.constant 0 : i32
    return %c0_i32, %c0_i32_0 : i32, i32
  }
}

module attributes {stable_mosaic.version = 11 : i64} {
  func.func @kernel(%arg0: i32, %arg1: memref<72x32xf32, #tpu.memory_space<vmem>>, %arg2: memref<72x8xf32, #tpu.memory_space<vmem>>, %arg3: memref<32x72xf32, #tpu.memory_space<vmem>>, %arg4: memref<32x72xf32, #tpu.memory_space<vmem>>, %arg5: memref<32x1xf32, #tpu.memory_space<vmem>>, %arg6: memref<32x1xf32, #tpu.memory_space<vmem>>, %arg7: memref<32x32xf32, #tpu.memory_space<vmem>>, %arg8: memref<32x8xf32, #tpu.memory_space<vmem>>) attributes {dimension_semantics = [#tpu.dimension_semantics<arbitrary>], iteration_bounds = array<i64: 1>, scalar_prefetch = 0 : i64, scratch_operands = 0 : i64, tpu.core_type = #tpu.core_type<tc>, window_params = [{pipeline_mode = #tpu.pipeline_mode<synchronous>, transform_indices = @transform_0, window_bounds = array<i64: 72, 32>}, {pipeline_mode = #tpu.pipeline_mode<synchronous>, transform_indices = @transform_1, window_bounds = array<i64: 72, 8>}, {pipeline_mode = #tpu.pipeline_mode<synchronous>, transform_indices = @transform_2, window_bounds = array<i64: 32, 72>}, {pipeline_mode = #tpu.pipeline_mode<synchronous>, transform_indices = @transform_3, window_bounds = array<i64: 32, 72>}, {pipeline_mode = #tpu.pipeline_mode<synchronous>, transform_indices = @transform_4, window_bounds = array<i64: 32, 1>}, {pipeline_mode = #tpu.pipeline_mode<synchronous>, transform_indices = @transform_5, window_bounds = array<i64: 32, 1>}, {pipeline_mode = #tpu.pipeline_mode<synchronous>, transform_indices = @transform_6, window_bounds = array<i64: 32, 32>}, {pipeline_mode = #tpu.pipeline_mode<synchronous>, transform_indices = @transform_7, window_bounds = array<i64: 32, 8>}]} {
    %c0 = arith.constant 0 : index
    %c0_0 = arith.constant 0 : index
    %0 = vector.load %arg3[%c0, %c0_0] : memref<32x72xf32, #tpu.memory_space<vmem>>, vector<32x72xf32>
    %c0_1 = arith.constant 0 : index
    %c0_2 = arith.constant 0 : index
    %1 = vector.load %arg1[%c0_1, %c0_2] : memref<72x32xf32, #tpu.memory_space<vmem>>, vector<72x32xf32>
    %cst = arith.constant dense<0.000000e+00> : vector<32x32xf32>
    %2 = tpu.matmul %0, %1, %cst {dimension_numbers = #tpu.dot_dimension_numbers<[1], [0], [0], [1], [0, 0, 1, 1], [], []>} : vector<32x72xf32>, vector<72x32xf32>, vector<32x32xf32> -> vector<32x32xf32>
    %c0_3 = arith.constant 0 : index
    %c0_4 = arith.constant 0 : index
    %3 = vector.load %arg5[%c0_3, %c0_4] : memref<32x1xf32, #tpu.memory_space<vmem>>, vector<32x1xf32>
    %4 = vector.broadcast %3 : vector<32x1xf32> to vector<32x32xf32>
    %5 = arith.addf %2, %4 : vector<32x32xf32>
    %c0_5 = arith.constant 0 : index
    %c0_6 = arith.constant 0 : index
    %6 = vector.load %arg7[%c0_5, %c0_6] : memref<32x32xf32, #tpu.memory_space<vmem>>, vector<32x32xf32>
    tpu.vector_store %arg7[%c0_5, %c0_6], %5 {strides = array<i32>} : memref<32x32xf32, #tpu.memory_space<vmem>>, vector<32x32xf32>,
    %c0_7 = arith.constant 0 : index
    %c0_8 = arith.constant 0 : index
    %7 = vector.load %arg4[%c0_7, %c0_8] : memref<32x72xf32, #tpu.memory_space<vmem>>, vector<32x72xf32>
    %c0_9 = arith.constant 0 : index
    %c0_10 = arith.constant 0 : index
    %8 = vector.load %arg2[%c0_9, %c0_10] : memref<72x8xf32, #tpu.memory_space<vmem>>, vector<72x8xf32>
    %cst_11 = arith.constant dense<0.000000e+00> : vector<32x8xf32>
    %9 = tpu.matmul %7, %8, %cst_11 {dimension_numbers = #tpu.dot_dimension_numbers<[1], [0], [0], [1], [0, 0, 1, 1], [], []>} : vector<32x72xf32>, vector<72x8xf32>, vector<32x8xf32> -> vector<32x8xf32>
    %c0_12 = arith.constant 0 : index
    %c0_13 = arith.constant 0 : index
    %10 = vector.load %arg6[%c0_12, %c0_13] : memref<32x1xf32, #tpu.memory_space<vmem>>, vector<32x1xf32>
    %11 = vector.broadcast %10 : vector<32x1xf32> to vector<32x8xf32>
    %12 = arith.addf %9, %11 : vector<32x8xf32>
    %c0_14 = arith.constant 0 : index
    %c0_15 = arith.constant 0 : index
    %13 = vector.load %arg8[%c0_14, %c0_15] : memref<32x8xf32, #tpu.memory_space<vmem>>, vector<32x8xf32>
    tpu.vector_store %arg8[%c0_14, %c0_15], %12 {strides = array<i32>} : memref<32x8xf32, #tpu.memory_space<vmem>>, vector<32x8xf32>,
    return
  }
  func.func @transform_0(%arg0: i32) -> (i32, i32) {
    %c0_i32 = arith.constant 0 : i32
    %c0_i32_0 = arith.constant 0 : i32
    %c0_i32_1 = arith.constant 0 : i32
    return %c0_i32, %c0_i32_0 : i32, i32
  }
  func.func @transform_1(%arg0: i32) -> (i32, i32) {
    %c0_i32 = arith.constant 0 : i32
    %c0_i32_0 = arith.constant 0 : i32
    %c0_i32_1 = arith.constant 0 : i32
    return %c0_i32, %c0_i32_0 : i32, i32
  }
  func.func @transform_2(%arg0: i32) -> (i32, i32) {
    %c0_i32 = arith.constant 0 : i32
    %c0_i32_0 = arith.constant 0 : i32
    %c0_i32_1 = arith.constant 0 : i32
    return %c0_i32, %c0_i32_0 : i32, i32
  }
  func.func @transform_3(%arg0: i32) -> (i32, i32) {
    %c0_i32 = arith.constant 0 : i32
    %c0_i32_0 = arith.constant 0 : i32
    %c0_i32_1 = arith.constant 0 : i32
    return %c0_i32, %c0_i32_0 : i32, i32
  }
  func.func @transform_4(%arg0: i32) -> (i32, i32) {
    %c0_i32 = arith.constant 0 : i32
    %c0_i32_0 = arith.constant 0 : i32
    %c0_i32_1 = arith.constant 0 : i32
    return %c0_i32, %c0_i32_0 : i32, i32
  }
  func.func @transform_5(%arg0: i32) -> (i32, i32) {
    %c0_i32 = arith.constant 0 : i32
    %c0_i32_0 = arith.constant 0 : i32
    %c0_i32_1 = arith.constant 0 : i32
    return %c0_i32, %c0_i32_0 : i32, i32
  }
  func.func @transform_6(%arg0: i32) -> (i32, i32) {
    %c0_i32 = arith.constant 0 : i32
    %c0_i32_0 = arith.constant 0 : i32
    %c0_i32_1 = arith.constant 0 : i32
    return %c0_i32, %c0_i32_0 : i32, i32
  }
  func.func @transform_7(%arg0: i32) -> (i32, i32) {
    %c0_i32 = arith.constant 0 : i32
    %c0_i32_0 = arith.constant 0 : i32
    %c0_i32_1 = arith.constant 0 : i32
    return %c0_i32, %c0_i32_0 : i32, i32
  }
}

module attributes {stable_mosaic.version = 11 : i64} {
  func.func @kernel(%arg0: i32, %arg1: memref<128x128xf32, #tpu.memory_space<vmem>>, %arg2: memref<72x128xf32, #tpu.memory_space<vmem>>, %arg3: memref<72x128xf32, #tpu.memory_space<vmem>>, %arg4: memref<72x128xf32, #tpu.memory_space<vmem>>, %arg5: memref<72x128xf32, #tpu.memory_space<vmem>>, %arg6: memref<12x128xf32, #tpu.memory_space<vmem>>, %arg7: memref<12x72xf32, #tpu.memory_space<vmem>>, %arg8: memref<12x72xf32, #tpu.memory_space<vmem>>, %arg9: memref<12x72xf32, #tpu.memory_space<vmem>>, %arg10: memref<12x72xf32, #tpu.memory_space<vmem>>, %arg11: memref<12x1xf32, #tpu.memory_space<vmem>>, %arg12: memref<12x128xf32, #tpu.memory_space<vmem>>) attributes {dimension_semantics = [#tpu.dimension_semantics<arbitrary>], iteration_bounds = array<i64: 1>, scalar_prefetch = 0 : i64, scratch_operands = 0 : i64, tpu.core_type = #tpu.core_type<tc>, window_params = [{pipeline_mode = #tpu.pipeline_mode<synchronous>, transform_indices = @transform_0, window_bounds = array<i64: 128, 128>}, {pipeline_mode = #tpu.pipeline_mode<synchronous>, transform_indices = @transform_1, window_bounds = array<i64: 72, 128>}, {pipeline_mode = #tpu.pipeline_mode<synchronous>, transform_indices = @transform_2, window_bounds = array<i64: 72, 128>}, {pipeline_mode = #tpu.pipeline_mode<synchronous>, transform_indices = @transform_3, window_bounds = array<i64: 72, 128>}, {pipeline_mode = #tpu.pipeline_mode<synchronous>, transform_indices = @transform_4, window_bounds = array<i64: 72, 128>}, {pipeline_mode = #tpu.pipeline_mode<synchronous>, transform_indices = @transform_5, window_bounds = array<i64: 12, 128>}, {pipeline_mode = #tpu.pipeline_mode<synchronous>, transform_indices = @transform_6, window_bounds = array<i64: 12, 72>}, {pipeline_mode = #tpu.pipeline_mode<synchronous>, transform_indices = @transform_7, window_bounds = array<i64: 12, 72>}, {pipeline_mode = #tpu.pipeline_mode<synchronous>, transform_indices = @transform_8, window_bounds = array<i64: 12, 72>}, {pipeline_mode = #tpu.pipeline_mode<synchronous>, transform_indices = @transform_9, window_bounds = array<i64: 12, 72>}, {pipeline_mode = #tpu.pipeline_mode<synchronous>, transform_indices = @transform_10, window_bounds = array<i64: 12, 1>}, {pipeline_mode = #tpu.pipeline_mode<synchronous>, transform_indices = @transform_11, window_bounds = array<i64: 12, 128>}]} {
    %c0 = arith.constant 0 : index
    %c0_0 = arith.constant 0 : index
    %0 = vector.load %arg11[%c0, %c0_0] : memref<12x1xf32, #tpu.memory_space<vmem>>, vector<12x1xf32>
    %c0_1 = arith.constant 0 : index
    %c0_2 = arith.constant 0 : index
    %1 = vector.load %arg6[%c0_1, %c0_2] : memref<12x128xf32, #tpu.memory_space<vmem>>, vector<12x128xf32>
    %c0_3 = arith.constant 0 : index
    %c0_4 = arith.constant 0 : index
    %2 = vector.load %arg1[%c0_3, %c0_4] : memref<128x128xf32, #tpu.memory_space<vmem>>, vector<128x128xf32>
    %cst = arith.constant dense<0.000000e+00> : vector<12x128xf32>
    %3 = tpu.matmul %1, %2, %cst {dimension_numbers = #tpu.dot_dimension_numbers<[1], [0], [0], [1], [0, 0, 1, 1], [], []>} : vector<12x128xf32>, vector<128x128xf32>, vector<12x128xf32> -> vector<12x128xf32>
    %4 = vector.broadcast %0 : vector<12x1xf32> to vector<12x128xf32>
    %5 = arith.addf %4, %3 : vector<12x128xf32>
    %c0_5 = arith.constant 0 : index
    %c0_6 = arith.constant 0 : index
    %6 = vector.load %arg7[%c0_5, %c0_6] : memref<12x72xf32, #tpu.memory_space<vmem>>, vector<12x72xf32>
    %c0_7 = arith.constant 0 : index
    %c0_8 = arith.constant 0 : index
    %7 = vector.load %arg2[%c0_7, %c0_8] : memref<72x128xf32, #tpu.memory_space<vmem>>, vector<72x128xf32>
    %cst_9 = arith.constant dense<0.000000e+00> : vector<12x128xf32>
    %8 = tpu.matmul %6, %7, %cst_9 {dimension_numbers = #tpu.dot_dimension_numbers<[1], [0], [0], [1], [0, 0, 1, 1], [], []>} : vector<12x72xf32>, vector<72x128xf32>, vector<12x128xf32> -> vector<12x128xf32>
    %9 = arith.addf %5, %8 : vector<12x128xf32>
    %c0_10 = arith.constant 0 : index
    %c0_11 = arith.constant 0 : index
    %10 = vector.load %arg8[%c0_10, %c0_11] : memref<12x72xf32, #tpu.memory_space<vmem>>, vector<12x72xf32>
    %c0_12 = arith.constant 0 : index
    %c0_13 = arith.constant 0 : index
    %11 = vector.load %arg3[%c0_12, %c0_13] : memref<72x128xf32, #tpu.memory_space<vmem>>, vector<72x128xf32>
    %cst_14 = arith.constant dense<0.000000e+00> : vector<12x128xf32>
    %12 = tpu.matmul %10, %11, %cst_14 {dimension_numbers = #tpu.dot_dimension_numbers<[1], [0], [0], [1], [0, 0, 1, 1], [], []>} : vector<12x72xf32>, vector<72x128xf32>, vector<12x128xf32> -> vector<12x128xf32>
    %13 = arith.addf %9, %12 : vector<12x128xf32>
    %c0_15 = arith.constant 0 : index
    %c0_16 = arith.constant 0 : index
    %14 = vector.load %arg9[%c0_15, %c0_16] : memref<12x72xf32, #tpu.memory_space<vmem>>, vector<12x72xf32>
    %c0_17 = arith.constant 0 : index
    %c0_18 = arith.constant 0 : index
    %15 = vector.load %arg4[%c0_17, %c0_18] : memref<72x128xf32, #tpu.memory_space<vmem>>, vector<72x128xf32>
    %cst_19 = arith.constant dense<0.000000e+00> : vector<12x128xf32>
    %16 = tpu.matmul %14, %15, %cst_19 {dimension_numbers = #tpu.dot_dimension_numbers<[1], [0], [0], [1], [0, 0, 1, 1], [], []>} : vector<12x72xf32>, vector<72x128xf32>, vector<12x128xf32> -> vector<12x128xf32>
    %17 = arith.addf %13, %16 : vector<12x128xf32>
    %c0_20 = arith.constant 0 : index
    %c0_21 = arith.constant 0 : index
    %18 = vector.load %arg10[%c0_20, %c0_21] : memref<12x72xf32, #tpu.memory_space<vmem>>, vector<12x72xf32>
    %c0_22 = arith.constant 0 : index
    %c0_23 = arith.constant 0 : index
    %19 = vector.load %arg5[%c0_22, %c0_23] : memref<72x128xf32, #tpu.memory_space<vmem>>, vector<72x128xf32>
    %cst_24 = arith.constant dense<0.000000e+00> : vector<12x128xf32>
    %20 = tpu.matmul %18, %19, %cst_24 {dimension_numbers = #tpu.dot_dimension_numbers<[1], [0], [0], [1], [0, 0, 1, 1], [], []>} : vector<12x72xf32>, vector<72x128xf32>, vector<12x128xf32> -> vector<12x128xf32>
    %21 = arith.addf %17, %20 : vector<12x128xf32>
    %22 = math.tanh %21 : vector<12x128xf32>
    %c0_25 = arith.constant 0 : index
    %c0_26 = arith.constant 0 : index
    %23 = vector.load %arg12[%c0_25, %c0_26] : memref<12x128xf32, #tpu.memory_space<vmem>>, vector<12x128xf32>
    tpu.vector_store %arg12[%c0_25, %c0_26], %22 {strides = array<i32>} : memref<12x128xf32, #tpu.memory_space<vmem>>, vector<12x128xf32>,
    return
  }
  func.func @transform_0(%arg0: i32) -> (i32, i32) {
    %c0_i32 = arith.constant 0 : i32
    %c0_i32_0 = arith.constant 0 : i32
    %c0_i32_1 = arith.constant 0 : i32
    return %c0_i32, %c0_i32_0 : i32, i32
  }
  func.func @transform_1(%arg0: i32) -> (i32, i32) {
    %c0_i32 = arith.constant 0 : i32
    %c0_i32_0 = arith.constant 0 : i32
    %c0_i32_1 = arith.constant 0 : i32
    return %c0_i32, %c0_i32_0 : i32, i32
  }
  func.func @transform_2(%arg0: i32) -> (i32, i32) {
    %c0_i32 = arith.constant 0 : i32
    %c0_i32_0 = arith.constant 0 : i32
    %c0_i32_1 = arith.constant 0 : i32
    return %c0_i32, %c0_i32_0 : i32, i32
  }
  func.func @transform_3(%arg0: i32) -> (i32, i32) {
    %c0_i32 = arith.constant 0 : i32
    %c0_i32_0 = arith.constant 0 : i32
    %c0_i32_1 = arith.constant 0 : i32
    return %c0_i32, %c0_i32_0 : i32, i32
  }
  func.func @transform_4(%arg0: i32) -> (i32, i32) {
    %c0_i32 = arith.constant 0 : i32
    %c0_i32_0 = arith.constant 0 : i32
    %c0_i32_1 = arith.constant 0 : i32
    return %c0_i32, %c0_i32_0 : i32, i32
  }
  func.func @transform_5(%arg0: i32) -> (i32, i32) {
    %c0_i32 = arith.constant 0 : i32
    %c0_i32_0 = arith.constant 0 : i32
    %c0_i32_1 = arith.constant 0 : i32
    return %c0_i32, %c0_i32_0 : i32, i32
  }
  func.func @transform_6(%arg0: i32) -> (i32, i32) {
    %c0_i32 = arith.constant 0 : i32
    %c0_i32_0 = arith.constant 0 : i32
    %c0_i32_1 = arith.constant 0 : i32
    return %c0_i32, %c0_i32_0 : i32, i32
  }
  func.func @transform_7(%arg0: i32) -> (i32, i32) {
    %c0_i32 = arith.constant 0 : i32
    %c0_i32_0 = arith.constant 0 : i32
    %c0_i32_1 = arith.constant 0 : i32
    return %c0_i32, %c0_i32_0 : i32, i32
  }
  func.func @transform_8(%arg0: i32) -> (i32, i32) {
    %c0_i32 = arith.constant 0 : i32
    %c0_i32_0 = arith.constant 0 : i32
    %c0_i32_1 = arith.constant 0 : i32
    return %c0_i32, %c0_i32_0 : i32, i32
  }
  func.func @transform_9(%arg0: i32) -> (i32, i32) {
    %c0_i32 = arith.constant 0 : i32
    %c0_i32_0 = arith.constant 0 : i32
    %c0_i32_1 = arith.constant 0 : i32
    return %c0_i32, %c0_i32_0 : i32, i32
  }
  func.func @transform_10(%arg0: i32) -> (i32, i32) {
    %c0_i32 = arith.constant 0 : i32
    %c0_i32_0 = arith.constant 0 : i32
    %c0_i32_1 = arith.constant 0 : i32
    return %c0_i32, %c0_i32_0 : i32, i32
  }
  func.func @transform_11(%arg0: i32) -> (i32, i32) {
    %c0_i32 = arith.constant 0 : i32
    %c0_i32_0 = arith.constant 0 : i32
    %c0_i32_1 = arith.constant 0 : i32
    return %c0_i32, %c0_i32_0 : i32, i32
  }
}

</mosaic_0001>

<llo_original>
// kernel: generator_forward.10
$region0: #{generator_forward.10}
  #allocation0 [shape = 'u32[]', space=smem, size = 0x4, offset = 0x4, fixed_abs, tag = 'smem constant byte address 0x4 - core index']
  #allocation1 [shape = 'u32[144,128]{1,0:T(1,128)}', space=vmem, size = 0x12000, scoped, tag = 'internal scratch']
  %s0 = inlined_call_operand.vmem [shape: f32[4,512], index: 0, kind: input, shape index: {}]
  %s1 = inlined_call_operand.vmem [shape: f32[12,4], index: 1, kind: input, shape index: {}]
  %s2 = inlined_call_operand.vmem [shape: f32[12,1], index: 2, kind: input, shape index: {}]
  %s3 = inlined_call_operand.vmem [shape: f32[12,512], index: 3, kind: output, shape index: {}]
  %s4 = sld [smem:[#allocation0]]
  $region64: #{generator_forward.10} parent=0
    _
  %s6 = ssub.s32 1, %s4
  %s7 = scalar_select 0, %s6, %s4
  $region1: #{generator_forward.10} parent=0
    #allocation2 [shape = 'u8[32768]{0}', space=vmem, size = 0x8000, scoped, tag = 'output window, operand 0']
    loop: start=0, step=1, limit=4
    $region2: #{generator_forward.10} parent=1 // loop_pre_header
      _
    $region3: #{generator_forward.10} parent=1 // loop_header
      %s9 = sphi 0, %s13
      %p10 = scmp.ge.s32.totalorder %s9, 4
      %s19 = sphi 0, %s21
      %s22 = sphi 0, %s19
      %s23 = sphi 0, %s22
      %s39 = sphi 0, %s23
      %s43 = sphi 0, %s43
      %s45 = sphi 0, %s43
      %s46 = sphi 0, %s45
      %s60 = sphi 0, %s46
      %s64 = sphi 0, %s64
      %s66 = sphi 0, %s64
      %s67 = sphi 0, %s66
      %s81 = sphi 0, %s67
      %s87 = sphi 0, %s89
      %s90 = sphi 0, %s87
      %s91 = sphi 0, %s90
      %s107 = sphi 0, %s91
    $region4: #{generator_forward.10} parent=1 // loop_header_branch
      %12 = sbr.rel (%p10) target = $region8
    $region5: #{generator_forward.10} parent=1 // loop_body
      %s14 = ssub.s32 %s9, 1
      %s15 = ssub.s32 %s9, 2
      %s16 = sadd.s32 %s9, 1
      %s17 = ssub.s32 %s9, %s16
      %p18 = scmp.eq.s32.totalorder %s17, 0
      %s20 = sadd.s32 %s19, 1
      %s21 = scalar_select %p18, %s19, %s20
      %p24 = pneg %p18
      %p25 = scmp.eq.s32.totalorder %s9, 1
      %p26 = por %p24, %p25
      %p27 = scmp.ne.s32.totalorder %s19, %s22
      %p28 = scmp.eq.s32.totalorder %s9, 0
      %p29 = por %p27, %p28
      %p30 = scmp.ne.s32.totalorder %s19, %s22
      %p31 = scmp.eq.s32.totalorder %s14, 1
      %p32 = por %p30, %p31
      %p33 = scmp.ne.s32.totalorder %s22, %s23
      %p34 = scmp.eq.s32.totalorder %s14, 0
      %p35 = por %p33, %p34
      %p36 = scmp.ne.s32.totalorder %s22, %s23
      %p37 = scmp.eq.s32.totalorder %s15, 1
      %p38 = por %p36, %p37
      %p40 = scmp.ne.s32.totalorder %s23, %s39
      %p41 = scmp.eq.s32.totalorder %s15, 0
      %p42 = por %p40, %p41
      %s44 = sadd.s32 %s43, 1
      %p47 = scmp.eq.s32.totalorder %s9, 1
      %p48 = scmp.ne.s32.totalorder %s43, %s45
      %p49 = scmp.eq.s32.totalorder %s9, 0
      %p50 = por %p48, %p49
      %p51 = scmp.ne.s32.totalorder %s43, %s45
      %p52 = scmp.eq.s32.totalorder %s14, 1
      %p53 = por %p51, %p52
      %p54 = scmp.ne.s32.totalorder %s45, %s46
      %p55 = scmp.eq.s32.totalorder %s14, 0
      %p56 = por %p54, %p55
      %p57 = scmp.ne.s32.totalorder %s45, %s46
      %p58 = scmp.eq.s32.totalorder %s15, 1
      %p59 = por %p57, %p58
      %p61 = scmp.ne.s32.totalorder %s46, %s60
      %p62 = scmp.eq.s32.totalorder %s15, 0
      %p63 = por %p61, %p62
      %s65 = sadd.s32 %s64, 1
      %p68 = scmp.eq.s32.totalorder %s9, 1
      %p69 = scmp.ne.s32.totalorder %s64, %s66
      %p70 = scmp.eq.s32.totalorder %s9, 0
      %p71 = por %p69, %p70
      %p72 = scmp.ne.s32.totalorder %s64, %s66
      %p73 = scmp.eq.s32.totalorder %s14, 1
      %p74 = por %p72, %p73
      %p75 = scmp.ne.s32.totalorder %s66, %s67
      %p76 = scmp.eq.s32.totalorder %s14, 0
      %p77 = por %p75, %p76
      %p78 = scmp.ne.s32.totalorder %s66, %s67
      %p79 = scmp.eq.s32.totalorder %s15, 1
      %p80 = por %p78, %p79
      %p82 = scmp.ne.s32.totalorder %s67, %s81
      %p83 = scmp.eq.s32.totalorder %s15, 0
      %p84 = por %p82, %p83
      %s85 = ssub.s32 %s9, %s16
      %p86 = scmp.eq.s32.totalorder %s85, 0
      %s88 = sadd.s32 %s87, 1
      %s89 = scalar_select %p86, %s87, %s88
      %p92 = pneg %p86
      %p93 = scmp.eq.s32.totalorder %s9, 1
      %p94 = por %p92, %p93
      %p95 = scmp.ne.s32.totalorder %s87, %s90
      %p96 = scmp.eq.s32.totalorder %s9, 0
      %p97 = por %p95, %p96
      %p98 = scmp.ne.s32.totalorder %s87, %s90
      %p99 = scmp.eq.s32.totalorder %s14, 1
      %p100 = por %p98, %p99
      %p101 = scmp.ne.s32.totalorder %s90, %s91
      %p102 = scmp.eq.s32.totalorder %s14, 0
      %p103 = por %p101, %p102
      %p104 = scmp.ne.s32.totalorder %s90, %s91
      %p105 = scmp.eq.s32.totalorder %s15, 1
      %p106 = por %p104, %p105
      %p108 = scmp.ne.s32.totalorder %s91, %s107
      %p109 = scmp.eq.s32.totalorder %s15, 0
      %p110 = por %p108, %p109
      %p111 = scmp.le.s32.totalorder 1, %s9
      %p112 = scmp.lt.s32.totalorder %s9, 3
      %p113 = pnand %p111, %p112
      %p114 = pneg %p113
      // Predicated region
      $region9: #{generator_forward.10} parent=5 // pred_check
        _
      $region10: #{generator_forward.10} parent=5 // pred_check_branch
        %116 = sbr.rel (%p113) target = $region12
      $region11: #{generator_forward.10} parent=5 // pred_region
        %s117 = ssub.s32 %s9, 1
        // Predicated region
        $region13: #{generator_forward.10} parent=11 // pred_check
          %p118 = pneg %p56
        $region14: #{generator_forward.10} parent=11 // pred_check_branch
          %120 = sbr.rel (%p118) target = $region16
        $region15: #{generator_forward.10} parent=11 // pred_region
          _
        $region16: #{generator_forward.10} parent=11 // pred_fallthru
          _
        // Predicated region
        $region17: #{generator_forward.10} parent=11 // pred_check
          %p121 = pneg %p77
        $region18: #{generator_forward.10} parent=11 // pred_check_branch
          %123 = sbr.rel (%p121) target = $region20
        $region19: #{generator_forward.10} parent=11 // pred_region
          _
        $region20: #{generator_forward.10} parent=11 // pred_fallthru
          _
      $region12: #{generator_forward.10} parent=5 // pred_fallthru
        _
      %p124 = scmp.lt.s32.totalorder %s9, 2
      // Predicated region
      $region21: #{generator_forward.10} parent=5 // pred_check
        %p125 = pneg %p124
      $region22: #{generator_forward.10} parent=5 // pred_check_branch
        %127 = sbr.rel (%p125) target = $region24
      $region23: #{generator_forward.10} parent=5 // pred_region
        // Predicated region
        $region25: #{generator_forward.10} parent=23 // pred_check
          %p128 = pneg %p29
        $region26: #{generator_forward.10} parent=23 // pred_check_branch
          %130 = sbr.rel (%p128) target = $region28
        $region27: #{generator_forward.10} parent=23 // pred_region
          %s131 = smul.u32 2, %s9
          %p132 = scmp.lt.s32.totalorder %s131, 3
          %s133 = scalar_select %p132, %s131, 3
          %s134 = smul.addr %s133, 4
          %s135 = scalar_lea.vmem %s0, %s134
          %s136 = smul.u32 2, %s9
        $region28: #{generator_forward.10} parent=23 // pred_fallthru
          _
      $region24: #{generator_forward.10} parent=5 // pred_fallthru
        _
      %p137 = scmp.le.s32.totalorder 1, %s9
      %p138 = scmp.lt.s32.totalorder %s9, 3
      %p139 = pnand %p137, %p138
      %p140 = pneg %p139
      // Predicated region
      $region29: #{generator_forward.10} parent=5 // pred_check
        _
      $region30: #{generator_forward.10} parent=5 // pred_check_branch
        %142 = sbr.rel (%p139) target = $region32
      $region31: #{generator_forward.10} parent=5 // pred_region
        %s143 = ssub.s32 %s9, 1
        %s144 = smul.u32 2, %s14
        %p145 = scmp.lt.s32.totalorder %s144, 3
        %s146 = scalar_select %p145, %s144, 3
        %s147 = smul.addr %s146, 4
        %s148 = scalar_lea.vmem %s0, %s147
        %p149 = pneg %p35
        %p150 = pneg %p32
        %p151 = pneg %p56
        %p152 = pneg %p53
        %p153 = pneg %p77
        %p154 = pneg %p74
        %p155 = pneg %p103
        %p156 = pneg %p100
        %s157 = sand.u32 %s90, 1
        %s158 = sand.u32 %s90, 1
        %s159 = smul.addr %s158, 32
        %s160 = scalar_lea.vmem [#allocation2], %s159
        %s161 = smul.u32 2, %s14
        %p162 = scmp.lt.s32.totalorder %s161, 3
        %s163 = scalar_select %p162, %s161, 3
        %s164 = smul.addr %s163, 4
        %s165 = scalar_lea.vmem %s0, %s164
        %s166 = smul.u32 2, %s14
        %s167 = smul.u32 2, %s14
        %v168 = vld [vmem:[%s1] sm:$0xff]
        %v169 = vld [vmem:[%s1 + $0x8] sm:$0xf]
        %v170 = vld [vmem:[%s165] sm:$0xff]
        %v171 = vld [vmem:[%s2] sm:$0xff]
        %v172 = vld [vmem:[%s2 + $0x8] sm:$0xf]
        %174 = vset.pattern.permute.xlu0 0
        %175 = vperm.xlu0 %174, %v171
        %v176 = vpop.permute.xlu0 %175
        %179 = vset.pattern.permute.xlu0 0
        %180 = vperm.xlu0 %179, %v172
        %v181 = vpop.permute.xlu0 %180
        %v184 = vcombine.high %v170, %v170
        %vm185 = vcmask 31744
        %v187 = vsel %vm185, %v168, 0
        %v190 = vsel %vm185, %v169, 0
        %vm192 = vcmask 1043456
        %v193 = vsel %vm192, %v170, 0
        %v195 = vsel %vm192, %v184, 0
        %197 = vmatprep.subr.mxu0 %v195
        %198 = vmatpush1.msra.mxu0 %v193
        %199 = vmatprep.subr.mxu0 0.0
        %200 = vmatpush1.msra.mxu0 0.0
        %201 = vmatprep.subr.mxu0 0.0
        %202 = vmatpush1.msra.mxu0 0.0
        %203 = vmatprep.subr.mxu0 0.0
        %204 = vmatpush1.msra.mxu0 0.0
        %205 = vmatprep.subr.mxu0 0.0
        %206 = vmatpush1.msra.mxu0 0.0
        %207 = vmatprep.subr.mxu0 0.0
        %208 = vmatpush1.msra.mxu0 0.0
        %209 = vmatprep.subr.mxu0 0.0
        %210 = vmatpush1.msra.mxu0 0.0
        %211 = vmatprep.subr.mxu0 0.0
        %212 = vmatpush1.msra.mxu0 0.0
        %213 = vmatprep.subr.mxu0 0.0
        %214 = vmatpush1.msra.mxu0 0.0
        %215 = vmatprep.subr.mxu0 0.0
        %216 = vmatpush1.msra.mxu0 0.0
        %217 = vmatprep.subr.mxu0 0.0
        %218 = vmatpush1.msra.mxu0 0.0
        %219 = vmatprep.subr.mxu0 0.0
        %220 = vmatpush1.msra.mxu0 0.0
        %221 = vmatprep.subr.mxu0 0.0
        %222 = vmatpush1.msra.mxu0 0.0
        %223 = vmatprep.subr.mxu0 0.0
        %224 = vmatpush1.msra.mxu0 0.0
        %225 = vmatprep.subr.mxu0 0.0
        %226 = vmatpush1.msra.mxu0 0.0
        %227 = vmatprep.subr.mxu0 0.0
        %228 = vmatpush1.msra.mxu0 0.0
        %229 = vmatprep.subr.mxu0 0.0
        %230 = vmatpush1.msra.mxu0 0.0
        %231 = vmatprep.subr.mxu0 0.0
        %232 = vmatpush1.msra.mxu0 0.0
        %233 = vmatprep.subr.mxu0 0.0
        %234 = vmatpush1.msra.mxu0 0.0
        %235 = vmatprep.subr.mxu0 0.0
        %236 = vmatpush1.msra.mxu0 0.0
        %237 = vmatprep.subr.mxu0 0.0
        %238 = vmatpush1.msra.mxu0 0.0
        %239 = vmatprep.subr.mxu0 0.0
        %240 = vmatpush1.msra.mxu0 0.0
        %241 = vmatprep.subr.mxu0 0.0
        %242 = vmatpush1.msra.mxu0 0.0
        %243 = vmatprep.subr.mxu0 0.0
        %244 = vmatpush1.msra.mxu0 0.0
        %245 = vmatprep.subr.mxu0 0.0
        %246 = vmatpush1.msra.mxu0 0.0
        %247 = vmatprep.subr.mxu0 0.0
        %248 = vmatpush1.msra.mxu0 0.0
        %249 = vmatprep.subr.mxu0 0.0
        %250 = vmatpush1.msra.mxu0 0.0
        %251 = vmatprep.subr.mxu0 0.0
        %252 = vmatpush1.msra.mxu0 0.0
        %253 = vmatprep.subr.mxu0 0.0
        %254 = vmatpush1.msra.mxu0 0.0
        %255 = vmatprep.subr.mxu0 0.0
        %256 = vmatpush1.msra.mxu0 0.0
        %257 = vmatprep.subr.mxu0 0.0
        %258 = vmatpush1.msra.mxu0 0.0
        %259 = vmatprep.subr.mxu0 0.0
        %260 = vmatpush1.msra.mxu0 0.0
        %261 = vmatprep.mubr.f32.mxu0 0.0
        %262 = vmatmul.mubr.f32.gmra.mrb[0].mxu0 %v187
        %v263 = vpop.f32.mrb[0].mxu0
        %v264 = vadd.f32 %v176, %v263
        %v265 = vpop.f32.mrb[0].mxu0
        %v266 = vadd.f32 %v176, %v265
        %267 = vmatprep.mubr.f32.mxu0 0.0
        %268 = vmatmul.mubr.f32.gmra.mrb[0].mxu0 %v190
        %v269 = vpop.f32.mrb[0].mxu0
        %v270 = vadd.f32 %v181, %v269
        %v271 = vpop.f32.mrb[0].mxu0
        %v272 = vadd.f32 %v181, %v271
        %273 = vdwg.mxu0
        %274 = vst [vmem:[%s160] sm:$0xff] %v264
        %275 = vst [vmem:[%s160 + $0x8] sm:$0xff] %v266
        %276 = vst [vmem:[%s160 + $0x10] sm:$0xf] %v270
        %277 = vst [vmem:[%s160 + $0x18] sm:$0xf] %v272
        %s278 = sand.u32 %s90, 1
        %s279 = sand.u32 %s90, 1
        %s280 = smul.addr %s279, 32
        %s281 = scalar_lea.vmem [#allocation2], %s280
        // Predicated region
        $region33: #{generator_forward.10} parent=31 // pred_check
          %p282 = pneg %p100
        $region34: #{generator_forward.10} parent=31 // pred_check_branch
          %284 = sbr.rel (%p282) target = $region36
        $region35: #{generator_forward.10} parent=31 // pred_region
          %s285 = smul.u32 2, %s14
          %s286 = smul.addr %s285, 8
          %s287 = scalar_lea.vmem %s3, %s286
          // Predicated region
          $region37: #{generator_forward.10} parent=35 // pred_check
            _
          $region38: #{generator_forward.10} parent=35 // pred_check_branch
            %289 = sbr.rel (0) target = $region40
          $region39: #{generator_forward.10} parent=35 // pred_region
            // Predicated region
            $region41: #{generator_forward.10} parent=39 // pred_check
              _
            $region42: #{generator_forward.10} parent=39 // pred_check_branch
              %291 = sbr.rel (0) target = $region44
            $region43: #{generator_forward.10} parent=39 // pred_region
              loop: start=0, step=1, limit=1
              $region45: #{generator_forward.10} parent=43 // loop_pre_header
                _
              $region46: #{generator_forward.10} parent=43 // loop_header
                %s293 = sphi 0, %s297
                %p294 = scmp.ge.s32.totalorder %s293, 1
                %s298 = sphi %s281, %s281
                %s299 = sphi %s287, %s287
              $region47: #{generator_forward.10} parent=43 // loop_header_branch
                %296 = sbr.rel (%p294) target = $region51
              $region48: #{generator_forward.10} parent=43 // loop_body
                %v300 = vld [vmem:[%s298] sm:$0xff]
                %301 = vst [vmem:[%s299] sm:$0xff] %v300
                %v302 = vld [vmem:[%s298 + $0x8] sm:$0xff]
                %303 = vst [vmem:[%s299 + $0x8] sm:$0xff] %v302
                %v304 = vld [vmem:[%s298 + $0x10] sm:$0xff]
                %305 = vst [vmem:[%s299 + $0x20] sm:$0xff] %v304
                %v306 = vld [vmem:[%s298 + $0x18] sm:$0xff]
                %307 = vst [vmem:[%s299 + $0x28] sm:$0xff] %v306
              $region49: #{generator_forward.10} parent=43 // loop_footer
                %s297 = sadd.s32 1, %s293
              $region50: #{generator_forward.10} parent=43 // loop_footer_branch
                %292 = sbr.rel target = $region46
              $region51: #{generator_forward.10} parent=43 // loop_exit
                _
            $region44: #{generator_forward.10} parent=39 // pred_fallthru
              _
            // Predicated region
            $region52: #{generator_forward.10} parent=39 // pred_check
              _
            $region53: #{generator_forward.10} parent=39 // pred_check_branch
              %309 = sbr.rel target = $region55
            $region54: #{generator_forward.10} parent=39 // pred_region
              _
            $region55: #{generator_forward.10} parent=39 // pred_fallthru
              _
          $region40: #{generator_forward.10} parent=35 // pred_fallthru
            _
          %310 = vnop
        $region36: #{generator_forward.10} parent=31 // pred_fallthru
          _
      $region32: #{generator_forward.10} parent=5 // pred_fallthru
        _
      %p311 = scmp.le.s32.totalorder 2, %s9
      // Predicated region
      $region56: #{generator_forward.10} parent=5 // pred_check
        %p312 = pneg %p311
      $region57: #{generator_forward.10} parent=5 // pred_check_branch
        %314 = sbr.rel (%p312) target = $region59
      $region58: #{generator_forward.10} parent=5 // pred_region
        %s315 = ssub.s32 %s9, 2
        // Predicated region
        $region60: #{generator_forward.10} parent=58 // pred_check
          %p316 = pneg %p106
        $region61: #{generator_forward.10} parent=58 // pred_check_branch
          %318 = sbr.rel (%p316) target = $region63
        $region62: #{generator_forward.10} parent=58 // pred_region
          %s319 = sand.u32 %s91, 1
          %s320 = sand.u32 %s91, 1
          %s321 = smul.addr %s320, 32
          %s322 = scalar_lea.vmem [#allocation2], %s321
        $region63: #{generator_forward.10} parent=58 // pred_fallthru
          _
      $region59: #{generator_forward.10} parent=5 // pred_fallthru
        _
    $region6: #{generator_forward.10} parent=1 // loop_footer
      %s13 = sadd.s32 1, %s9
    $region7: #{generator_forward.10} parent=1 // loop_footer_branch
      %8 = sbr.rel target = $region3
    $region8: #{generator_forward.10} parent=1 // loop_exit
      _

// kernel: generator_forward.11
$region0: #{generator_forward.11}
  #allocation0 [shape = 'u32[]', space=smem, size = 0x4, offset = 0x4, fixed_abs, tag = 'smem constant byte address 0x4 - core index']
  #allocation1 [shape = 'u32[144,128]{1,0:T(1,128)}', space=vmem, size = 0x12000, scoped, tag = 'internal scratch']
  %s0 = inlined_call_operand.vmem [shape: f32[108,512], index: 0, kind: input, shape index: {}]
  %s1 = inlined_call_operand.vmem [shape: f32[8,108], index: 1, kind: input, shape index: {}]
  %s2 = inlined_call_operand.vmem [shape: f32[8,1], index: 2, kind: input, shape index: {}]
  %s3 = inlined_call_operand.vmem [shape: f32[8,512], index: 3, kind: output, shape index: {}]
  %s4 = sld [smem:[#allocation0]]
  $region68: #{generator_forward.11} parent=0
    _
  %s6 = ssub.s32 1, %s4
  %s7 = scalar_select 0, %s6, %s4
  $region1: #{generator_forward.11} parent=0
    #allocation2 [shape = 'u8[229376]{0}', space=vmem, size = 0x38000, scoped, tag = 'input window, operand 0']
    loop: start=0, step=1, limit=4
    $region2: #{generator_forward.11} parent=1 // loop_pre_header
      _
    $region3: #{generator_forward.11} parent=1 // loop_header
      %s9 = sphi 0, %s13
      %p10 = scmp.ge.s32.totalorder %s9, 4
      %s19 = sphi 0, %s21
      %s22 = sphi 0, %s19
      %s23 = sphi 0, %s22
      %s39 = sphi 0, %s23
      %s43 = sphi 0, %s43
      %s45 = sphi 0, %s43
      %s46 = sphi 0, %s45
      %s60 = sphi 0, %s46
      %s64 = sphi 0, %s64
      %s66 = sphi 0, %s64
      %s67 = sphi 0, %s66
      %s81 = sphi 0, %s67
      %s87 = sphi 0, %s89
      %s90 = sphi 0, %s87
      %s91 = sphi 0, %s90
      %s107 = sphi 0, %s91
    $region4: #{generator_forward.11} parent=1 // loop_header_branch
      %12 = sbr.rel (%p10) target = $region8
    $region5: #{generator_forward.11} parent=1 // loop_body
      %s14 = ssub.s32 %s9, 1
      %s15 = ssub.s32 %s9, 2
      %s16 = sadd.s32 %s9, 1
      %s17 = ssub.s32 %s9, %s16
      %p18 = scmp.eq.s32.totalorder %s17, 0
      %s20 = sadd.s32 %s19, 1
      %s21 = scalar_select %p18, %s19, %s20
      %p24 = pneg %p18
      %p25 = scmp.eq.s32.totalorder %s9, 1
      %p26 = por %p24, %p25
      %p27 = scmp.ne.s32.totalorder %s19, %s22
      %p28 = scmp.eq.s32.totalorder %s9, 0
      %p29 = por %p27, %p28
      %p30 = scmp.ne.s32.totalorder %s19, %s22
      %p31 = scmp.eq.s32.totalorder %s14, 1
      %p32 = por %p30, %p31
      %p33 = scmp.ne.s32.totalorder %s22, %s23
      %p34 = scmp.eq.s32.totalorder %s14, 0
      %p35 = por %p33, %p34
      %p36 = scmp.ne.s32.totalorder %s22, %s23
      %p37 = scmp.eq.s32.totalorder %s15, 1
      %p38 = por %p36, %p37
      %p40 = scmp.ne.s32.totalorder %s23, %s39
      %p41 = scmp.eq.s32.totalorder %s15, 0
      %p42 = por %p40, %p41
      %s44 = sadd.s32 %s43, 1
      %p47 = scmp.eq.s32.totalorder %s9, 1
      %p48 = scmp.ne.s32.totalorder %s43, %s45
      %p49 = scmp.eq.s32.totalorder %s9, 0
      %p50 = por %p48, %p49
      %p51 = scmp.ne.s32.totalorder %s43, %s45
      %p52 = scmp.eq.s32.totalorder %s14, 1
      %p53 = por %p51, %p52
      %p54 = scmp.ne.s32.totalorder %s45, %s46
      %p55 = scmp.eq.s32.totalorder %s14, 0
      %p56 = por %p54, %p55
      %p57 = scmp.ne.s32.totalorder %s45, %s46
      %p58 = scmp.eq.s32.totalorder %s15, 1
      %p59 = por %p57, %p58
      %p61 = scmp.ne.s32.totalorder %s46, %s60
      %p62 = scmp.eq.s32.totalorder %s15, 0
      %p63 = por %p61, %p62
      %s65 = sadd.s32 %s64, 1
      %p68 = scmp.eq.s32.totalorder %s9, 1
      %p69 = scmp.ne.s32.totalorder %s64, %s66
      %p70 = scmp.eq.s32.totalorder %s9, 0
      %p71 = por %p69, %p70
      %p72 = scmp.ne.s32.totalorder %s64, %s66
      %p73 = scmp.eq.s32.totalorder %s14, 1
      %p74 = por %p72, %p73
      %p75 = scmp.ne.s32.totalorder %s66, %s67
      %p76 = scmp.eq.s32.totalorder %s14, 0
      %p77 = por %p75, %p76
      %p78 = scmp.ne.s32.totalorder %s66, %s67
      %p79 = scmp.eq.s32.totalorder %s15, 1
      %p80 = por %p78, %p79
      %p82 = scmp.ne.s32.totalorder %s67, %s81
      %p83 = scmp.eq.s32.totalorder %s15, 0
      %p84 = por %p82, %p83
      %s85 = ssub.s32 %s9, %s16
      %p86 = scmp.eq.s32.totalorder %s85, 0
      %s88 = sadd.s32 %s87, 1
      %s89 = scalar_select %p86, %s87, %s88
      %p92 = pneg %p86
      %p93 = scmp.eq.s32.totalorder %s9, 1
      %p94 = por %p92, %p93
      %p95 = scmp.ne.s32.totalorder %s87, %s90
      %p96 = scmp.eq.s32.totalorder %s9, 0
      %p97 = por %p95, %p96
      %p98 = scmp.ne.s32.totalorder %s87, %s90
      %p99 = scmp.eq.s32.totalorder %s14, 1
      %p100 = por %p98, %p99
      %p101 = scmp.ne.s32.totalorder %s90, %s91
      %p102 = scmp.eq.s32.totalorder %s14, 0
      %p103 = por %p101, %p102
      %p104 = scmp.ne.s32.totalorder %s90, %s91
      %p105 = scmp.eq.s32.totalorder %s15, 1
      %p106 = por %p104, %p105
      %p108 = scmp.ne.s32.totalorder %s91, %s107
      %p109 = scmp.eq.s32.totalorder %s15, 0
      %p110 = por %p108, %p109
      %p111 = scmp.le.s32.totalorder 1, %s9
      %p112 = scmp.lt.s32.totalorder %s9, 3
      %p113 = pnand %p111, %p112
      %p114 = pneg %p113
      // Predicated region
      $region9: #{generator_forward.11} parent=5 // pred_check
        _
      $region10: #{generator_forward.11} parent=5 // pred_check_branch
        %116 = sbr.rel (%p113) target = $region12
      $region11: #{generator_forward.11} parent=5 // pred_region
        %s117 = ssub.s32 %s9, 1
        // Predicated region
        $region13: #{generator_forward.11} parent=11 // pred_check
          %p118 = pneg %p56
        $region14: #{generator_forward.11} parent=11 // pred_check_branch
          %120 = sbr.rel (%p118) target = $region16
        $region15: #{generator_forward.11} parent=11 // pred_region
          _
        $region16: #{generator_forward.11} parent=11 // pred_fallthru
          _
        // Predicated region
        $region17: #{generator_forward.11} parent=11 // pred_check
          %p121 = pneg %p77
        $region18: #{generator_forward.11} parent=11 // pred_check_branch
          %123 = sbr.rel (%p121) target = $region20
        $region19: #{generator_forward.11} parent=11 // pred_region
          _
        $region20: #{generator_forward.11} parent=11 // pred_fallthru
          _
      $region12: #{generator_forward.11} parent=5 // pred_fallthru
        _
      %p124 = scmp.lt.s32.totalorder %s9, 2
      // Predicated region
      $region21: #{generator_forward.11} parent=5 // pred_check
        %p125 = pneg %p124
      $region22: #{generator_forward.11} parent=5 // pred_check_branch
        %127 = sbr.rel (%p125) target = $region24
      $region23: #{generator_forward.11} parent=5 // pred_region
        // Predicated region
        $region25: #{generator_forward.11} parent=23 // pred_check
          %p128 = pneg %p29
        $region26: #{generator_forward.11} parent=23 // pred_check_branch
          %130 = sbr.rel (%p128) target = $region28
        $region27: #{generator_forward.11} parent=23 // pred_region
          %s131 = sand.u32 %s19, 1
          %s132 = sand.u32 %s19, 1
          %s133 = smul.addr %s132, 224
          %s134 = scalar_lea.vmem [#allocation2], %s133
          %s135 = smul.u32 2, %s9
          %s136 = smul.addr %s135, 8
          %s137 = scalar_lea.vmem %s0, %s136
          // Predicated region
          $region29: #{generator_forward.11} parent=27 // pred_check
            _
          $region30: #{generator_forward.11} parent=27 // pred_check_branch
            %139 = sbr.rel (0) target = $region32
          $region31: #{generator_forward.11} parent=27 // pred_region
            // Predicated region
            $region33: #{generator_forward.11} parent=31 // pred_check
              _
            $region34: #{generator_forward.11} parent=31 // pred_check_branch
              %141 = sbr.rel (0) target = $region36
            $region35: #{generator_forward.11} parent=31 // pred_region
              loop: start=0, step=1, limit=1
              $region37: #{generator_forward.11} parent=35 // loop_pre_header
                _
              $region38: #{generator_forward.11} parent=35 // loop_header
                %s143 = sphi 0, %s147
                %p144 = scmp.ge.s32.totalorder %s143, 1
                %s148 = sphi %s137, %s137
                %s149 = sphi %s134, %s134
              $region39: #{generator_forward.11} parent=35 // loop_header_branch
                %146 = sbr.rel (%p144) target = $region43
              $region40: #{generator_forward.11} parent=35 // loop_body
                %v150 = vld [vmem:[%s148] sm:$0xff]
                %151 = vst [vmem:[%s149] sm:$0xff] %v150
                %v152 = vld [vmem:[%s148 + $0x8] sm:$0xff]
                %153 = vst [vmem:[%s149 + $0x8] sm:$0xff] %v152
                %v154 = vld [vmem:[%s148 + $0x20] sm:$0xff]
                %155 = vst [vmem:[%s149 + $0x10] sm:$0xff] %v154
                %v156 = vld [vmem:[%s148 + $0x28] sm:$0xff]
                %157 = vst [vmem:[%s149 + $0x18] sm:$0xff] %v156
                %v158 = vld [vmem:[%s148 + $0x40] sm:$0xff]
                %159 = vst [vmem:[%s149 + $0x20] sm:$0xff] %v158
                %v160 = vld [vmem:[%s148 + $0x48] sm:$0xff]
                %161 = vst [vmem:[%s149 + $0x28] sm:$0xff] %v160
                %v162 = vld [vmem:[%s148 + $0x60] sm:$0xff]
                %163 = vst [vmem:[%s149 + $0x30] sm:$0xff] %v162
                %v164 = vld [vmem:[%s148 + $0x68] sm:$0xff]
                %165 = vst [vmem:[%s149 + $0x38] sm:$0xff] %v164
                %v166 = vld [vmem:[%s148 + $0x80] sm:$0xff]
                %167 = vst [vmem:[%s149 + $0x40] sm:$0xff] %v166
                %v168 = vld [vmem:[%s148 + $0x88] sm:$0xff]
                %169 = vst [vmem:[%s149 + $0x48] sm:$0xff] %v168
                %v170 = vld [vmem:[%s148 + $0xa0] sm:$0xff]
                %171 = vst [vmem:[%s149 + $0x50] sm:$0xff] %v170
                %v172 = vld [vmem:[%s148 + $0xa8] sm:$0xff]
                %173 = vst [vmem:[%s149 + $0x58] sm:$0xff] %v172
                %v174 = vld [vmem:[%s148 + $0xc0] sm:$0xff]
                %175 = vst [vmem:[%s149 + $0x60] sm:$0xff] %v174
                %v176 = vld [vmem:[%s148 + $0xc8] sm:$0xff]
                %177 = vst [vmem:[%s149 + $0x68] sm:$0xff] %v176
                %v178 = vld [vmem:[%s148 + $0xe0] sm:$0xff]
                %179 = vst [vmem:[%s149 + $0x70] sm:$0xff] %v178
                %v180 = vld [vmem:[%s148 + $0xe8] sm:$0xff]
                %181 = vst [vmem:[%s149 + $0x78] sm:$0xff] %v180
                %v182 = vld [vmem:[%s148 + $0x100] sm:$0xff]
                %183 = vst [vmem:[%s149 + $0x80] sm:$0xff] %v182
                %v184 = vld [vmem:[%s148 + $0x108] sm:$0xff]
                %185 = vst [vmem:[%s149 + $0x88] sm:$0xff] %v184
                %v186 = vld [vmem:[%s148 + $0x120] sm:$0xff]
                %187 = vst [vmem:[%s149 + $0x90] sm:$0xff] %v186
                %v188 = vld [vmem:[%s148 + $0x128] sm:$0xff]
                %189 = vst [vmem:[%s149 + $0x98] sm:$0xff] %v188
                %v190 = vld [vmem:[%s148 + $0x140] sm:$0xff]
                %191 = vst [vmem:[%s149 + $0xa0] sm:$0xff] %v190
                %v192 = vld [vmem:[%s148 + $0x148] sm:$0xff]
                %193 = vst [vmem:[%s149 + $0xa8] sm:$0xff] %v192
                %v194 = vld [vmem:[%s148 + $0x160] sm:$0xff]
                %195 = vst [vmem:[%s149 + $0xb0] sm:$0xff] %v194
                %v196 = vld [vmem:[%s148 + $0x168] sm:$0xff]
                %197 = vst [vmem:[%s149 + $0xb8] sm:$0xff] %v196
                %v198 = vld [vmem:[%s148 + $0x180] sm:$0xff]
                %199 = vst [vmem:[%s149 + $0xc0] sm:$0xff] %v198
                %v200 = vld [vmem:[%s148 + $0x188] sm:$0xff]
                %201 = vst [vmem:[%s149 + $0xc8] sm:$0xff] %v200
                %v202 = vld [vmem:[%s148 + $0x1a0] sm:$0xff]
                %203 = vst [vmem:[%s149 + $0xd0] sm:$0xff] %v202
                %v204 = vld [vmem:[%s148 + $0x1a8] sm:$0xff]
                %205 = vst [vmem:[%s149 + $0xd8] sm:$0xff] %v204
              $region41: #{generator_forward.11} parent=35 // loop_footer
                %s147 = sadd.s32 1, %s143
              $region42: #{generator_forward.11} parent=35 // loop_footer_branch
                %142 = sbr.rel target = $region38
              $region43: #{generator_forward.11} parent=35 // loop_exit
                _
            $region36: #{generator_forward.11} parent=31 // pred_fallthru
              _
            // Predicated region
            $region44: #{generator_forward.11} parent=31 // pred_check
              _
            $region45: #{generator_forward.11} parent=31 // pred_check_branch
              %207 = sbr.rel target = $region47
            $region46: #{generator_forward.11} parent=31 // pred_region
              _
            $region47: #{generator_forward.11} parent=31 // pred_fallthru
              _
          $region32: #{generator_forward.11} parent=27 // pred_fallthru
            _
          %208 = vnop
        $region28: #{generator_forward.11} parent=23 // pred_fallthru
          _
      $region24: #{generator_forward.11} parent=5 // pred_fallthru
        _
      %p209 = scmp.le.s32.totalorder 1, %s9
      %p210 = scmp.lt.s32.totalorder %s9, 3
      %p211 = pnand %p209, %p210
      %p212 = pneg %p211
      // Predicated region
      $region48: #{generator_forward.11} parent=5 // pred_check
        _
      $region49: #{generator_forward.11} parent=5 // pred_check_branch
        %214 = sbr.rel (%p211) target = $region51
      $region50: #{generator_forward.11} parent=5 // pred_region
        %s215 = ssub.s32 %s9, 1
        %s216 = sand.u32 %s22, 1
        %s217 = sand.u32 %s22, 1
        %s218 = smul.addr %s217, 224
        %s219 = scalar_lea.vmem [#allocation2], %s218
        // Predicated region
        $region52: #{generator_forward.11} parent=50 // pred_check
          %p220 = pneg %p35
        $region53: #{generator_forward.11} parent=50 // pred_check_branch
          %222 = sbr.rel (%p220) target = $region55
        $region54: #{generator_forward.11} parent=50 // pred_region
          _
        $region55: #{generator_forward.11} parent=50 // pred_fallthru
          _
        %s223 = sand.u32 %s22, 1
        %s224 = sand.u32 %s22, 1
        %s225 = smul.addr %s224, 224
        %s226 = scalar_lea.vmem [#allocation2], %s225
        %p227 = pneg %p35
        %p228 = pneg %p32
        %p229 = pneg %p56
        %p230 = pneg %p53
        %p231 = pneg %p77
        %p232 = pneg %p74
        %p233 = pneg %p103
        %p234 = pneg %p100
        %s235 = smul.u32 2, %s14
        %p236 = scmp.lt.s32.totalorder %s235, 3
        %s237 = scalar_select %p236, %s235, 3
        %s238 = smul.addr %s237, 8
        %s239 = scalar_lea.vmem %s3, %s238
        %s240 = smul.u32 2, %s14
        %s241 = smul.u32 2, %s14
        %p242 = scmp.lt.s32.totalorder %s241, 3
        %s243 = scalar_select %p242, %s241, 3
        %s244 = smul.addr %s243, 8
        %s245 = scalar_lea.vmem %s3, %s244
        %s246 = smul.u32 2, %s14
        %v247 = vld [vmem:[%s1] sm:$0xff]
        %v248 = vld [vmem:[%s219] sm:$0xff]
        %v249 = vld [vmem:[%s219 + $0x8] sm:$0xff]
        %v250 = vld [vmem:[%s219 + $0x10] sm:$0xff]
        %v251 = vld [vmem:[%s219 + $0x18] sm:$0xff]
        %v252 = vld [vmem:[%s219 + $0x20] sm:$0xff]
        %v253 = vld [vmem:[%s219 + $0x28] sm:$0xff]
        %v254 = vld [vmem:[%s219 + $0x30] sm:$0xff]
        %v255 = vld [vmem:[%s219 + $0x38] sm:$0xff]
        %v256 = vld [vmem:[%s219 + $0x40] sm:$0xff]
        %v257 = vld [vmem:[%s219 + $0x48] sm:$0xff]
        %v258 = vld [vmem:[%s219 + $0x50] sm:$0xff]
        %v259 = vld [vmem:[%s219 + $0x58] sm:$0xff]
        %v260 = vld [vmem:[%s219 + $0x60] sm:$0xff]
        %v261 = vld [vmem:[%s219 + $0x68] sm:$0xff]
        %v262 = vld [vmem:[%s219 + $0x70] sm:$0xff]
        %v263 = vld [vmem:[%s219 + $0x78] sm:$0xff]
        %v264 = vld [vmem:[%s219 + $0x80] sm:$0xff]
        %v265 = vld [vmem:[%s219 + $0x88] sm:$0xff]
        %v266 = vld [vmem:[%s219 + $0x90] sm:$0xff]
        %v267 = vld [vmem:[%s219 + $0x98] sm:$0xff]
        %v268 = vld [vmem:[%s219 + $0xa0] sm:$0xff]
        %v269 = vld [vmem:[%s219 + $0xa8] sm:$0xff]
        %v270 = vld [vmem:[%s219 + $0xb0] sm:$0xff]
        %v271 = vld [vmem:[%s219 + $0xb8] sm:$0xff]
        %v272 = vld [vmem:[%s219 + $0xc0] sm:$0xff]
        %v273 = vld [vmem:[%s219 + $0xc8] sm:$0xff]
        %v274 = vld [vmem:[%s219 + $0xd0] sm:$0xf]
        %v275 = vld [vmem:[%s219 + $0xd8] sm:$0xf]
        %v276 = vld [vmem:[%s2] sm:$0xff]
        %278 = vset.pattern.permute.xlu0 0
        %279 = vperm.xlu0 %278, %v276
        %v280 = vpop.permute.xlu0 %279
        %vm282 = vcmask 883712
        %v284 = vsel %vm282, %v247, 0
        %vm286 = vcmask 1043456
        %v288 = vsel %vm286, %v274, 0
        %v291 = vsel %vm286, %v275, 0
        %293 = vmatprep.subr.mxu0 %v249
        %294 = vmatpush1.msra.mxu0 %v248
        %295 = vmatprep.subr.mxu0 %v251
        %296 = vmatpush1.msra.mxu0 %v250
        %297 = vmatprep.subr.mxu0 %v253
        %298 = vmatpush1.msra.mxu0 %v252
        %299 = vmatprep.subr.mxu0 %v255
        %300 = vmatpush1.msra.mxu0 %v254
        %301 = vmatprep.subr.mxu0 %v257
        %302 = vmatpush1.msra.mxu0 %v256
        %303 = vmatprep.subr.mxu0 %v259
        %304 = vmatpush1.msra.mxu0 %v258
        %305 = vmatprep.subr.mxu0 %v261
        %306 = vmatpush1.msra.mxu0 %v260
        %307 = vmatprep.subr.mxu0 %v263
        %308 = vmatpush1.msra.mxu0 %v262
        %309 = vmatprep.subr.mxu0 %v265
        %310 = vmatpush1.msra.mxu0 %v264
        %311 = vmatprep.subr.mxu0 %v267
        %312 = vmatpush1.msra.mxu0 %v266
        %313 = vmatprep.subr.mxu0 %v269
        %314 = vmatpush1.msra.mxu0 %v268
        %315 = vmatprep.subr.mxu0 %v271
        %316 = vmatpush1.msra.mxu0 %v270
        %317 = vmatprep.subr.mxu0 %v273
        %318 = vmatpush1.msra.mxu0 %v272
        %319 = vmatprep.subr.mxu0 %v291
        %320 = vmatpush1.msra.mxu0 %v288
        %321 = vmatprep.subr.mxu0 0.0
        %322 = vmatpush1.msra.mxu0 0.0
        %323 = vmatprep.subr.mxu0 0.0
        %324 = vmatpush1.msra.mxu0 0.0
        %325 = vmatprep.subr.mxu0 0.0
        %326 = vmatpush1.msra.mxu0 0.0
        %327 = vmatprep.subr.mxu0 0.0
        %328 = vmatpush1.msra.mxu0 0.0
        %329 = vmatprep.subr.mxu0 0.0
        %330 = vmatpush1.msra.mxu0 0.0
        %331 = vmatprep.subr.mxu0 0.0
        %332 = vmatpush1.msra.mxu0 0.0
        %333 = vmatprep.subr.mxu0 0.0
        %334 = vmatpush1.msra.mxu0 0.0
        %335 = vmatprep.subr.mxu0 0.0
        %336 = vmatpush1.msra.mxu0 0.0
        %337 = vmatprep.subr.mxu0 0.0
        %338 = vmatpush1.msra.mxu0 0.0
        %339 = vmatprep.subr.mxu0 0.0
        %340 = vmatpush1.msra.mxu0 0.0
        %341 = vmatprep.subr.mxu0 0.0
        %342 = vmatpush1.msra.mxu0 0.0
        %343 = vmatprep.subr.mxu0 0.0
        %344 = vmatpush1.msra.mxu0 0.0
        %345 = vmatprep.subr.mxu0 0.0
        %346 = vmatpush1.msra.mxu0 0.0
        %347 = vmatprep.subr.mxu0 0.0
        %348 = vmatpush1.msra.mxu0 0.0
        %349 = vmatprep.subr.mxu0 0.0
        %350 = vmatpush1.msra.mxu0 0.0
        %351 = vmatprep.subr.mxu0 0.0
        %352 = vmatpush1.msra.mxu0 0.0
        %353 = vmatprep.subr.mxu0 0.0
        %354 = vmatpush1.msra.mxu0 0.0
        %355 = vmatprep.subr.mxu0 0.0
        %356 = vmatpush1.msra.mxu0 0.0
        %357 = vmatprep.mubr.f32.mxu0 0.0
        %358 = vmatmul.mubr.f32.gmra.mrb[0].mxu0 %v284
        %v359 = vpop.f32.mrb[0].mxu0
        %v360 = vadd.f32 %v280, %v359
        %v361 = vpop.f32.mrb[0].mxu0
        %v362 = vadd.f32 %v280, %v361
        %363 = vdwg.mxu0
        %364 = vst [vmem:[%s245] sm:$0xff] %v360
        %365 = vst [vmem:[%s245 + $0x8] sm:$0xff] %v362
        %s366 = smul.u32 2, %s14
        %p367 = scmp.lt.s32.totalorder %s366, 3
        %s368 = scalar_select %p367, %s366, 3
        %s369 = smul.addr %s368, 8
        %s370 = scalar_lea.vmem %s3, %s369
        // Predicated region
        $region56: #{generator_forward.11} parent=50 // pred_check
          %p371 = pneg %p100
        $region57: #{generator_forward.11} parent=50 // pred_check_branch
          %373 = sbr.rel (%p371) target = $region59
        $region58: #{generator_forward.11} parent=50 // pred_region
          %s374 = smul.u32 2, %s14
        $region59: #{generator_forward.11} parent=50 // pred_fallthru
          _
      $region51: #{generator_forward.11} parent=5 // pred_fallthru
        _
      %p375 = scmp.le.s32.totalorder 2, %s9
      // Predicated region
      $region60: #{generator_forward.11} parent=5 // pred_check
        %p376 = pneg %p375
      $region61: #{generator_forward.11} parent=5 // pred_check_branch
        %378 = sbr.rel (%p376) target = $region63
      $region62: #{generator_forward.11} parent=5 // pred_region
        %s379 = ssub.s32 %s9, 2
        // Predicated region
        $region64: #{generator_forward.11} parent=62 // pred_check
          %p380 = pneg %p106
        $region65: #{generator_forward.11} parent=62 // pred_check_branch
          %382 = sbr.rel (%p380) target = $region67
        $region66: #{generator_forward.11} parent=62 // pred_region
          %s383 = smul.u32 2, %s15
          %p384 = scmp.lt.s32.totalorder %s383, 3
          %s385 = scalar_select %p384, %s383, 3
          %s386 = smul.addr %s385, 8
          %s387 = scalar_lea.vmem %s3, %s386
        $region67: #{generator_forward.11} parent=62 // pred_fallthru
          _
      $region63: #{generator_forward.11} parent=5 // pred_fallthru
        _
    $region6: #{generator_forward.11} parent=1 // loop_footer
      %s13 = sadd.s32 1, %s9
    $region7: #{generator_forward.11} parent=1 // loop_footer_branch
      %8 = sbr.rel target = $region3
    $region8: #{generator_forward.11} parent=1 // loop_exit
      _

// kernel: generator_forward.12
$region0: #{generator_forward.12}
  #allocation0 [shape = 'u32[]', space=smem, size = 0x4, offset = 0x4, fixed_abs, tag = 'smem constant byte address 0x4 - core index']
  #allocation1 [shape = 'u32[144,128]{1,0:T(1,128)}', space=vmem, size = 0x12000, scoped, tag = 'internal scratch']
  %s0 = inlined_call_operand.vmem [shape: f32[128,128], index: 0, kind: input, shape index: {}]
  %s1 = inlined_call_operand.vmem [shape: f32[8,128], index: 1, kind: input, shape index: {}]
  %s2 = inlined_call_operand.vmem [shape: f32[8,1], index: 2, kind: input, shape index: {}]
  %s3 = inlined_call_operand.vmem [shape: f32[8,128], index: 3, kind: output, shape index: {}]
  %s4 = sld [smem:[#allocation0]]
  $region22: #{generator_forward.12} parent=0
    _
  %s6 = ssub.s32 1, %s4
  %s7 = scalar_select 0, %s6, %s4
  // Predicated region
  $region2: #{generator_forward.12} parent=0 // pred_check
    _
  $region3: #{generator_forward.12} parent=0 // pred_check_branch
    %9 = sbr.rel (0) target = $region5
  $region4: #{generator_forward.12} parent=0 // pred_region
    _
  $region5: #{generator_forward.12} parent=0 // pred_fallthru
    _
  // Predicated region
  $region6: #{generator_forward.12} parent=0 // pred_check
    _
  $region7: #{generator_forward.12} parent=0 // pred_check_branch
    %11 = sbr.rel (0) target = $region9
  $region8: #{generator_forward.12} parent=0 // pred_region
    _
  $region9: #{generator_forward.12} parent=0 // pred_fallthru
    _
  // Predicated region
  $region10: #{generator_forward.12} parent=0 // pred_check
    _
  $region11: #{generator_forward.12} parent=0 // pred_check_branch
    %13 = sbr.rel (0) target = $region13
  $region12: #{generator_forward.12} parent=0 // pred_region
    _
  $region13: #{generator_forward.12} parent=0 // pred_fallthru
    _
  %v14 = vld [vmem:[%s1] sm:$0xff]
  %v15 = vld [vmem:[%s0] sm:$0xff]
  %v16 = vld [vmem:[%s0 + $0x8] sm:$0xff]
  %v17 = vld [vmem:[%s0 + $0x10] sm:$0xff]
  %v18 = vld [vmem:[%s0 + $0x18] sm:$0xff]
  %v19 = vld [vmem:[%s0 + $0x20] sm:$0xff]
  %v20 = vld [vmem:[%s0 + $0x28] sm:$0xff]
  %v21 = vld [vmem:[%s0 + $0x30] sm:$0xff]
  %v22 = vld [vmem:[%s0 + $0x38] sm:$0xff]
  %v23 = vld [vmem:[%s0 + $0x40] sm:$0xff]
  %v24 = vld [vmem:[%s0 + $0x48] sm:$0xff]
  %v25 = vld [vmem:[%s0 + $0x50] sm:$0xff]
  %v26 = vld [vmem:[%s0 + $0x58] sm:$0xff]
  %v27 = vld [vmem:[%s0 + $0x60] sm:$0xff]
  %v28 = vld [vmem:[%s0 + $0x68] sm:$0xff]
  %v29 = vld [vmem:[%s0 + $0x70] sm:$0xff]
  %v30 = vld [vmem:[%s0 + $0x78] sm:$0xff]
  %v31 = vld [vmem:[%s2] sm:$0xff]
  %33 = vset.pattern.permute.xlu0 0
  %34 = vperm.xlu0 %33, %v31
  %v35 = vpop.permute.xlu0 %34
  %37 = vmatprep.subr.mxu0 0.0
  %38 = vmatpush1.msra.mxu0 %v15
  %39 = vmatprep.subr.mxu0 0.0
  %40 = vmatpush1.msra.mxu0 %v16
  %41 = vmatprep.subr.mxu0 0.0
  %42 = vmatpush1.msra.mxu0 %v17
  %43 = vmatprep.subr.mxu0 0.0
  %44 = vmatpush1.msra.mxu0 %v18
  %45 = vmatprep.subr.mxu0 0.0
  %46 = vmatpush1.msra.mxu0 %v19
  %47 = vmatprep.subr.mxu0 0.0
  %48 = vmatpush1.msra.mxu0 %v20
  %49 = vmatprep.subr.mxu0 0.0
  %50 = vmatpush1.msra.mxu0 %v21
  %51 = vmatprep.subr.mxu0 0.0
  %52 = vmatpush1.msra.mxu0 %v22
  %53 = vmatprep.subr.mxu0 0.0
  %54 = vmatpush1.msra.mxu0 %v23
  %55 = vmatprep.subr.mxu0 0.0
  %56 = vmatpush1.msra.mxu0 %v24
  %57 = vmatprep.subr.mxu0 0.0
  %58 = vmatpush1.msra.mxu0 %v25
  %59 = vmatprep.subr.mxu0 0.0
  %60 = vmatpush1.msra.mxu0 %v26
  %61 = vmatprep.subr.mxu0 0.0
  %62 = vmatpush1.msra.mxu0 %v27
  %63 = vmatprep.subr.mxu0 0.0
  %64 = vmatpush1.msra.mxu0 %v28
  %65 = vmatprep.subr.mxu0 0.0
  %66 = vmatpush1.msra.mxu0 %v29
  %67 = vmatprep.subr.mxu0 0.0
  %68 = vmatpush1.msra.mxu0 %v30
  %69 = vmatprep.subr.mxu0 0.0
  %70 = vmatpush1.msra.mxu0 0.0
  %71 = vmatprep.subr.mxu0 0.0
  %72 = vmatpush1.msra.mxu0 0.0
  %73 = vmatprep.subr.mxu0 0.0
  %74 = vmatpush1.msra.mxu0 0.0
  %75 = vmatprep.subr.mxu0 0.0
  %76 = vmatpush1.msra.mxu0 0.0
  %77 = vmatprep.subr.mxu0 0.0
  %78 = vmatpush1.msra.mxu0 0.0
  %79 = vmatprep.subr.mxu0 0.0
  %80 = vmatpush1.msra.mxu0 0.0
  %81 = vmatprep.subr.mxu0 0.0
  %82 = vmatpush1.msra.mxu0 0.0
  %83 = vmatprep.subr.mxu0 0.0
  %84 = vmatpush1.msra.mxu0 0.0
  %85 = vmatprep.subr.mxu0 0.0
  %86 = vmatpush1.msra.mxu0 0.0
  %87 = vmatprep.subr.mxu0 0.0
  %88 = vmatpush1.msra.mxu0 0.0
  %89 = vmatprep.subr.mxu0 0.0
  %90 = vmatpush1.msra.mxu0 0.0
  %91 = vmatprep.subr.mxu0 0.0
  %92 = vmatpush1.msra.mxu0 0.0
  %93 = vmatprep.subr.mxu0 0.0
  %94 = vmatpush1.msra.mxu0 0.0
  %95 = vmatprep.subr.mxu0 0.0
  %96 = vmatpush1.msra.mxu0 0.0
  %97 = vmatprep.subr.mxu0 0.0
  %98 = vmatpush1.msra.mxu0 0.0
  %99 = vmatprep.subr.mxu0 0.0
  %100 = vmatpush1.msra.mxu0 0.0
  %101 = vmatprep.mubr.f32.mxu0 0.0
  %102 = vmatmul.mubr.f32.gmra.mrb[0].mxu0 %v14
  %v103 = vpop.f32.mrb[0].mxu0
  %v104 = vadd.f32 %v35, %v103
  %v105 = vpop.f32.mrb[0].mxu0
  %106 = vdwg.mxu0
  %107 = vst [vmem:[%s3] sm:$0xff] %v104
  // Predicated region
  $region14: #{generator_forward.12} parent=0 // pred_check
    _
  $region15: #{generator_forward.12} parent=0 // pred_check_branch
    %109 = sbr.rel (0) target = $region17
  $region16: #{generator_forward.12} parent=0 // pred_region
    _
  $region17: #{generator_forward.12} parent=0 // pred_fallthru
    _
  // Predicated region
  $region18: #{generator_forward.12} parent=0 // pred_check
    _
  $region19: #{generator_forward.12} parent=0 // pred_check_branch
    %111 = sbr.rel (0) target = $region21
  $region20: #{generator_forward.12} parent=0 // pred_region
    _
  $region21: #{generator_forward.12} parent=0 // pred_fallthru
    _

// kernel: generator_forward.13
$region0: #{generator_forward.13}
  #allocation0 [shape = 'u32[]', space=smem, size = 0x4, offset = 0x4, fixed_abs, tag = 'smem constant byte address 0x4 - core index']
  #allocation1 [shape = 'u32[144,128]{1,0:T(1,128)}', space=vmem, size = 0x12000, scoped, tag = 'internal scratch']
  %s0 = inlined_call_operand.vmem [shape: f32[128,32], index: 0, kind: input, shape index: {}]
  %s1 = inlined_call_operand.vmem [shape: f32[8,128], index: 1, kind: input, shape index: {}]
  %s2 = inlined_call_operand.vmem [shape: f32[8,1], index: 2, kind: input, shape index: {}]
  %s3 = inlined_call_operand.vmem [shape: f32[8,32], index: 3, kind: output, shape index: {}]
  %s4 = sld [smem:[#allocation0]]
  $region22: #{generator_forward.13} parent=0
    _
  %s6 = ssub.s32 1, %s4
  %s7 = scalar_select 0, %s6, %s4
  // Predicated region
  $region2: #{generator_forward.13} parent=0 // pred_check
    _
  $region3: #{generator_forward.13} parent=0 // pred_check_branch
    %9 = sbr.rel (0) target = $region5
  $region4: #{generator_forward.13} parent=0 // pred_region
    _
  $region5: #{generator_forward.13} parent=0 // pred_fallthru
    _
  // Predicated region
  $region6: #{generator_forward.13} parent=0 // pred_check
    _
  $region7: #{generator_forward.13} parent=0 // pred_check_branch
    %11 = sbr.rel (0) target = $region9
  $region8: #{generator_forward.13} parent=0 // pred_region
    _
  $region9: #{generator_forward.13} parent=0 // pred_fallthru
    _
  // Predicated region
  $region10: #{generator_forward.13} parent=0 // pred_check
    _
  $region11: #{generator_forward.13} parent=0 // pred_check_branch
    %13 = sbr.rel (0) target = $region13
  $region12: #{generator_forward.13} parent=0 // pred_region
    _
  $region13: #{generator_forward.13} parent=0 // pred_fallthru
    _
  %v14 = vld [vmem:[%s1] sm:$0xff]
  %v15 = vld [vmem:[%s0] sm:$0xff]
  %v16 = vld [vmem:[%s0 + $0x8] sm:$0xff]
  %v17 = vld [vmem:[%s0 + $0x10] sm:$0xff]
  %v18 = vld [vmem:[%s0 + $0x18] sm:$0xff]
  %v19 = vld [vmem:[%s0 + $0x20] sm:$0xff]
  %v20 = vld [vmem:[%s0 + $0x28] sm:$0xff]
  %v21 = vld [vmem:[%s0 + $0x30] sm:$0xff]
  %v22 = vld [vmem:[%s0 + $0x38] sm:$0xff]
  %v23 = vld [vmem:[%s0 + $0x40] sm:$0xff]
  %v24 = vld [vmem:[%s0 + $0x48] sm:$0xff]
  %v25 = vld [vmem:[%s0 + $0x50] sm:$0xff]
  %v26 = vld [vmem:[%s0 + $0x58] sm:$0xff]
  %v27 = vld [vmem:[%s0 + $0x60] sm:$0xff]
  %v28 = vld [vmem:[%s0 + $0x68] sm:$0xff]
  %v29 = vld [vmem:[%s0 + $0x70] sm:$0xff]
  %v30 = vld [vmem:[%s0 + $0x78] sm:$0xff]
  %v31 = vld [vmem:[%s2] sm:$0xff]
  %33 = vset.pattern.permute.xlu0 0
  %34 = vperm.xlu0 %33, %v31
  %v35 = vpop.permute.xlu0 %34
  %37 = vmatprep.subr.mxu0 0.0
  %38 = vmatpush1.msra.mxu0 %v15
  %39 = vmatprep.subr.mxu0 0.0
  %40 = vmatpush1.msra.mxu0 %v16
  %41 = vmatprep.subr.mxu0 0.0
  %42 = vmatpush1.msra.mxu0 %v17
  %43 = vmatprep.subr.mxu0 0.0
  %44 = vmatpush1.msra.mxu0 %v18
  %45 = vmatprep.subr.mxu0 0.0
  %46 = vmatpush1.msra.mxu0 %v19
  %47 = vmatprep.subr.mxu0 0.0
  %48 = vmatpush1.msra.mxu0 %v20
  %49 = vmatprep.subr.mxu0 0.0
  %50 = vmatpush1.msra.mxu0 %v21
  %51 = vmatprep.subr.mxu0 0.0
  %52 = vmatpush1.msra.mxu0 %v22
  %53 = vmatprep.subr.mxu0 0.0
  %54 = vmatpush1.msra.mxu0 %v23
  %55 = vmatprep.subr.mxu0 0.0
  %56 = vmatpush1.msra.mxu0 %v24
  %57 = vmatprep.subr.mxu0 0.0
  %58 = vmatpush1.msra.mxu0 %v25
  %59 = vmatprep.subr.mxu0 0.0
  %60 = vmatpush1.msra.mxu0 %v26
  %61 = vmatprep.subr.mxu0 0.0
  %62 = vmatpush1.msra.mxu0 %v27
  %63 = vmatprep.subr.mxu0 0.0
  %64 = vmatpush1.msra.mxu0 %v28
  %65 = vmatprep.subr.mxu0 0.0
  %66 = vmatpush1.msra.mxu0 %v29
  %67 = vmatprep.subr.mxu0 0.0
  %68 = vmatpush1.msra.mxu0 %v30
  %69 = vmatprep.subr.mxu0 0.0
  %70 = vmatpush1.msra.mxu0 0.0
  %71 = vmatprep.subr.mxu0 0.0
  %72 = vmatpush1.msra.mxu0 0.0
  %73 = vmatprep.subr.mxu0 0.0
  %74 = vmatpush1.msra.mxu0 0.0
  %75 = vmatprep.subr.mxu0 0.0
  %76 = vmatpush1.msra.mxu0 0.0
  %77 = vmatprep.subr.mxu0 0.0
  %78 = vmatpush1.msra.mxu0 0.0
  %79 = vmatprep.subr.mxu0 0.0
  %80 = vmatpush1.msra.mxu0 0.0
  %81 = vmatprep.subr.mxu0 0.0
  %82 = vmatpush1.msra.mxu0 0.0
  %83 = vmatprep.subr.mxu0 0.0
  %84 = vmatpush1.msra.mxu0 0.0
  %85 = vmatprep.subr.mxu0 0.0
  %86 = vmatpush1.msra.mxu0 0.0
  %87 = vmatprep.subr.mxu0 0.0
  %88 = vmatpush1.msra.mxu0 0.0
  %89 = vmatprep.subr.mxu0 0.0
  %90 = vmatpush1.msra.mxu0 0.0
  %91 = vmatprep.subr.mxu0 0.0
  %92 = vmatpush1.msra.mxu0 0.0
  %93 = vmatprep.subr.mxu0 0.0
  %94 = vmatpush1.msra.mxu0 0.0
  %95 = vmatprep.subr.mxu0 0.0
  %96 = vmatpush1.msra.mxu0 0.0
  %97 = vmatprep.subr.mxu0 0.0
  %98 = vmatpush1.msra.mxu0 0.0
  %99 = vmatprep.subr.mxu0 0.0
  %100 = vmatpush1.msra.mxu0 0.0
  %101 = vmatprep.mubr.f32.mxu0 0.0
  %102 = vmatmul.mubr.f32.gmra.mrb[0].mxu0 %v14
  %v103 = vpop.f32.mrb[0].mxu0
  %v104 = vadd.f32 %v35, %v103
  %v105 = vpop.f32.mrb[0].mxu0
  %106 = vdwg.mxu0
  %vm107 = vcmask 261120
  %108 = vst.msk [vmem:[%s3] sm:$0xff] %vm107, %v104
  // Predicated region
  $region14: #{generator_forward.13} parent=0 // pred_check
    _
  $region15: #{generator_forward.13} parent=0 // pred_check_branch
    %110 = sbr.rel (0) target = $region17
  $region16: #{generator_forward.13} parent=0 // pred_region
    _
  $region17: #{generator_forward.13} parent=0 // pred_fallthru
    _
  // Predicated region
  $region18: #{generator_forward.13} parent=0 // pred_check
    _
  $region19: #{generator_forward.13} parent=0 // pred_check_branch
    %112 = sbr.rel (0) target = $region21
  $region20: #{generator_forward.13} parent=0 // pred_region
    _
  $region21: #{generator_forward.13} parent=0 // pred_fallthru
    _

// kernel: generator_forward.14
$region0: #{generator_forward.14}
  #allocation0 [shape = 'u32[]', space=smem, size = 0x4, offset = 0x4, fixed_abs, tag = 'smem constant byte address 0x4 - core index']
  #allocation1 [shape = 'u32[144,128]{1,0:T(1,128)}', space=vmem, size = 0x12000, scoped, tag = 'internal scratch']
  %s0 = inlined_call_operand.vmem [shape: f32[128,8], index: 0, kind: input, shape index: {}]
  %s1 = inlined_call_operand.vmem [shape: f32[8,128], index: 1, kind: input, shape index: {}]
  %s2 = inlined_call_operand.vmem [shape: f32[8,1], index: 2, kind: input, shape index: {}]
  %s3 = inlined_call_operand.vmem [shape: f32[8,8], index: 3, kind: output, shape index: {}]
  %s4 = sld [smem:[#allocation0]]
  $region22: #{generator_forward.14} parent=0
    _
  %s6 = ssub.s32 1, %s4
  %s7 = scalar_select 0, %s6, %s4
  // Predicated region
  $region2: #{generator_forward.14} parent=0 // pred_check
    _
  $region3: #{generator_forward.14} parent=0 // pred_check_branch
    %9 = sbr.rel (0) target = $region5
  $region4: #{generator_forward.14} parent=0 // pred_region
    _
  $region5: #{generator_forward.14} parent=0 // pred_fallthru
    _
  // Predicated region
  $region6: #{generator_forward.14} parent=0 // pred_check
    _
  $region7: #{generator_forward.14} parent=0 // pred_check_branch
    %11 = sbr.rel (0) target = $region9
  $region8: #{generator_forward.14} parent=0 // pred_region
    _
  $region9: #{generator_forward.14} parent=0 // pred_fallthru
    _
  // Predicated region
  $region10: #{generator_forward.14} parent=0 // pred_check
    _
  $region11: #{generator_forward.14} parent=0 // pred_check_branch
    %13 = sbr.rel (0) target = $region13
  $region12: #{generator_forward.14} parent=0 // pred_region
    _
  $region13: #{generator_forward.14} parent=0 // pred_fallthru
    _
  %v14 = vld [vmem:[%s1] sm:$0xff]
  %v15 = vld [vmem:[%s0] sm:$0xff]
  %v16 = vld [vmem:[%s0 + $0x8] sm:$0xff]
  %v17 = vld [vmem:[%s0 + $0x10] sm:$0xff]
  %v18 = vld [vmem:[%s0 + $0x18] sm:$0xff]
  %v19 = vld [vmem:[%s0 + $0x20] sm:$0xff]
  %v20 = vld [vmem:[%s0 + $0x28] sm:$0xff]
  %v21 = vld [vmem:[%s0 + $0x30] sm:$0xff]
  %v22 = vld [vmem:[%s0 + $0x38] sm:$0xff]
  %v23 = vld [vmem:[%s0 + $0x40] sm:$0xff]
  %v24 = vld [vmem:[%s0 + $0x48] sm:$0xff]
  %v25 = vld [vmem:[%s0 + $0x50] sm:$0xff]
  %v26 = vld [vmem:[%s0 + $0x58] sm:$0xff]
  %v27 = vld [vmem:[%s0 + $0x60] sm:$0xff]
  %v28 = vld [vmem:[%s0 + $0x68] sm:$0xff]
  %v29 = vld [vmem:[%s0 + $0x70] sm:$0xff]
  %v30 = vld [vmem:[%s0 + $0x78] sm:$0xff]
  %v31 = vld [vmem:[%s2] sm:$0xff]
  %33 = vset.pattern.permute.xlu0 0
  %34 = vperm.xlu0 %33, %v31
  %v35 = vpop.permute.xlu0 %34
  %37 = vmatprep.subr.mxu0 0.0
  %38 = vmatpush1.msra.mxu0 %v15
  %39 = vmatprep.subr.mxu0 0.0
  %40 = vmatpush1.msra.mxu0 %v16
  %41 = vmatprep.subr.mxu0 0.0
  %42 = vmatpush1.msra.mxu0 %v17
  %43 = vmatprep.subr.mxu0 0.0
  %44 = vmatpush1.msra.mxu0 %v18
  %45 = vmatprep.subr.mxu0 0.0
  %46 = vmatpush1.msra.mxu0 %v19
  %47 = vmatprep.subr.mxu0 0.0
  %48 = vmatpush1.msra.mxu0 %v20
  %49 = vmatprep.subr.mxu0 0.0
  %50 = vmatpush1.msra.mxu0 %v21
  %51 = vmatprep.subr.mxu0 0.0
  %52 = vmatpush1.msra.mxu0 %v22
  %53 = vmatprep.subr.mxu0 0.0
  %54 = vmatpush1.msra.mxu0 %v23
  %55 = vmatprep.subr.mxu0 0.0
  %56 = vmatpush1.msra.mxu0 %v24
  %57 = vmatprep.subr.mxu0 0.0
  %58 = vmatpush1.msra.mxu0 %v25
  %59 = vmatprep.subr.mxu0 0.0
  %60 = vmatpush1.msra.mxu0 %v26
  %61 = vmatprep.subr.mxu0 0.0
  %62 = vmatpush1.msra.mxu0 %v27
  %63 = vmatprep.subr.mxu0 0.0
  %64 = vmatpush1.msra.mxu0 %v28
  %65 = vmatprep.subr.mxu0 0.0
  %66 = vmatpush1.msra.mxu0 %v29
  %67 = vmatprep.subr.mxu0 0.0
  %68 = vmatpush1.msra.mxu0 %v30
  %69 = vmatprep.subr.mxu0 0.0
  %70 = vmatpush1.msra.mxu0 0.0
  %71 = vmatprep.subr.mxu0 0.0
  %72 = vmatpush1.msra.mxu0 0.0
  %73 = vmatprep.subr.mxu0 0.0
  %74 = vmatpush1.msra.mxu0 0.0
  %75 = vmatprep.subr.mxu0 0.0
  %76 = vmatpush1.msra.mxu0 0.0
  %77 = vmatprep.subr.mxu0 0.0
  %78 = vmatpush1.msra.mxu0 0.0
  %79 = vmatprep.subr.mxu0 0.0
  %80 = vmatpush1.msra.mxu0 0.0
  %81 = vmatprep.subr.mxu0 0.0
  %82 = vmatpush1.msra.mxu0 0.0
  %83 = vmatprep.subr.mxu0 0.0
  %84 = vmatpush1.msra.mxu0 0.0
  %85 = vmatprep.subr.mxu0 0.0
  %86 = vmatpush1.msra.mxu0 0.0
  %87 = vmatprep.subr.mxu0 0.0
  %88 = vmatpush1.msra.mxu0 0.0
  %89 = vmatprep.subr.mxu0 0.0
  %90 = vmatpush1.msra.mxu0 0.0
  %91 = vmatprep.subr.mxu0 0.0
  %92 = vmatpush1.msra.mxu0 0.0
  %93 = vmatprep.subr.mxu0 0.0
  %94 = vmatpush1.msra.mxu0 0.0
  %95 = vmatprep.subr.mxu0 0.0
  %96 = vmatpush1.msra.mxu0 0.0
  %97 = vmatprep.subr.mxu0 0.0
  %98 = vmatpush1.msra.mxu0 0.0
  %99 = vmatprep.subr.mxu0 0.0
  %100 = vmatpush1.msra.mxu0 0.0
  %101 = vmatprep.mubr.f32.mxu0 0.0
  %102 = vmatmul.mubr.f32.gmra.mrb[0].mxu0 %v14
  %v103 = vpop.f32.mrb[0].mxu0
  %v104 = vadd.f32 %v35, %v103
  %v105 = vpop.f32.mrb[0].mxu0
  %106 = vdwg.mxu0
  %vm107 = vcmask 64512
  %108 = vst.msk [vmem:[%s3] sm:$0xff] %vm107, %v104
  // Predicated region
  $region14: #{generator_forward.14} parent=0 // pred_check
    _
  $region15: #{generator_forward.14} parent=0 // pred_check_branch
    %110 = sbr.rel (0) target = $region17
  $region16: #{generator_forward.14} parent=0 // pred_region
    _
  $region17: #{generator_forward.14} parent=0 // pred_fallthru
    _
  // Predicated region
  $region18: #{generator_forward.14} parent=0 // pred_check
    _
  $region19: #{generator_forward.14} parent=0 // pred_check_branch
    %112 = sbr.rel (0) target = $region21
  $region20: #{generator_forward.14} parent=0 // pred_region
    _
  $region21: #{generator_forward.14} parent=0 // pred_fallthru
    _

// kernel: generator_forward.15
$region0: #{generator_forward.15}
  #allocation0 [shape = 'u32[]', space=smem, size = 0x4, offset = 0x4, fixed_abs, tag = 'smem constant byte address 0x4 - core index']
  #allocation1 [shape = 'u32[144,128]{1,0:T(1,128)}', space=vmem, size = 0x12000, scoped, tag = 'internal scratch']
  %s0 = inlined_call_operand.vmem [shape: f32[128,2], index: 0, kind: input, shape index: {}]
  %s1 = inlined_call_operand.vmem [shape: f32[8,128], index: 1, kind: input, shape index: {}]
  %s2 = inlined_call_operand.vmem [shape: f32[8,1], index: 2, kind: input, shape index: {}]
  %s3 = inlined_call_operand.vmem [shape: f32[8,2], index: 3, kind: output, shape index: {}]
  %s4 = sld [smem:[#allocation0]]
  $region22: #{generator_forward.15} parent=0
    _
  %s6 = ssub.s32 1, %s4
  %s7 = scalar_select 0, %s6, %s4
  // Predicated region
  $region2: #{generator_forward.15} parent=0 // pred_check
    _
  $region3: #{generator_forward.15} parent=0 // pred_check_branch
    %9 = sbr.rel (0) target = $region5
  $region4: #{generator_forward.15} parent=0 // pred_region
    _
  $region5: #{generator_forward.15} parent=0 // pred_fallthru
    _
  // Predicated region
  $region6: #{generator_forward.15} parent=0 // pred_check
    _
  $region7: #{generator_forward.15} parent=0 // pred_check_branch
    %11 = sbr.rel (0) target = $region9
  $region8: #{generator_forward.15} parent=0 // pred_region
    _
  $region9: #{generator_forward.15} parent=0 // pred_fallthru
    _
  // Predicated region
  $region10: #{generator_forward.15} parent=0 // pred_check
    _
  $region11: #{generator_forward.15} parent=0 // pred_check_branch
    %13 = sbr.rel (0) target = $region13
  $region12: #{generator_forward.15} parent=0 // pred_region
    _
  $region13: #{generator_forward.15} parent=0 // pred_fallthru
    _
  %v14 = vld [vmem:[%s1] sm:$0xff]
  %v15 = vld [vmem:[%s0] sm:$0xff]
  %v16 = vld [vmem:[%s0 + $0x8] sm:$0xff]
  %v17 = vld [vmem:[%s0 + $0x10] sm:$0xff]
  %v18 = vld [vmem:[%s0 + $0x18] sm:$0xff]
  %v19 = vld [vmem:[%s0 + $0x20] sm:$0xff]
  %v20 = vld [vmem:[%s0 + $0x28] sm:$0xff]
  %v21 = vld [vmem:[%s0 + $0x30] sm:$0xff]
  %v22 = vld [vmem:[%s0 + $0x38] sm:$0xff]
  %v23 = vld [vmem:[%s0 + $0x40] sm:$0xff]
  %v24 = vld [vmem:[%s0 + $0x48] sm:$0xff]
  %v25 = vld [vmem:[%s0 + $0x50] sm:$0xff]
  %v26 = vld [vmem:[%s0 + $0x58] sm:$0xff]
  %v27 = vld [vmem:[%s0 + $0x60] sm:$0xff]
  %v28 = vld [vmem:[%s0 + $0x68] sm:$0xff]
  %v29 = vld [vmem:[%s0 + $0x70] sm:$0xff]
  %v30 = vld [vmem:[%s0 + $0x78] sm:$0xff]
  %v31 = vld [vmem:[%s2] sm:$0xff]
  %33 = vset.pattern.permute.xlu0 0
  %34 = vperm.xlu0 %33, %v31
  %v35 = vpop.permute.xlu0 %34
  %37 = vmatprep.subr.mxu0 0.0
  %38 = vmatpush1.msra.mxu0 %v15
  %39 = vmatprep.subr.mxu0 0.0
  %40 = vmatpush1.msra.mxu0 %v16
  %41 = vmatprep.subr.mxu0 0.0
  %42 = vmatpush1.msra.mxu0 %v17
  %43 = vmatprep.subr.mxu0 0.0
  %44 = vmatpush1.msra.mxu0 %v18
  %45 = vmatprep.subr.mxu0 0.0
  %46 = vmatpush1.msra.mxu0 %v19
  %47 = vmatprep.subr.mxu0 0.0
  %48 = vmatpush1.msra.mxu0 %v20
  %49 = vmatprep.subr.mxu0 0.0
  %50 = vmatpush1.msra.mxu0 %v21
  %51 = vmatprep.subr.mxu0 0.0
  %52 = vmatpush1.msra.mxu0 %v22
  %53 = vmatprep.subr.mxu0 0.0
  %54 = vmatpush1.msra.mxu0 %v23
  %55 = vmatprep.subr.mxu0 0.0
  %56 = vmatpush1.msra.mxu0 %v24
  %57 = vmatprep.subr.mxu0 0.0
  %58 = vmatpush1.msra.mxu0 %v25
  %59 = vmatprep.subr.mxu0 0.0
  %60 = vmatpush1.msra.mxu0 %v26
  %61 = vmatprep.subr.mxu0 0.0
  %62 = vmatpush1.msra.mxu0 %v27
  %63 = vmatprep.subr.mxu0 0.0
  %64 = vmatpush1.msra.mxu0 %v28
  %65 = vmatprep.subr.mxu0 0.0
  %66 = vmatpush1.msra.mxu0 %v29
  %67 = vmatprep.subr.mxu0 0.0
  %68 = vmatpush1.msra.mxu0 %v30
  %69 = vmatprep.subr.mxu0 0.0
  %70 = vmatpush1.msra.mxu0 0.0
  %71 = vmatprep.subr.mxu0 0.0
  %72 = vmatpush1.msra.mxu0 0.0
  %73 = vmatprep.subr.mxu0 0.0
  %74 = vmatpush1.msra.mxu0 0.0
  %75 = vmatprep.subr.mxu0 0.0
  %76 = vmatpush1.msra.mxu0 0.0
  %77 = vmatprep.subr.mxu0 0.0
  %78 = vmatpush1.msra.mxu0 0.0
  %79 = vmatprep.subr.mxu0 0.0
  %80 = vmatpush1.msra.mxu0 0.0
  %81 = vmatprep.subr.mxu0 0.0
  %82 = vmatpush1.msra.mxu0 0.0
  %83 = vmatprep.subr.mxu0 0.0
  %84 = vmatpush1.msra.mxu0 0.0
  %85 = vmatprep.subr.mxu0 0.0
  %86 = vmatpush1.msra.mxu0 0.0
  %87 = vmatprep.subr.mxu0 0.0
  %88 = vmatpush1.msra.mxu0 0.0
  %89 = vmatprep.subr.mxu0 0.0
  %90 = vmatpush1.msra.mxu0 0.0
  %91 = vmatprep.subr.mxu0 0.0
  %92 = vmatpush1.msra.mxu0 0.0
  %93 = vmatprep.subr.mxu0 0.0
  %94 = vmatpush1.msra.mxu0 0.0
  %95 = vmatprep.subr.mxu0 0.0
  %96 = vmatpush1.msra.mxu0 0.0
  %97 = vmatprep.subr.mxu0 0.0
  %98 = vmatpush1.msra.mxu0 0.0
  %99 = vmatprep.subr.mxu0 0.0
  %100 = vmatpush1.msra.mxu0 0.0
  %101 = vmatprep.mubr.f32.mxu0 0.0
  %102 = vmatmul.mubr.f32.gmra.mrb[0].mxu0 %v14
  %v103 = vpop.f32.mrb[0].mxu0
  %v104 = vadd.f32 %v35, %v103
  %v105 = vpop.f32.mrb[0].mxu0
  %106 = vdwg.mxu0
  %vm107 = vcmask 15360
  %108 = vst.msk [vmem:[%s3] sm:$0xff] %vm107, %v104
  // Predicated region
  $region14: #{generator_forward.15} parent=0 // pred_check
    _
  $region15: #{generator_forward.15} parent=0 // pred_check_branch
    %110 = sbr.rel (0) target = $region17
  $region16: #{generator_forward.15} parent=0 // pred_region
    _
  $region17: #{generator_forward.15} parent=0 // pred_fallthru
    _
  // Predicated region
  $region18: #{generator_forward.15} parent=0 // pred_check
    _
  $region19: #{generator_forward.15} parent=0 // pred_check_branch
    %112 = sbr.rel (0) target = $region21
  $region20: #{generator_forward.15} parent=0 // pred_region
    _
  $region21: #{generator_forward.15} parent=0 // pred_fallthru
    _

// kernel: tile.38
$region0: #{tile.38}
  #allocation0 [shape = 's32[1]{0}', space=sflag, size = 0x4, scoped, tag = 'scoped memory for tile.38']
  %s0 = inlined_call_operand.vmem [shape: f32[8], index: 0, kind: input, shape index: {}]
  %s1 = inlined_call_operand.vmem [shape: f32[4,8], index: 1, kind: output, shape index: {}]
  // Predicated region
  $region2: #{tile.38} parent=0 // pred_check
    _
  $region3: #{tile.38} parent=0 // pred_check_branch
    %3 = sbr.rel (0) target = $region5
  $region4: #{tile.38} parent=0 // pred_region
    _
  $region5: #{tile.38} parent=0 // pred_fallthru
    _
  %v4 = vld [vmem:[%s0] ss:$0 sm:$0xff]
  %5 = vst [vmem:[%s1] sm:$0xf] %v4

// kernel: tile.0
$region0: #{tile.0}
  %s0 = inlined_call_operand.vmem [shape: f32[4,8], index: 0, kind: input, shape index: {}]
  %s1 = inlined_call_operand.vmem [shape: f32[32,1], index: 1, kind: output, shape index: {}]
  $region1: #{tile.0} parent=0
    #allocation0 [shape = 'u8[4096]{0}', space=vmem, size = 0x1000, scoped, tag = 'scoped mem for input reshape']
    %s3 = sshllo.u32 0, 4
    %v4 = vld [vmem:[%s0] sm:%s3]
    %5 = vst [vmem:[#allocation0] sm:%s3] %v4
    %v6 = vld [vmem:[#allocation0] sm:$0xf]
    %vm7 = vcmask 7168
    %8 = vst.msk [vmem:[%s1] ss:$8 sm:$0xf] %vm7, %v6
    %v9 = vld [vmem:[#allocation0] sm:$0xf]
    %10 = vrot.lane.b32.xlu0 %v9, 127
    %v11 = vpop.permute.xlu0 %10
    %vm12 = vcmask 7168
    %s13 = scalar_lea.vmem %s1, 1
    %14 = vst.msk [vmem:[%s13] ss:$8 sm:$0xf] %vm12, %v11
    %v15 = vld [vmem:[#allocation0] sm:$0xf]
    %16 = vrot.lane.b32.xlu0 %v15, 126
    %v17 = vpop.permute.xlu0 %16
    %vm18 = vcmask 7168
    %s19 = scalar_lea.vmem %s1, 2
    %20 = vst.msk [vmem:[%s19] ss:$8 sm:$0xf] %vm18, %v17
    %v21 = vld [vmem:[#allocation0] sm:$0xf]
    %22 = vrot.lane.b32.xlu0 %v21, 125
    %v23 = vpop.permute.xlu0 %22
    %vm24 = vcmask 7168
    %s25 = scalar_lea.vmem %s1, 3
    %26 = vst.msk [vmem:[%s25] ss:$8 sm:$0xf] %vm24, %v23
    %v27 = vld [vmem:[#allocation0] sm:$0xf]
    %28 = vrot.lane.b32.xlu0 %v27, 124
    %v29 = vpop.permute.xlu0 %28
    %vm30 = vcmask 7168
    %s31 = scalar_lea.vmem %s1, 4
    %32 = vst.msk [vmem:[%s31] ss:$8 sm:$0xf] %vm30, %v29
    %v33 = vld [vmem:[#allocation0] sm:$0xf]
    %34 = vrot.lane.b32.xlu0 %v33, 123
    %v35 = vpop.permute.xlu0 %34
    %vm36 = vcmask 7168
    %s37 = scalar_lea.vmem %s1, 5
    %38 = vst.msk [vmem:[%s37] ss:$8 sm:$0xf] %vm36, %v35
    %v39 = vld [vmem:[#allocation0] sm:$0xf]
    %40 = vrot.lane.b32.xlu0 %v39, 122
    %v41 = vpop.permute.xlu0 %40
    %vm42 = vcmask 7168
    %s43 = scalar_lea.vmem %s1, 6
    %44 = vst.msk [vmem:[%s43] ss:$8 sm:$0xf] %vm42, %v41
    %v45 = vld [vmem:[#allocation0] sm:$0xf]
    %46 = vrot.lane.b32.xlu0 %v45, 121
    %v47 = vpop.permute.xlu0 %46
    %vm48 = vcmask 7168
    %s49 = scalar_lea.vmem %s1, 7
    %50 = vst.msk [vmem:[%s49] ss:$8 sm:$0xf] %vm48, %v47

// kernel: generator_forward.18
$region0: #{generator_forward.18}
  #allocation0 [shape = 'u32[]', space=smem, size = 0x4, offset = 0x4, fixed_abs, tag = 'smem constant byte address 0x4 - core index']
  #allocation1 [shape = 'u32[144,128]{1,0:T(1,128)}', space=vmem, size = 0x12000, scoped, tag = 'internal scratch']
  %s0 = inlined_call_operand.vmem [shape: f32[72,32], index: 0, kind: input, shape index: {}]
  %s1 = inlined_call_operand.vmem [shape: f32[32,72], index: 1, kind: input, shape index: {}]
  %s2 = inlined_call_operand.vmem [shape: f32[32,1], index: 2, kind: input, shape index: {}]
  %s3 = inlined_call_operand.vmem [shape: f32[32,32], index: 3, kind: output, shape index: {}]
  %s4 = sld [smem:[#allocation0]]
  $region22: #{generator_forward.18} parent=0
    _
  %s6 = ssub.s32 1, %s4
  %s7 = scalar_select 0, %s6, %s4
  // Predicated region
  $region2: #{generator_forward.18} parent=0 // pred_check
    _
  $region3: #{generator_forward.18} parent=0 // pred_check_branch
    %9 = sbr.rel (0) target = $region5
  $region4: #{generator_forward.18} parent=0 // pred_region
    _
  $region5: #{generator_forward.18} parent=0 // pred_fallthru
    _
  // Predicated region
  $region6: #{generator_forward.18} parent=0 // pred_check
    _
  $region7: #{generator_forward.18} parent=0 // pred_check_branch
    %11 = sbr.rel (0) target = $region9
  $region8: #{generator_forward.18} parent=0 // pred_region
    _
  $region9: #{generator_forward.18} parent=0 // pred_fallthru
    _
  // Predicated region
  $region10: #{generator_forward.18} parent=0 // pred_check
    _
  $region11: #{generator_forward.18} parent=0 // pred_check_branch
    %13 = sbr.rel (0) target = $region13
  $region12: #{generator_forward.18} parent=0 // pred_region
    _
  $region13: #{generator_forward.18} parent=0 // pred_fallthru
    _
  %v14 = vld [vmem:[%s1] sm:$0xff]
  %v15 = vld [vmem:[%s1 + $0x8] sm:$0xff]
  %v16 = vld [vmem:[%s1 + $0x10] sm:$0xff]
  %v17 = vld [vmem:[%s1 + $0x18] sm:$0xff]
  %v18 = vld [vmem:[%s0] sm:$0xff]
  %v19 = vld [vmem:[%s0 + $0x8] sm:$0xff]
  %v20 = vld [vmem:[%s0 + $0x10] sm:$0xff]
  %v21 = vld [vmem:[%s0 + $0x18] sm:$0xff]
  %v22 = vld [vmem:[%s0 + $0x20] sm:$0xff]
  %v23 = vld [vmem:[%s0 + $0x28] sm:$0xff]
  %v24 = vld [vmem:[%s0 + $0x30] sm:$0xff]
  %v25 = vld [vmem:[%s0 + $0x38] sm:$0xff]
  %v26 = vld [vmem:[%s0 + $0x40] sm:$0xff]
  %v27 = vld [vmem:[%s2] sm:$0xff]
  %v28 = vld [vmem:[%s2 + $0x8] sm:$0xff]
  %v29 = vld [vmem:[%s2 + $0x10] sm:$0xff]
  %v30 = vld [vmem:[%s2 + $0x18] sm:$0xff]
  %32 = vset.pattern.permute.xlu0 0
  %33 = vperm.xlu0 %32, %v27
  %v34 = vpop.permute.xlu0 %33
  %37 = vset.pattern.permute.xlu0 0
  %38 = vperm.xlu0 %37, %v28
  %v39 = vpop.permute.xlu0 %38
  %42 = vset.pattern.permute.xlu0 0
  %43 = vperm.xlu0 %42, %v29
  %v44 = vpop.permute.xlu0 %43
  %47 = vset.pattern.permute.xlu0 0
  %48 = vperm.xlu0 %47, %v30
  %v49 = vpop.permute.xlu0 %48
  %vm51 = vcmask 588800
  %v53 = vsel %vm51, %v14, 0
  %v56 = vsel %vm51, %v15, 0
  %v59 = vsel %vm51, %v16, 0
  %v62 = vsel %vm51, %v17, 0
  %64 = vmatprep.subr.mxu0 0.0
  %65 = vmatpush1.msra.mxu0 %v18
  %66 = vmatprep.subr.mxu0 0.0
  %67 = vmatpush1.msra.mxu0 %v19
  %68 = vmatprep.subr.mxu0 0.0
  %69 = vmatpush1.msra.mxu0 %v20
  %70 = vmatprep.subr.mxu0 0.0
  %71 = vmatpush1.msra.mxu0 %v21
  %72 = vmatprep.subr.mxu0 0.0
  %73 = vmatpush1.msra.mxu0 %v22
  %74 = vmatprep.subr.mxu0 0.0
  %75 = vmatpush1.msra.mxu0 %v23
  %76 = vmatprep.subr.mxu0 0.0
  %77 = vmatpush1.msra.mxu0 %v24
  %78 = vmatprep.subr.mxu0 0.0
  %79 = vmatpush1.msra.mxu0 %v25
  %80 = vmatprep.subr.mxu0 0.0
  %81 = vmatpush1.msra.mxu0 %v26
  %82 = vmatprep.subr.mxu0 0.0
  %83 = vmatpush1.msra.mxu0 0.0
  %84 = vmatprep.subr.mxu0 0.0
  %85 = vmatpush1.msra.mxu0 0.0
  %86 = vmatprep.subr.mxu0 0.0
  %87 = vmatpush1.msra.mxu0 0.0
  %88 = vmatprep.subr.mxu0 0.0
  %89 = vmatpush1.msra.mxu0 0.0
  %90 = vmatprep.subr.mxu0 0.0
  %91 = vmatpush1.msra.mxu0 0.0
  %92 = vmatprep.subr.mxu0 0.0
  %93 = vmatpush1.msra.mxu0 0.0
  %94 = vmatprep.subr.mxu0 0.0
  %95 = vmatpush1.msra.mxu0 0.0
  %96 = vmatprep.subr.mxu0 0.0
  %97 = vmatpush1.msra.mxu0 0.0
  %98 = vmatprep.subr.mxu0 0.0
  %99 = vmatpush1.msra.mxu0 0.0
  %100 = vmatprep.subr.mxu0 0.0
  %101 = vmatpush1.msra.mxu0 0.0
  %102 = vmatprep.subr.mxu0 0.0
  %103 = vmatpush1.msra.mxu0 0.0
  %104 = vmatprep.subr.mxu0 0.0
  %105 = vmatpush1.msra.mxu0 0.0
  %106 = vmatprep.subr.mxu0 0.0
  %107 = vmatpush1.msra.mxu0 0.0
  %108 = vmatprep.subr.mxu0 0.0
  %109 = vmatpush1.msra.mxu0 0.0
  %110 = vmatprep.subr.mxu0 0.0
  %111 = vmatpush1.msra.mxu0 0.0
  %112 = vmatprep.subr.mxu0 0.0
  %113 = vmatpush1.msra.mxu0 0.0
  %114 = vmatprep.subr.mxu0 0.0
  %115 = vmatpush1.msra.mxu0 0.0
  %116 = vmatprep.subr.mxu0 0.0
  %117 = vmatpush1.msra.mxu0 0.0
  %118 = vmatprep.subr.mxu0 0.0
  %119 = vmatpush1.msra.mxu0 0.0
  %120 = vmatprep.subr.mxu0 0.0
  %121 = vmatpush1.msra.mxu0 0.0
  %122 = vmatprep.subr.mxu0 0.0
  %123 = vmatpush1.msra.mxu0 0.0
  %124 = vmatprep.subr.mxu0 0.0
  %125 = vmatpush1.msra.mxu0 0.0
  %126 = vmatprep.subr.mxu0 0.0
  %127 = vmatpush1.msra.mxu0 0.0
  %128 = vmatprep.mubr.f32.mxu0 0.0
  %129 = vmatmul.mubr.f32.gmra.mrb[0].mxu0 %v53
  %v130 = vpop.f32.mrb[0].mxu0
  %v131 = vadd.f32 %v34, %v130
  %v132 = vpop.f32.mrb[0].mxu0
  %133 = vmatprep.mubr.f32.mxu0 0.0
  %134 = vmatmul.mubr.f32.gmra.mrb[0].mxu0 %v56
  %v135 = vpop.f32.mrb[0].mxu0
  %v136 = vadd.f32 %v39, %v135
  %v137 = vpop.f32.mrb[0].mxu0
  %138 = vmatprep.mubr.f32.mxu0 0.0
  %139 = vmatmul.mubr.f32.gmra.mrb[0].mxu0 %v59
  %v140 = vpop.f32.mrb[0].mxu0
  %v141 = vadd.f32 %v44, %v140
  %v142 = vpop.f32.mrb[0].mxu0
  %143 = vmatprep.mubr.f32.mxu0 0.0
  %144 = vmatmul.mubr.f32.gmra.mrb[0].mxu0 %v62
  %v145 = vpop.f32.mrb[0].mxu0
  %v146 = vadd.f32 %v49, %v145
  %v147 = vpop.f32.mrb[0].mxu0
  %148 = vdwg.mxu0
  %vm149 = vcmask 261120
  %150 = vst.msk [vmem:[%s3] sm:$0xff] %vm149, %v131
  %151 = vst.msk [vmem:[%s3 + $0x8] sm:$0xff] %vm149, %v136
  %152 = vst.msk [vmem:[%s3 + $0x10] sm:$0xff] %vm149, %v141
  %153 = vst.msk [vmem:[%s3 + $0x18] sm:$0xff] %vm149, %v146
  // Predicated region
  $region14: #{generator_forward.18} parent=0 // pred_check
    _
  $region15: #{generator_forward.18} parent=0 // pred_check_branch
    %155 = sbr.rel (0) target = $region17
  $region16: #{generator_forward.18} parent=0 // pred_region
    _
  $region17: #{generator_forward.18} parent=0 // pred_fallthru
    _
  // Predicated region
  $region18: #{generator_forward.18} parent=0 // pred_check
    _
  $region19: #{generator_forward.18} parent=0 // pred_check_branch
    %157 = sbr.rel (0) target = $region21
  $region20: #{generator_forward.18} parent=0 // pred_region
    _
  $region21: #{generator_forward.18} parent=0 // pred_fallthru
    _

// kernel: generator_forward.16
$region0: #{generator_forward.16}
  #allocation0 [shape = 'u32[]', space=smem, size = 0x4, offset = 0x4, fixed_abs, tag = 'smem constant byte address 0x4 - core index']
  #allocation1 [shape = 'u32[144,128]{1,0:T(1,128)}', space=vmem, size = 0x12000, scoped, tag = 'internal scratch']
  %s0 = inlined_call_operand.vmem [shape: f32[72,32], index: 0, kind: input, shape index: {}]
  %s1 = inlined_call_operand.vmem [shape: f32[72,8], index: 1, kind: input, shape index: {}]
  %s2 = inlined_call_operand.vmem [shape: f32[72,2], index: 2, kind: input, shape index: {}]
  %s3 = inlined_call_operand.vmem [shape: f32[32,72], index: 3, kind: input, shape index: {}]
  %s4 = inlined_call_operand.vmem [shape: f32[32,72], index: 4, kind: input, shape index: {}]
  %s5 = inlined_call_operand.vmem [shape: f32[32,72], index: 5, kind: input, shape index: {}]
  %s6 = inlined_call_operand.vmem [shape: f32[32,1], index: 6, kind: input, shape index: {}]
  %s7 = inlined_call_operand.vmem [shape: f32[32,1], index: 7, kind: input, shape index: {}]
  %s8 = inlined_call_operand.vmem [shape: f32[32,1], index: 8, kind: input, shape index: {}]
  %s9 = inlined_call_operand.vmem [shape: f32[32,32], index: 9, kind: output, shape index: {0}]
  %s10 = inlined_call_operand.vmem [shape: f32[32,8], index: 10, kind: output, shape index: {1}]
  %s11 = inlined_call_operand.vmem [shape: f32[32,2], index: 11, kind: output, shape index: {2}]
  %12 = xla_tuple %s9, %s10, %s11
  %s13 = sld [smem:[#allocation0]]
  $region62: #{generator_forward.16} parent=0
    _
  %s15 = ssub.s32 1, %s13
  %s16 = scalar_select 0, %s15, %s13
  // Predicated region
  $region2: #{generator_forward.16} parent=0 // pred_check
    _
  $region3: #{generator_forward.16} parent=0 // pred_check_branch
    %18 = sbr.rel (0) target = $region5
  $region4: #{generator_forward.16} parent=0 // pred_region
    _
  $region5: #{generator_forward.16} parent=0 // pred_fallthru
    _
  // Predicated region
  $region6: #{generator_forward.16} parent=0 // pred_check
    _
  $region7: #{generator_forward.16} parent=0 // pred_check_branch
    %20 = sbr.rel (0) target = $region9
  $region8: #{generator_forward.16} parent=0 // pred_region
    _
  $region9: #{generator_forward.16} parent=0 // pred_fallthru
    _
  // Predicated region
  $region10: #{generator_forward.16} parent=0 // pred_check
    _
  $region11: #{generator_forward.16} parent=0 // pred_check_branch
    %22 = sbr.rel (0) target = $region13
  $region12: #{generator_forward.16} parent=0 // pred_region
    _
  $region13: #{generator_forward.16} parent=0 // pred_fallthru
    _
  // Predicated region
  $region14: #{generator_forward.16} parent=0 // pred_check
    _
  $region15: #{generator_forward.16} parent=0 // pred_check_branch
    %24 = sbr.rel (0) target = $region17
  $region16: #{generator_forward.16} parent=0 // pred_region
    _
  $region17: #{generator_forward.16} parent=0 // pred_fallthru
    _
  // Predicated region
  $region18: #{generator_forward.16} parent=0 // pred_check
    _
  $region19: #{generator_forward.16} parent=0 // pred_check_branch
    %26 = sbr.rel (0) target = $region21
  $region20: #{generator_forward.16} parent=0 // pred_region
    _
  $region21: #{generator_forward.16} parent=0 // pred_fallthru
    _
  // Predicated region
  $region22: #{generator_forward.16} parent=0 // pred_check
    _
  $region23: #{generator_forward.16} parent=0 // pred_check_branch
    %28 = sbr.rel (0) target = $region25
  $region24: #{generator_forward.16} parent=0 // pred_region
    _
  $region25: #{generator_forward.16} parent=0 // pred_fallthru
    _
  // Predicated region
  $region26: #{generator_forward.16} parent=0 // pred_check
    _
  $region27: #{generator_forward.16} parent=0 // pred_check_branch
    %30 = sbr.rel (0) target = $region29
  $region28: #{generator_forward.16} parent=0 // pred_region
    _
  $region29: #{generator_forward.16} parent=0 // pred_fallthru
    _
  // Predicated region
  $region30: #{generator_forward.16} parent=0 // pred_check
    _
  $region31: #{generator_forward.16} parent=0 // pred_check_branch
    %32 = sbr.rel (0) target = $region33
  $region32: #{generator_forward.16} parent=0 // pred_region
    _
  $region33: #{generator_forward.16} parent=0 // pred_fallthru
    _
  // Predicated region
  $region34: #{generator_forward.16} parent=0 // pred_check
    _
  $region35: #{generator_forward.16} parent=0 // pred_check_branch
    %34 = sbr.rel (0) target = $region37
  $region36: #{generator_forward.16} parent=0 // pred_region
    _
  $region37: #{generator_forward.16} parent=0 // pred_fallthru
    _
  %v35 = vld [vmem:[%s3] sm:$0xff]
  %v36 = vld [vmem:[%s3 + $0x8] sm:$0xff]
  %v37 = vld [vmem:[%s3 + $0x10] sm:$0xff]
  %v38 = vld [vmem:[%s3 + $0x18] sm:$0xff]
  %v39 = vld [vmem:[%s0] sm:$0xff]
  %v40 = vld [vmem:[%s0 + $0x8] sm:$0xff]
  %v41 = vld [vmem:[%s0 + $0x10] sm:$0xff]
  %v42 = vld [vmem:[%s0 + $0x18] sm:$0xff]
  %v43 = vld [vmem:[%s0 + $0x20] sm:$0xff]
  %v44 = vld [vmem:[%s0 + $0x28] sm:$0xff]
  %v45 = vld [vmem:[%s0 + $0x30] sm:$0xff]
  %v46 = vld [vmem:[%s0 + $0x38] sm:$0xff]
  %v47 = vld [vmem:[%s0 + $0x40] sm:$0xff]
  %v48 = vld [vmem:[%s6] sm:$0xff]
  %v49 = vld [vmem:[%s6 + $0x8] sm:$0xff]
  %v50 = vld [vmem:[%s6 + $0x10] sm:$0xff]
  %v51 = vld [vmem:[%s6 + $0x18] sm:$0xff]
  %53 = vset.pattern.permute.xlu0 0
  %54 = vperm.xlu0 %53, %v48
  %v55 = vpop.permute.xlu0 %54
  %58 = vset.pattern.permute.xlu0 0
  %59 = vperm.xlu0 %58, %v49
  %v60 = vpop.permute.xlu0 %59
  %63 = vset.pattern.permute.xlu0 0
  %64 = vperm.xlu0 %63, %v50
  %v65 = vpop.permute.xlu0 %64
  %68 = vset.pattern.permute.xlu0 0
  %69 = vperm.xlu0 %68, %v51
  %v70 = vpop.permute.xlu0 %69
  %vm72 = vcmask 588800
  %v74 = vsel %vm72, %v35, 0
  %v77 = vsel %vm72, %v36, 0
  %v80 = vsel %vm72, %v37, 0
  %v83 = vsel %vm72, %v38, 0
  %85 = vmatprep.subr.mxu0 0.0
  %86 = vmatpush1.msra.mxu0 %v39
  %87 = vmatprep.subr.mxu0 0.0
  %88 = vmatpush1.msra.mxu0 %v40
  %89 = vmatprep.subr.mxu0 0.0
  %90 = vmatpush1.msra.mxu0 %v41
  %91 = vmatprep.subr.mxu0 0.0
  %92 = vmatpush1.msra.mxu0 %v42
  %93 = vmatprep.subr.mxu0 0.0
  %94 = vmatpush1.msra.mxu0 %v43
  %95 = vmatprep.subr.mxu0 0.0
  %96 = vmatpush1.msra.mxu0 %v44
  %97 = vmatprep.subr.mxu0 0.0
  %98 = vmatpush1.msra.mxu0 %v45
  %99 = vmatprep.subr.mxu0 0.0
  %100 = vmatpush1.msra.mxu0 %v46
  %101 = vmatprep.subr.mxu0 0.0
  %102 = vmatpush1.msra.mxu0 %v47
  %103 = vmatprep.subr.mxu0 0.0
  %104 = vmatpush1.msra.mxu0 0.0
  %105 = vmatprep.subr.mxu0 0.0
  %106 = vmatpush1.msra.mxu0 0.0
  %107 = vmatprep.subr.mxu0 0.0
  %108 = vmatpush1.msra.mxu0 0.0
  %109 = vmatprep.subr.mxu0 0.0
  %110 = vmatpush1.msra.mxu0 0.0
  %111 = vmatprep.subr.mxu0 0.0
  %112 = vmatpush1.msra.mxu0 0.0
  %113 = vmatprep.subr.mxu0 0.0
  %114 = vmatpush1.msra.mxu0 0.0
  %115 = vmatprep.subr.mxu0 0.0
  %116 = vmatpush1.msra.mxu0 0.0
  %117 = vmatprep.subr.mxu0 0.0
  %118 = vmatpush1.msra.mxu0 0.0
  %119 = vmatprep.subr.mxu0 0.0
  %120 = vmatpush1.msra.mxu0 0.0
  %121 = vmatprep.subr.mxu0 0.0
  %122 = vmatpush1.msra.mxu0 0.0
  %123 = vmatprep.subr.mxu0 0.0
  %124 = vmatpush1.msra.mxu0 0.0
  %125 = vmatprep.subr.mxu0 0.0
  %126 = vmatpush1.msra.mxu0 0.0
  %127 = vmatprep.subr.mxu0 0.0
  %128 = vmatpush1.msra.mxu0 0.0
  %129 = vmatprep.subr.mxu0 0.0
  %130 = vmatpush1.msra.mxu0 0.0
  %131 = vmatprep.subr.mxu0 0.0
  %132 = vmatpush1.msra.mxu0 0.0
  %133 = vmatprep.subr.mxu0 0.0
  %134 = vmatpush1.msra.mxu0 0.0
  %135 = vmatprep.subr.mxu0 0.0
  %136 = vmatpush1.msra.mxu0 0.0
  %137 = vmatprep.subr.mxu0 0.0
  %138 = vmatpush1.msra.mxu0 0.0
  %139 = vmatprep.subr.mxu0 0.0
  %140 = vmatpush1.msra.mxu0 0.0
  %141 = vmatprep.subr.mxu0 0.0
  %142 = vmatpush1.msra.mxu0 0.0
  %143 = vmatprep.subr.mxu0 0.0
  %144 = vmatpush1.msra.mxu0 0.0
  %145 = vmatprep.subr.mxu0 0.0
  %146 = vmatpush1.msra.mxu0 0.0
  %147 = vmatprep.subr.mxu0 0.0
  %148 = vmatpush1.msra.mxu0 0.0
  %149 = vmatprep.mubr.f32.mxu0 0.0
  %150 = vmatmul.mubr.f32.gmra.mrb[0].mxu0 %v74
  %v151 = vpop.f32.mrb[0].mxu0
  %v152 = vadd.f32 %v55, %v151
  %v153 = vpop.f32.mrb[0].mxu0
  %154 = vmatprep.mubr.f32.mxu0 0.0
  %155 = vmatmul.mubr.f32.gmra.mrb[0].mxu0 %v77
  %v156 = vpop.f32.mrb[0].mxu0
  %v157 = vadd.f32 %v60, %v156
  %v158 = vpop.f32.mrb[0].mxu0
  %159 = vmatprep.mubr.f32.mxu0 0.0
  %160 = vmatmul.mubr.f32.gmra.mrb[0].mxu0 %v80
  %v161 = vpop.f32.mrb[0].mxu0
  %v162 = vadd.f32 %v65, %v161
  %v163 = vpop.f32.mrb[0].mxu0
  %164 = vmatprep.mubr.f32.mxu0 0.0
  %165 = vmatmul.mubr.f32.gmra.mrb[0].mxu0 %v83
  %v166 = vpop.f32.mrb[0].mxu0
  %v167 = vadd.f32 %v70, %v166
  %v168 = vpop.f32.mrb[0].mxu0
  %169 = vdwg.mxu0
  %vm170 = vcmask 261120
  %171 = vst.msk [vmem:[%s9] sm:$0xff] %vm170, %v152
  %172 = vst.msk [vmem:[%s9 + $0x8] sm:$0xff] %vm170, %v157
  %173 = vst.msk [vmem:[%s9 + $0x10] sm:$0xff] %vm170, %v162
  %174 = vst.msk [vmem:[%s9 + $0x18] sm:$0xff] %vm170, %v167
  %v175 = vld [vmem:[%s4] sm:$0xff]
  %v176 = vld [vmem:[%s4 + $0x8] sm:$0xff]
  %v177 = vld [vmem:[%s4 + $0x10] sm:$0xff]
  %v178 = vld [vmem:[%s4 + $0x18] sm:$0xff]
  %v179 = vld [vmem:[%s1] sm:$0xff]
  %v180 = vld [vmem:[%s1 + $0x8] sm:$0xff]
  %v181 = vld [vmem:[%s1 + $0x10] sm:$0xff]
  %v182 = vld [vmem:[%s1 + $0x18] sm:$0xff]
  %v183 = vld [vmem:[%s1 + $0x20] sm:$0xff]
  %v184 = vld [vmem:[%s1 + $0x28] sm:$0xff]
  %v185 = vld [vmem:[%s1 + $0x30] sm:$0xff]
  %v186 = vld [vmem:[%s1 + $0x38] sm:$0xff]
  %v187 = vld [vmem:[%s1 + $0x40] sm:$0xff]
  %v188 = vld [vmem:[%s7] sm:$0xff]
  %v189 = vld [vmem:[%s7 + $0x8] sm:$0xff]
  %v190 = vld [vmem:[%s7 + $0x10] sm:$0xff]
  %v191 = vld [vmem:[%s7 + $0x18] sm:$0xff]
  %193 = vset.pattern.permute.xlu0 0
  %194 = vperm.xlu0 %193, %v188
  %v195 = vpop.permute.xlu0 %194
  %198 = vset.pattern.permute.xlu0 0
  %199 = vperm.xlu0 %198, %v189
  %v200 = vpop.permute.xlu0 %199
  %203 = vset.pattern.permute.xlu0 0
  %204 = vperm.xlu0 %203, %v190
  %v205 = vpop.permute.xlu0 %204
  %208 = vset.pattern.permute.xlu0 0
  %209 = vperm.xlu0 %208, %v191
  %v210 = vpop.permute.xlu0 %209
  %v213 = vsel %vm72, %v175, 0
  %v216 = vsel %vm72, %v176, 0
  %v219 = vsel %vm72, %v177, 0
  %v222 = vsel %vm72, %v178, 0
  %224 = vmatprep.subr.mxu0 0.0
  %225 = vmatpush1.msra.mxu0 %v179
  %226 = vmatprep.subr.mxu0 0.0
  %227 = vmatpush1.msra.mxu0 %v180
  %228 = vmatprep.subr.mxu0 0.0
  %229 = vmatpush1.msra.mxu0 %v181
  %230 = vmatprep.subr.mxu0 0.0
  %231 = vmatpush1.msra.mxu0 %v182
  %232 = vmatprep.subr.mxu0 0.0
  %233 = vmatpush1.msra.mxu0 %v183
  %234 = vmatprep.subr.mxu0 0.0
  %235 = vmatpush1.msra.mxu0 %v184
  %236 = vmatprep.subr.mxu0 0.0
  %237 = vmatpush1.msra.mxu0 %v185
  %238 = vmatprep.subr.mxu0 0.0
  %239 = vmatpush1.msra.mxu0 %v186
  %240 = vmatprep.subr.mxu0 0.0
  %241 = vmatpush1.msra.mxu0 %v187
  %242 = vmatprep.subr.mxu0 0.0
  %243 = vmatpush1.msra.mxu0 0.0
  %244 = vmatprep.subr.mxu0 0.0
  %245 = vmatpush1.msra.mxu0 0.0
  %246 = vmatprep.subr.mxu0 0.0
  %247 = vmatpush1.msra.mxu0 0.0
  %248 = vmatprep.subr.mxu0 0.0
  %249 = vmatpush1.msra.mxu0 0.0
  %250 = vmatprep.subr.mxu0 0.0
  %251 = vmatpush1.msra.mxu0 0.0
  %252 = vmatprep.subr.mxu0 0.0
  %253 = vmatpush1.msra.mxu0 0.0
  %254 = vmatprep.subr.mxu0 0.0
  %255 = vmatpush1.msra.mxu0 0.0
  %256 = vmatprep.subr.mxu0 0.0
  %257 = vmatpush1.msra.mxu0 0.0
  %258 = vmatprep.subr.mxu0 0.0
  %259 = vmatpush1.msra.mxu0 0.0
  %260 = vmatprep.subr.mxu0 0.0
  %261 = vmatpush1.msra.mxu0 0.0
  %262 = vmatprep.subr.mxu0 0.0
  %263 = vmatpush1.msra.mxu0 0.0
  %264 = vmatprep.subr.mxu0 0.0
  %265 = vmatpush1.msra.mxu0 0.0
  %266 = vmatprep.subr.mxu0 0.0
  %267 = vmatpush1.msra.mxu0 0.0
  %268 = vmatprep.subr.mxu0 0.0
  %269 = vmatpush1.msra.mxu0 0.0
  %270 = vmatprep.subr.mxu0 0.0
  %271 = vmatpush1.msra.mxu0 0.0
  %272 = vmatprep.subr.mxu0 0.0
  %273 = vmatpush1.msra.mxu0 0.0
  %274 = vmatprep.subr.mxu0 0.0
  %275 = vmatpush1.msra.mxu0 0.0
  %276 = vmatprep.subr.mxu0 0.0
  %277 = vmatpush1.msra.mxu0 0.0
  %278 = vmatprep.subr.mxu0 0.0
  %279 = vmatpush1.msra.mxu0 0.0
  %280 = vmatprep.subr.mxu0 0.0
  %281 = vmatpush1.msra.mxu0 0.0
  %282 = vmatprep.subr.mxu0 0.0
  %283 = vmatpush1.msra.mxu0 0.0
  %284 = vmatprep.subr.mxu0 0.0
  %285 = vmatpush1.msra.mxu0 0.0
  %286 = vmatprep.subr.mxu0 0.0
  %287 = vmatpush1.msra.mxu0 0.0
  %288 = vmatprep.mubr.f32.mxu0 0.0
  %289 = vmatmul.mubr.f32.gmra.mrb[0].mxu0 %v213
  %v290 = vpop.f32.mrb[0].mxu0
  %v291 = vadd.f32 %v195, %v290
  %v292 = vpop.f32.mrb[0].mxu0
  %293 = vmatprep.mubr.f32.mxu0 0.0
  %294 = vmatmul.mubr.f32.gmra.mrb[0].mxu0 %v216
  %v295 = vpop.f32.mrb[0].mxu0
  %v296 = vadd.f32 %v200, %v295
  %v297 = vpop.f32.mrb[0].mxu0
  %298 = vmatprep.mubr.f32.mxu0 0.0
  %299 = vmatmul.mubr.f32.gmra.mrb[0].mxu0 %v219
  %v300 = vpop.f32.mrb[0].mxu0
  %v301 = vadd.f32 %v205, %v300
  %v302 = vpop.f32.mrb[0].mxu0
  %303 = vmatprep.mubr.f32.mxu0 0.0
  %304 = vmatmul.mubr.f32.gmra.mrb[0].mxu0 %v222
  %v305 = vpop.f32.mrb[0].mxu0
  %v306 = vadd.f32 %v210, %v305
  %v307 = vpop.f32.mrb[0].mxu0
  %308 = vdwg.mxu0
  %vm309 = vcmask 64512
  %310 = vst.msk [vmem:[%s10] sm:$0xff] %vm309, %v291
  %311 = vst.msk [vmem:[%s10 + $0x8] sm:$0xff] %vm309, %v296
  %312 = vst.msk [vmem:[%s10 + $0x10] sm:$0xff] %vm309, %v301
  %313 = vst.msk [vmem:[%s10 + $0x18] sm:$0xff] %vm309, %v306
  %v314 = vld [vmem:[%s5] sm:$0xff]
  %v315 = vld [vmem:[%s5 + $0x8] sm:$0xff]
  %v316 = vld [vmem:[%s5 + $0x10] sm:$0xff]
  %v317 = vld [vmem:[%s5 + $0x18] sm:$0xff]
  %v318 = vld [vmem:[%s2] sm:$0xff]
  %v319 = vld [vmem:[%s2 + $0x8] sm:$0xff]
  %v320 = vld [vmem:[%s2 + $0x10] sm:$0xff]
  %v321 = vld [vmem:[%s2 + $0x18] sm:$0xff]
  %v322 = vld [vmem:[%s2 + $0x20] sm:$0xff]
  %v323 = vld [vmem:[%s2 + $0x28] sm:$0xff]
  %v324 = vld [vmem:[%s2 + $0x30] sm:$0xff]
  %v325 = vld [vmem:[%s2 + $0x38] sm:$0xff]
  %v326 = vld [vmem:[%s2 + $0x40] sm:$0xff]
  %v327 = vld [vmem:[%s8] sm:$0xff]
  %v328 = vld [vmem:[%s8 + $0x8] sm:$0xff]
  %v329 = vld [vmem:[%s8 + $0x10] sm:$0xff]
  %v330 = vld [vmem:[%s8 + $0x18] sm:$0xff]
  %332 = vset.pattern.permute.xlu0 0
  %333 = vperm.xlu0 %332, %v327
  %v334 = vpop.permute.xlu0 %333
  %337 = vset.pattern.permute.xlu0 0
  %338 = vperm.xlu0 %337, %v328
  %v339 = vpop.permute.xlu0 %338
  %342 = vset.pattern.permute.xlu0 0
  %343 = vperm.xlu0 %342, %v329
  %v344 = vpop.permute.xlu0 %343
  %347 = vset.pattern.permute.xlu0 0
  %348 = vperm.xlu0 %347, %v330
  %v349 = vpop.permute.xlu0 %348
  %v352 = vsel %vm72, %v314, 0
  %v355 = vsel %vm72, %v315, 0
  %v358 = vsel %vm72, %v316, 0
  %v361 = vsel %vm72, %v317, 0
  %363 = vmatprep.subr.mxu0 0.0
  %364 = vmatpush1.msra.mxu0 %v318
  %365 = vmatprep.subr.mxu0 0.0
  %366 = vmatpush1.msra.mxu0 %v319
  %367 = vmatprep.subr.mxu0 0.0
  %368 = vmatpush1.msra.mxu0 %v320
  %369 = vmatprep.subr.mxu0 0.0
  %370 = vmatpush1.msra.mxu0 %v321
  %371 = vmatprep.subr.mxu0 0.0
  %372 = vmatpush1.msra.mxu0 %v322
  %373 = vmatprep.subr.mxu0 0.0
  %374 = vmatpush1.msra.mxu0 %v323
  %375 = vmatprep.subr.mxu0 0.0
  %376 = vmatpush1.msra.mxu0 %v324
  %377 = vmatprep.subr.mxu0 0.0
  %378 = vmatpush1.msra.mxu0 %v325
  %379 = vmatprep.subr.mxu0 0.0
  %380 = vmatpush1.msra.mxu0 %v326
  %381 = vmatprep.subr.mxu0 0.0
  %382 = vmatpush1.msra.mxu0 0.0
  %383 = vmatprep.subr.mxu0 0.0
  %384 = vmatpush1.msra.mxu0 0.0
  %385 = vmatprep.subr.mxu0 0.0
  %386 = vmatpush1.msra.mxu0 0.0
  %387 = vmatprep.subr.mxu0 0.0
  %388 = vmatpush1.msra.mxu0 0.0
  %389 = vmatprep.subr.mxu0 0.0
  %390 = vmatpush1.msra.mxu0 0.0
  %391 = vmatprep.subr.mxu0 0.0
  %392 = vmatpush1.msra.mxu0 0.0
  %393 = vmatprep.subr.mxu0 0.0
  %394 = vmatpush1.msra.mxu0 0.0
  %395 = vmatprep.subr.mxu0 0.0
  %396 = vmatpush1.msra.mxu0 0.0
  %397 = vmatprep.subr.mxu0 0.0
  %398 = vmatpush1.msra.mxu0 0.0
  %399 = vmatprep.subr.mxu0 0.0
  %400 = vmatpush1.msra.mxu0 0.0
  %401 = vmatprep.subr.mxu0 0.0
  %402 = vmatpush1.msra.mxu0 0.0
  %403 = vmatprep.subr.mxu0 0.0
  %404 = vmatpush1.msra.mxu0 0.0
  %405 = vmatprep.subr.mxu0 0.0
  %406 = vmatpush1.msra.mxu0 0.0
  %407 = vmatprep.subr.mxu0 0.0
  %408 = vmatpush1.msra.mxu0 0.0
  %409 = vmatprep.subr.mxu0 0.0
  %410 = vmatpush1.msra.mxu0 0.0
  %411 = vmatprep.subr.mxu0 0.0
  %412 = vmatpush1.msra.mxu0 0.0
  %413 = vmatprep.subr.mxu0 0.0
  %414 = vmatpush1.msra.mxu0 0.0
  %415 = vmatprep.subr.mxu0 0.0
  %416 = vmatpush1.msra.mxu0 0.0
  %417 = vmatprep.subr.mxu0 0.0
  %418 = vmatpush1.msra.mxu0 0.0
  %419 = vmatprep.subr.mxu0 0.0
  %420 = vmatpush1.msra.mxu0 0.0
  %421 = vmatprep.subr.mxu0 0.0
  %422 = vmatpush1.msra.mxu0 0.0
  %423 = vmatprep.subr.mxu0 0.0
  %424 = vmatpush1.msra.mxu0 0.0
  %425 = vmatprep.subr.mxu0 0.0
  %426 = vmatpush1.msra.mxu0 0.0
  %427 = vmatprep.mubr.f32.mxu0 0.0
  %428 = vmatmul.mubr.f32.gmra.mrb[0].mxu0 %v352
  %v429 = vpop.f32.mrb[0].mxu0
  %v430 = vadd.f32 %v334, %v429
  %v431 = vpop.f32.mrb[0].mxu0
  %432 = vmatprep.mubr.f32.mxu0 0.0
  %433 = vmatmul.mubr.f32.gmra.mrb[0].mxu0 %v355
  %v434 = vpop.f32.mrb[0].mxu0
  %v435 = vadd.f32 %v339, %v434
  %v436 = vpop.f32.mrb[0].mxu0
  %437 = vmatprep.mubr.f32.mxu0 0.0
  %438 = vmatmul.mubr.f32.gmra.mrb[0].mxu0 %v358
  %v439 = vpop.f32.mrb[0].mxu0
  %v440 = vadd.f32 %v344, %v439
  %v441 = vpop.f32.mrb[0].mxu0
  %442 = vmatprep.mubr.f32.mxu0 0.0
  %443 = vmatmul.mubr.f32.gmra.mrb[0].mxu0 %v361
  %v444 = vpop.f32.mrb[0].mxu0
  %v445 = vadd.f32 %v349, %v444
  %v446 = vpop.f32.mrb[0].mxu0
  %447 = vdwg.mxu0
  %vm448 = vcmask 15360
  %449 = vst.msk [vmem:[%s11] sm:$0xff] %vm448, %v430
  %450 = vst.msk [vmem:[%s11 + $0x8] sm:$0xff] %vm448, %v435
  %451 = vst.msk [vmem:[%s11 + $0x10] sm:$0xff] %vm448, %v440
  %452 = vst.msk [vmem:[%s11 + $0x18] sm:$0xff] %vm448, %v445
  // Predicated region
  $region38: #{generator_forward.16} parent=0 // pred_check
    _
  $region39: #{generator_forward.16} parent=0 // pred_check_branch
    %454 = sbr.rel (0) target = $region41
  $region40: #{generator_forward.16} parent=0 // pred_region
    _
  $region41: #{generator_forward.16} parent=0 // pred_fallthru
    _
  // Predicated region
  $region42: #{generator_forward.16} parent=0 // pred_check
    _
  $region43: #{generator_forward.16} parent=0 // pred_check_branch
    %456 = sbr.rel (0) target = $region45
  $region44: #{generator_forward.16} parent=0 // pred_region
    _
  $region45: #{generator_forward.16} parent=0 // pred_fallthru
    _
  // Predicated region
  $region46: #{generator_forward.16} parent=0 // pred_check
    _
  $region47: #{generator_forward.16} parent=0 // pred_check_branch
    %458 = sbr.rel (0) target = $region49
  $region48: #{generator_forward.16} parent=0 // pred_region
    _
  $region49: #{generator_forward.16} parent=0 // pred_fallthru
    _
  // Predicated region
  $region50: #{generator_forward.16} parent=0 // pred_check
    _
  $region51: #{generator_forward.16} parent=0 // pred_check_branch
    %460 = sbr.rel (0) target = $region53
  $region52: #{generator_forward.16} parent=0 // pred_region
    _
  $region53: #{generator_forward.16} parent=0 // pred_fallthru
    _
  // Predicated region
  $region54: #{generator_forward.16} parent=0 // pred_check
    _
  $region55: #{generator_forward.16} parent=0 // pred_check_branch
    %462 = sbr.rel (0) target = $region57
  $region56: #{generator_forward.16} parent=0 // pred_region
    _
  $region57: #{generator_forward.16} parent=0 // pred_fallthru
    _
  // Predicated region
  $region58: #{generator_forward.16} parent=0 // pred_check
    _
  $region59: #{generator_forward.16} parent=0 // pred_check_branch
    %464 = sbr.rel (0) target = $region61
  $region60: #{generator_forward.16} parent=0 // pred_region
    _
  $region61: #{generator_forward.16} parent=0 // pred_fallthru
    _

// kernel: generator_forward.17
$region0: #{generator_forward.17}
  #allocation0 [shape = 'u32[]', space=smem, size = 0x4, offset = 0x4, fixed_abs, tag = 'smem constant byte address 0x4 - core index']
  #allocation1 [shape = 'u32[144,128]{1,0:T(1,128)}', space=vmem, size = 0x12000, scoped, tag = 'internal scratch']
  %s0 = inlined_call_operand.vmem [shape: f32[72,32], index: 0, kind: input, shape index: {}]
  %s1 = inlined_call_operand.vmem [shape: f32[72,8], index: 1, kind: input, shape index: {}]
  %s2 = inlined_call_operand.vmem [shape: f32[32,72], index: 2, kind: input, shape index: {}]
  %s3 = inlined_call_operand.vmem [shape: f32[32,72], index: 3, kind: input, shape index: {}]
  %s4 = inlined_call_operand.vmem [shape: f32[32,1], index: 4, kind: input, shape index: {}]
  %s5 = inlined_call_operand.vmem [shape: f32[32,1], index: 5, kind: input, shape index: {}]
  %s6 = inlined_call_operand.vmem [shape: f32[32,32], index: 6, kind: output, shape index: {0}]
  %s7 = inlined_call_operand.vmem [shape: f32[32,8], index: 7, kind: output, shape index: {1}]
  %8 = xla_tuple %s6, %s7
  %s9 = sld [smem:[#allocation0]]
  $region42: #{generator_forward.17} parent=0
    _
  %s11 = ssub.s32 1, %s9
  %s12 = scalar_select 0, %s11, %s9
  // Predicated region
  $region2: #{generator_forward.17} parent=0 // pred_check
    _
  $region3: #{generator_forward.17} parent=0 // pred_check_branch
    %14 = sbr.rel (0) target = $region5
  $region4: #{generator_forward.17} parent=0 // pred_region
    _
  $region5: #{generator_forward.17} parent=0 // pred_fallthru
    _
  // Predicated region
  $region6: #{generator_forward.17} parent=0 // pred_check
    _
  $region7: #{generator_forward.17} parent=0 // pred_check_branch
    %16 = sbr.rel (0) target = $region9
  $region8: #{generator_forward.17} parent=0 // pred_region
    _
  $region9: #{generator_forward.17} parent=0 // pred_fallthru
    _
  // Predicated region
  $region10: #{generator_forward.17} parent=0 // pred_check
    _
  $region11: #{generator_forward.17} parent=0 // pred_check_branch
    %18 = sbr.rel (0) target = $region13
  $region12: #{generator_forward.17} parent=0 // pred_region
    _
  $region13: #{generator_forward.17} parent=0 // pred_fallthru
    _
  // Predicated region
  $region14: #{generator_forward.17} parent=0 // pred_check
    _
  $region15: #{generator_forward.17} parent=0 // pred_check_branch
    %20 = sbr.rel (0) target = $region17
  $region16: #{generator_forward.17} parent=0 // pred_region
    _
  $region17: #{generator_forward.17} parent=0 // pred_fallthru
    _
  // Predicated region
  $region18: #{generator_forward.17} parent=0 // pred_check
    _
  $region19: #{generator_forward.17} parent=0 // pred_check_branch
    %22 = sbr.rel (0) target = $region21
  $region20: #{generator_forward.17} parent=0 // pred_region
    _
  $region21: #{generator_forward.17} parent=0 // pred_fallthru
    _
  // Predicated region
  $region22: #{generator_forward.17} parent=0 // pred_check
    _
  $region23: #{generator_forward.17} parent=0 // pred_check_branch
    %24 = sbr.rel (0) target = $region25
  $region24: #{generator_forward.17} parent=0 // pred_region
    _
  $region25: #{generator_forward.17} parent=0 // pred_fallthru
    _
  %v25 = vld [vmem:[%s2] sm:$0xff]
  %v26 = vld [vmem:[%s2 + $0x8] sm:$0xff]
  %v27 = vld [vmem:[%s2 + $0x10] sm:$0xff]
  %v28 = vld [vmem:[%s2 + $0x18] sm:$0xff]
  %v29 = vld [vmem:[%s0] sm:$0xff]
  %v30 = vld [vmem:[%s0 + $0x8] sm:$0xff]
  %v31 = vld [vmem:[%s0 + $0x10] sm:$0xff]
  %v32 = vld [vmem:[%s0 + $0x18] sm:$0xff]
  %v33 = vld [vmem:[%s0 + $0x20] sm:$0xff]
  %v34 = vld [vmem:[%s0 + $0x28] sm:$0xff]
  %v35 = vld [vmem:[%s0 + $0x30] sm:$0xff]
  %v36 = vld [vmem:[%s0 + $0x38] sm:$0xff]
  %v37 = vld [vmem:[%s0 + $0x40] sm:$0xff]
  %v38 = vld [vmem:[%s4] sm:$0xff]
  %v39 = vld [vmem:[%s4 + $0x8] sm:$0xff]
  %v40 = vld [vmem:[%s4 + $0x10] sm:$0xff]
  %v41 = vld [vmem:[%s4 + $0x18] sm:$0xff]
  %43 = vset.pattern.permute.xlu0 0
  %44 = vperm.xlu0 %43, %v38
  %v45 = vpop.permute.xlu0 %44
  %48 = vset.pattern.permute.xlu0 0
  %49 = vperm.xlu0 %48, %v39
  %v50 = vpop.permute.xlu0 %49
  %53 = vset.pattern.permute.xlu0 0
  %54 = vperm.xlu0 %53, %v40
  %v55 = vpop.permute.xlu0 %54
  %58 = vset.pattern.permute.xlu0 0
  %59 = vperm.xlu0 %58, %v41
  %v60 = vpop.permute.xlu0 %59
  %vm62 = vcmask 588800
  %v64 = vsel %vm62, %v25, 0
  %v67 = vsel %vm62, %v26, 0
  %v70 = vsel %vm62, %v27, 0
  %v73 = vsel %vm62, %v28, 0
  %75 = vmatprep.subr.mxu0 0.0
  %76 = vmatpush1.msra.mxu0 %v29
  %77 = vmatprep.subr.mxu0 0.0
  %78 = vmatpush1.msra.mxu0 %v30
  %79 = vmatprep.subr.mxu0 0.0
  %80 = vmatpush1.msra.mxu0 %v31
  %81 = vmatprep.subr.mxu0 0.0
  %82 = vmatpush1.msra.mxu0 %v32
  %83 = vmatprep.subr.mxu0 0.0
  %84 = vmatpush1.msra.mxu0 %v33
  %85 = vmatprep.subr.mxu0 0.0
  %86 = vmatpush1.msra.mxu0 %v34
  %87 = vmatprep.subr.mxu0 0.0
  %88 = vmatpush1.msra.mxu0 %v35
  %89 = vmatprep.subr.mxu0 0.0
  %90 = vmatpush1.msra.mxu0 %v36
  %91 = vmatprep.subr.mxu0 0.0
  %92 = vmatpush1.msra.mxu0 %v37
  %93 = vmatprep.subr.mxu0 0.0
  %94 = vmatpush1.msra.mxu0 0.0
  %95 = vmatprep.subr.mxu0 0.0
  %96 = vmatpush1.msra.mxu0 0.0
  %97 = vmatprep.subr.mxu0 0.0
  %98 = vmatpush1.msra.mxu0 0.0
  %99 = vmatprep.subr.mxu0 0.0
  %100 = vmatpush1.msra.mxu0 0.0
  %101 = vmatprep.subr.mxu0 0.0
  %102 = vmatpush1.msra.mxu0 0.0
  %103 = vmatprep.subr.mxu0 0.0
  %104 = vmatpush1.msra.mxu0 0.0
  %105 = vmatprep.subr.mxu0 0.0
  %106 = vmatpush1.msra.mxu0 0.0
  %107 = vmatprep.subr.mxu0 0.0
  %108 = vmatpush1.msra.mxu0 0.0
  %109 = vmatprep.subr.mxu0 0.0
  %110 = vmatpush1.msra.mxu0 0.0
  %111 = vmatprep.subr.mxu0 0.0
  %112 = vmatpush1.msra.mxu0 0.0
  %113 = vmatprep.subr.mxu0 0.0
  %114 = vmatpush1.msra.mxu0 0.0
  %115 = vmatprep.subr.mxu0 0.0
  %116 = vmatpush1.msra.mxu0 0.0
  %117 = vmatprep.subr.mxu0 0.0
  %118 = vmatpush1.msra.mxu0 0.0
  %119 = vmatprep.subr.mxu0 0.0
  %120 = vmatpush1.msra.mxu0 0.0
  %121 = vmatprep.subr.mxu0 0.0
  %122 = vmatpush1.msra.mxu0 0.0
  %123 = vmatprep.subr.mxu0 0.0
  %124 = vmatpush1.msra.mxu0 0.0
  %125 = vmatprep.subr.mxu0 0.0
  %126 = vmatpush1.msra.mxu0 0.0
  %127 = vmatprep.subr.mxu0 0.0
  %128 = vmatpush1.msra.mxu0 0.0
  %129 = vmatprep.subr.mxu0 0.0
  %130 = vmatpush1.msra.mxu0 0.0
  %131 = vmatprep.subr.mxu0 0.0
  %132 = vmatpush1.msra.mxu0 0.0
  %133 = vmatprep.subr.mxu0 0.0
  %134 = vmatpush1.msra.mxu0 0.0
  %135 = vmatprep.subr.mxu0 0.0
  %136 = vmatpush1.msra.mxu0 0.0
  %137 = vmatprep.subr.mxu0 0.0
  %138 = vmatpush1.msra.mxu0 0.0
  %139 = vmatprep.mubr.f32.mxu0 0.0
  %140 = vmatmul.mubr.f32.gmra.mrb[0].mxu0 %v64
  %v141 = vpop.f32.mrb[0].mxu0
  %v142 = vadd.f32 %v45, %v141
  %v143 = vpop.f32.mrb[0].mxu0
  %144 = vmatprep.mubr.f32.mxu0 0.0
  %145 = vmatmul.mubr.f32.gmra.mrb[0].mxu0 %v67
  %v146 = vpop.f32.mrb[0].mxu0
  %v147 = vadd.f32 %v50, %v146
  %v148 = vpop.f32.mrb[0].mxu0
  %149 = vmatprep.mubr.f32.mxu0 0.0
  %150 = vmatmul.mubr.f32.gmra.mrb[0].mxu0 %v70
  %v151 = vpop.f32.mrb[0].mxu0
  %v152 = vadd.f32 %v55, %v151
  %v153 = vpop.f32.mrb[0].mxu0
  %154 = vmatprep.mubr.f32.mxu0 0.0
  %155 = vmatmul.mubr.f32.gmra.mrb[0].mxu0 %v73
  %v156 = vpop.f32.mrb[0].mxu0
  %v157 = vadd.f32 %v60, %v156
  %v158 = vpop.f32.mrb[0].mxu0
  %159 = vdwg.mxu0
  %vm160 = vcmask 261120
  %161 = vst.msk [vmem:[%s6] sm:$0xff] %vm160, %v142
  %162 = vst.msk [vmem:[%s6 + $0x8] sm:$0xff] %vm160, %v147
  %163 = vst.msk [vmem:[%s6 + $0x10] sm:$0xff] %vm160, %v152
  %164 = vst.msk [vmem:[%s6 + $0x18] sm:$0xff] %vm160, %v157
  %v165 = vld [vmem:[%s3] sm:$0xff]
  %v166 = vld [vmem:[%s3 + $0x8] sm:$0xff]
  %v167 = vld [vmem:[%s3 + $0x10] sm:$0xff]
  %v168 = vld [vmem:[%s3 + $0x18] sm:$0xff]
  %v169 = vld [vmem:[%s1] sm:$0xff]
  %v170 = vld [vmem:[%s1 + $0x8] sm:$0xff]
  %v171 = vld [vmem:[%s1 + $0x10] sm:$0xff]
  %v172 = vld [vmem:[%s1 + $0x18] sm:$0xff]
  %v173 = vld [vmem:[%s1 + $0x20] sm:$0xff]
  %v174 = vld [vmem:[%s1 + $0x28] sm:$0xff]
  %v175 = vld [vmem:[%s1 + $0x30] sm:$0xff]
  %v176 = vld [vmem:[%s1 + $0x38] sm:$0xff]
  %v177 = vld [vmem:[%s1 + $0x40] sm:$0xff]
  %v178 = vld [vmem:[%s5] sm:$0xff]
  %v179 = vld [vmem:[%s5 + $0x8] sm:$0xff]
  %v180 = vld [vmem:[%s5 + $0x10] sm:$0xff]
  %v181 = vld [vmem:[%s5 + $0x18] sm:$0xff]
  %183 = vset.pattern.permute.xlu0 0
  %184 = vperm.xlu0 %183, %v178
  %v185 = vpop.permute.xlu0 %184
  %188 = vset.pattern.permute.xlu0 0
  %189 = vperm.xlu0 %188, %v179
  %v190 = vpop.permute.xlu0 %189
  %193 = vset.pattern.permute.xlu0 0
  %194 = vperm.xlu0 %193, %v180
  %v195 = vpop.permute.xlu0 %194
  %198 = vset.pattern.permute.xlu0 0
  %199 = vperm.xlu0 %198, %v181
  %v200 = vpop.permute.xlu0 %199
  %v203 = vsel %vm62, %v165, 0
  %v206 = vsel %vm62, %v166, 0
  %v209 = vsel %vm62, %v167, 0
  %v212 = vsel %vm62, %v168, 0
  %214 = vmatprep.subr.mxu0 0.0
  %215 = vmatpush1.msra.mxu0 %v169
  %216 = vmatprep.subr.mxu0 0.0
  %217 = vmatpush1.msra.mxu0 %v170
  %218 = vmatprep.subr.mxu0 0.0
  %219 = vmatpush1.msra.mxu0 %v171
  %220 = vmatprep.subr.mxu0 0.0
  %221 = vmatpush1.msra.mxu0 %v172
  %222 = vmatprep.subr.mxu0 0.0
  %223 = vmatpush1.msra.mxu0 %v173
  %224 = vmatprep.subr.mxu0 0.0
  %225 = vmatpush1.msra.mxu0 %v174
  %226 = vmatprep.subr.mxu0 0.0
  %227 = vmatpush1.msra.mxu0 %v175
  %228 = vmatprep.subr.mxu0 0.0
  %229 = vmatpush1.msra.mxu0 %v176
  %230 = vmatprep.subr.mxu0 0.0
  %231 = vmatpush1.msra.mxu0 %v177
  %232 = vmatprep.subr.mxu0 0.0
  %233 = vmatpush1.msra.mxu0 0.0
  %234 = vmatprep.subr.mxu0 0.0
  %235 = vmatpush1.msra.mxu0 0.0
  %236 = vmatprep.subr.mxu0 0.0
  %237 = vmatpush1.msra.mxu0 0.0
  %238 = vmatprep.subr.mxu0 0.0
  %239 = vmatpush1.msra.mxu0 0.0
  %240 = vmatprep.subr.mxu0 0.0
  %241 = vmatpush1.msra.mxu0 0.0
  %242 = vmatprep.subr.mxu0 0.0
  %243 = vmatpush1.msra.mxu0 0.0
  %244 = vmatprep.subr.mxu0 0.0
  %245 = vmatpush1.msra.mxu0 0.0
  %246 = vmatprep.subr.mxu0 0.0
  %247 = vmatpush1.msra.mxu0 0.0
  %248 = vmatprep.subr.mxu0 0.0
  %249 = vmatpush1.msra.mxu0 0.0
  %250 = vmatprep.subr.mxu0 0.0
  %251 = vmatpush1.msra.mxu0 0.0
  %252 = vmatprep.subr.mxu0 0.0
  %253 = vmatpush1.msra.mxu0 0.0
  %254 = vmatprep.subr.mxu0 0.0
  %255 = vmatpush1.msra.mxu0 0.0
  %256 = vmatprep.subr.mxu0 0.0
  %257 = vmatpush1.msra.mxu0 0.0
  %258 = vmatprep.subr.mxu0 0.0
  %259 = vmatpush1.msra.mxu0 0.0
  %260 = vmatprep.subr.mxu0 0.0
  %261 = vmatpush1.msra.mxu0 0.0
  %262 = vmatprep.subr.mxu0 0.0
  %263 = vmatpush1.msra.mxu0 0.0
  %264 = vmatprep.subr.mxu0 0.0
  %265 = vmatpush1.msra.mxu0 0.0
  %266 = vmatprep.subr.mxu0 0.0
  %267 = vmatpush1.msra.mxu0 0.0
  %268 = vmatprep.subr.mxu0 0.0
  %269 = vmatpush1.msra.mxu0 0.0
  %270 = vmatprep.subr.mxu0 0.0
  %271 = vmatpush1.msra.mxu0 0.0
  %272 = vmatprep.subr.mxu0 0.0
  %273 = vmatpush1.msra.mxu0 0.0
  %274 = vmatprep.subr.mxu0 0.0
  %275 = vmatpush1.msra.mxu0 0.0
  %276 = vmatprep.subr.mxu0 0.0
  %277 = vmatpush1.msra.mxu0 0.0
  %278 = vmatprep.mubr.f32.mxu0 0.0
  %279 = vmatmul.mubr.f32.gmra.mrb[0].mxu0 %v203
  %v280 = vpop.f32.mrb[0].mxu0
  %v281 = vadd.f32 %v185, %v280
  %v282 = vpop.f32.mrb[0].mxu0
  %283 = vmatprep.mubr.f32.mxu0 0.0
  %284 = vmatmul.mubr.f32.gmra.mrb[0].mxu0 %v206
  %v285 = vpop.f32.mrb[0].mxu0
  %v286 = vadd.f32 %v190, %v285
  %v287 = vpop.f32.mrb[0].mxu0
  %288 = vmatprep.mubr.f32.mxu0 0.0
  %289 = vmatmul.mubr.f32.gmra.mrb[0].mxu0 %v209
  %v290 = vpop.f32.mrb[0].mxu0
  %v291 = vadd.f32 %v195, %v290
  %v292 = vpop.f32.mrb[0].mxu0
  %293 = vmatprep.mubr.f32.mxu0 0.0
  %294 = vmatmul.mubr.f32.gmra.mrb[0].mxu0 %v212
  %v295 = vpop.f32.mrb[0].mxu0
  %v296 = vadd.f32 %v200, %v295
  %v297 = vpop.f32.mrb[0].mxu0
  %298 = vdwg.mxu0
  %vm299 = vcmask 64512
  %300 = vst.msk [vmem:[%s7] sm:$0xff] %vm299, %v281
  %301 = vst.msk [vmem:[%s7 + $0x8] sm:$0xff] %vm299, %v286
  %302 = vst.msk [vmem:[%s7 + $0x10] sm:$0xff] %vm299, %v291
  %303 = vst.msk [vmem:[%s7 + $0x18] sm:$0xff] %vm299, %v296
  // Predicated region
  $region26: #{generator_forward.17} parent=0 // pred_check
    _
  $region27: #{generator_forward.17} parent=0 // pred_check_branch
    %305 = sbr.rel (0) target = $region29
  $region28: #{generator_forward.17} parent=0 // pred_region
    _
  $region29: #{generator_forward.17} parent=0 // pred_fallthru
    _
  // Predicated region
  $region30: #{generator_forward.17} parent=0 // pred_check
    _
  $region31: #{generator_forward.17} parent=0 // pred_check_branch
    %307 = sbr.rel (0) target = $region33
  $region32: #{generator_forward.17} parent=0 // pred_region
    _
  $region33: #{generator_forward.17} parent=0 // pred_fallthru
    _
  // Predicated region
  $region34: #{generator_forward.17} parent=0 // pred_check
    _
  $region35: #{generator_forward.17} parent=0 // pred_check_branch
    %309 = sbr.rel (0) target = $region37
  $region36: #{generator_forward.17} parent=0 // pred_region
    _
  $region37: #{generator_forward.17} parent=0 // pred_fallthru
    _
  // Predicated region
  $region38: #{generator_forward.17} parent=0 // pred_check
    _
  $region39: #{generator_forward.17} parent=0 // pred_check_branch
    %311 = sbr.rel (0) target = $region41
  $region40: #{generator_forward.17} parent=0 // pred_region
    _
  $region41: #{generator_forward.17} parent=0 // pred_fallthru
    _

// kernel: tile.68
$region0: #{tile.68}
  #allocation0 [shape = 's32[1]{0}', space=sflag, size = 0x4, scoped, tag = 'scoped memory for tile.68']
  %s0 = inlined_call_operand.vmem [shape: f32[3], index: 0, kind: input, shape index: {}]
  %s1 = inlined_call_operand.vmem [shape: f32[4,3], index: 1, kind: output, shape index: {}]
  // Predicated region
  $region2: #{tile.68} parent=0 // pred_check
    _
  $region3: #{tile.68} parent=0 // pred_check_branch
    %3 = sbr.rel (0) target = $region5
  $region4: #{tile.68} parent=0 // pred_region
    _
  $region5: #{tile.68} parent=0 // pred_fallthru
    _
  %v4 = vld [vmem:[%s0] ss:$0 sm:$0xff]
  %5 = vst [vmem:[%s1] sm:$0xf] %v4

// kernel: tile.6
$region0: #{tile.6}
  %s0 = inlined_call_operand.vmem [shape: f32[4,3], index: 0, kind: input, shape index: {}]
  %s1 = inlined_call_operand.vmem [shape: f32[12,1], index: 1, kind: output, shape index: {}]
  $region1: #{tile.6} parent=0
    #allocation0 [shape = 'u8[4096]{0}', space=vmem, size = 0x1000, scoped, tag = 'scoped mem for input reshape']
    %s3 = sshllo.u32 0, 4
    %v4 = vld [vmem:[%s0] sm:%s3]
    %5 = vst [vmem:[#allocation0] sm:%s3] %v4
    %v6 = vld [vmem:[#allocation0] sm:$0xf]
    %vm7 = vcmask 7168
    %8 = vst.msk [vmem:[%s1] ss:$3 sm:$0xf] %vm7, %v6
    %v9 = vld [vmem:[#allocation0] sm:$0xf]
    %10 = vrot.lane.b32.xlu0 %v9, 127
    %v11 = vpop.permute.xlu0 %10
    %vm12 = vcmask 7168
    %s13 = scalar_lea.vmem %s1, 1
    %14 = vst.msk [vmem:[%s13] ss:$3 sm:$0xf] %vm12, %v11
    %v15 = vld [vmem:[#allocation0] sm:$0xf]
    %16 = vrot.lane.b32.xlu0 %v15, 126
    %v17 = vpop.permute.xlu0 %16
    %vm18 = vcmask 7168
    %s19 = scalar_lea.vmem %s1, 2
    %20 = vst.msk [vmem:[%s19] ss:$3 sm:$0xf] %vm18, %v17

// kernel: generator_forward.19
$region0: #{generator_forward.19}
  #allocation0 [shape = 'u32[]', space=smem, size = 0x4, offset = 0x4, fixed_abs, tag = 'smem constant byte address 0x4 - core index']
  #allocation1 [shape = 'u32[144,128]{1,0:T(1,128)}', space=vmem, size = 0x12000, scoped, tag = 'internal scratch']
  %s0 = inlined_call_operand.vmem [shape: f32[128,128], index: 0, kind: input, shape index: {}]
  %s1 = inlined_call_operand.vmem [shape: f32[72,128], index: 1, kind: input, shape index: {}]
  %s2 = inlined_call_operand.vmem [shape: f32[72,128], index: 2, kind: input, shape index: {}]
  %s3 = inlined_call_operand.vmem [shape: f32[72,128], index: 3, kind: input, shape index: {}]
  %s4 = inlined_call_operand.vmem [shape: f32[72,128], index: 4, kind: input, shape index: {}]
  %s5 = inlined_call_operand.vmem [shape: f32[12,128], index: 5, kind: input, shape index: {}]
  %s6 = inlined_call_operand.vmem [shape: f32[12,72], index: 6, kind: input, shape index: {}]
  %s7 = inlined_call_operand.vmem [shape: f32[12,72], index: 7, kind: input, shape index: {}]
  %s8 = inlined_call_operand.vmem [shape: f32[12,72], index: 8, kind: input, shape index: {}]
  %s9 = inlined_call_operand.vmem [shape: f32[12,72], index: 9, kind: input, shape index: {}]
  %s10 = inlined_call_operand.vmem [shape: f32[12,1], index: 10, kind: input, shape index: {}]
  %s11 = inlined_call_operand.vmem [shape: f32[12,128], index: 11, kind: output, shape index: {}]
  %s12 = sld [smem:[#allocation0]]
  $region54: #{generator_forward.19} parent=0
    _
  %s14 = ssub.s32 1, %s12
  %s15 = scalar_select 0, %s14, %s12
  // Predicated region
  $region2: #{generator_forward.19} parent=0 // pred_check
    _
  $region3: #{generator_forward.19} parent=0 // pred_check_branch
    %17 = sbr.rel (0) target = $region5
  $region4: #{generator_forward.19} parent=0 // pred_region
    _
  $region5: #{generator_forward.19} parent=0 // pred_fallthru
    _
  // Predicated region
  $region6: #{generator_forward.19} parent=0 // pred_check
    _
  $region7: #{generator_forward.19} parent=0 // pred_check_branch
    %19 = sbr.rel (0) target = $region9
  $region8: #{generator_forward.19} parent=0 // pred_region
    _
  $region9: #{generator_forward.19} parent=0 // pred_fallthru
    _
  // Predicated region
  $region10: #{generator_forward.19} parent=0 // pred_check
    _
  $region11: #{generator_forward.19} parent=0 // pred_check_branch
    %21 = sbr.rel (0) target = $region13
  $region12: #{generator_forward.19} parent=0 // pred_region
    _
  $region13: #{generator_forward.19} parent=0 // pred_fallthru
    _
  // Predicated region
  $region14: #{generator_forward.19} parent=0 // pred_check
    _
  $region15: #{generator_forward.19} parent=0 // pred_check_branch
    %23 = sbr.rel (0) target = $region17
  $region16: #{generator_forward.19} parent=0 // pred_region
    _
  $region17: #{generator_forward.19} parent=0 // pred_fallthru
    _
  // Predicated region
  $region18: #{generator_forward.19} parent=0 // pred_check
    _
  $region19: #{generator_forward.19} parent=0 // pred_check_branch
    %25 = sbr.rel (0) target = $region21
  $region20: #{generator_forward.19} parent=0 // pred_region
    _
  $region21: #{generator_forward.19} parent=0 // pred_fallthru
    _
  // Predicated region
  $region22: #{generator_forward.19} parent=0 // pred_check
    _
  $region23: #{generator_forward.19} parent=0 // pred_check_branch
    %27 = sbr.rel (0) target = $region25
  $region24: #{generator_forward.19} parent=0 // pred_region
    _
  $region25: #{generator_forward.19} parent=0 // pred_fallthru
    _
  // Predicated region
  $region26: #{generator_forward.19} parent=0 // pred_check
    _
  $region27: #{generator_forward.19} parent=0 // pred_check_branch
    %29 = sbr.rel (0) target = $region29
  $region28: #{generator_forward.19} parent=0 // pred_region
    _
  $region29: #{generator_forward.19} parent=0 // pred_fallthru
    _
  // Predicated region
  $region30: #{generator_forward.19} parent=0 // pred_check
    _
  $region31: #{generator_forward.19} parent=0 // pred_check_branch
    %31 = sbr.rel (0) target = $region33
  $region32: #{generator_forward.19} parent=0 // pred_region
    _
  $region33: #{generator_forward.19} parent=0 // pred_fallthru
    _
  // Predicated region
  $region34: #{generator_forward.19} parent=0 // pred_check
    _
  $region35: #{generator_forward.19} parent=0 // pred_check_branch
    %33 = sbr.rel (0) target = $region37
  $region36: #{generator_forward.19} parent=0 // pred_region
    _
  $region37: #{generator_forward.19} parent=0 // pred_fallthru
    _
  // Predicated region
  $region38: #{generator_forward.19} parent=0 // pred_check
    _
  $region39: #{generator_forward.19} parent=0 // pred_check_branch
    %35 = sbr.rel (0) target = $region41
  $region40: #{generator_forward.19} parent=0 // pred_region
    _
  $region41: #{generator_forward.19} parent=0 // pred_fallthru
    _
  // Predicated region
  $region42: #{generator_forward.19} parent=0 // pred_check
    _
  $region43: #{generator_forward.19} parent=0 // pred_check_branch
    %37 = sbr.rel (0) target = $region45
  $region44: #{generator_forward.19} parent=0 // pred_region
    _
  $region45: #{generator_forward.19} parent=0 // pred_fallthru
    _
  %v38 = vld [vmem:[%s10] sm:$0xff]
  %v39 = vld [vmem:[%s10 + $0x8] sm:$0xf]
  %v40 = vld [vmem:[%s5] sm:$0xff]
  %v41 = vld [vmem:[%s5 + $0x8] sm:$0xf]
  %v42 = vld [vmem:[%s0] sm:$0xff]
  %v43 = vld [vmem:[%s0 + $0x8] sm:$0xff]
  %v44 = vld [vmem:[%s0 + $0x10] sm:$0xff]
  %v45 = vld [vmem:[%s0 + $0x18] sm:$0xff]
  %v46 = vld [vmem:[%s0 + $0x20] sm:$0xff]
  %v47 = vld [vmem:[%s0 + $0x28] sm:$0xff]
  %v48 = vld [vmem:[%s0 + $0x30] sm:$0xff]
  %v49 = vld [vmem:[%s0 + $0x38] sm:$0xff]
  %v50 = vld [vmem:[%s0 + $0x40] sm:$0xff]
  %v51 = vld [vmem:[%s0 + $0x48] sm:$0xff]
  %v52 = vld [vmem:[%s0 + $0x50] sm:$0xff]
  %v53 = vld [vmem:[%s0 + $0x58] sm:$0xff]
  %v54 = vld [vmem:[%s0 + $0x60] sm:$0xff]
  %v55 = vld [vmem:[%s0 + $0x68] sm:$0xff]
  %v56 = vld [vmem:[%s0 + $0x70] sm:$0xff]
  %v57 = vld [vmem:[%s0 + $0x78] sm:$0xff]
  %58 = vmatprep.subr.mxu0 0.0
  %59 = vmatpush1.msra.mxu0 %v42
  %60 = vmatprep.subr.mxu0 0.0
  %61 = vmatpush1.msra.mxu0 %v43
  %62 = vmatprep.subr.mxu0 0.0
  %63 = vmatpush1.msra.mxu0 %v44
  %64 = vmatprep.subr.mxu0 0.0
  %65 = vmatpush1.msra.mxu0 %v45
  %66 = vmatprep.subr.mxu0 0.0
  %67 = vmatpush1.msra.mxu0 %v46
  %68 = vmatprep.subr.mxu0 0.0
  %69 = vmatpush1.msra.mxu0 %v47
  %70 = vmatprep.subr.mxu0 0.0
  %71 = vmatpush1.msra.mxu0 %v48
  %72 = vmatprep.subr.mxu0 0.0
  %73 = vmatpush1.msra.mxu0 %v49
  %74 = vmatprep.subr.mxu0 0.0
  %75 = vmatpush1.msra.mxu0 %v50
  %76 = vmatprep.subr.mxu0 0.0
  %77 = vmatpush1.msra.mxu0 %v51
  %78 = vmatprep.subr.mxu0 0.0
  %79 = vmatpush1.msra.mxu0 %v52
  %80 = vmatprep.subr.mxu0 0.0
  %81 = vmatpush1.msra.mxu0 %v53
  %82 = vmatprep.subr.mxu0 0.0
  %83 = vmatpush1.msra.mxu0 %v54
  %84 = vmatprep.subr.mxu0 0.0
  %85 = vmatpush1.msra.mxu0 %v55
  %86 = vmatprep.subr.mxu0 0.0
  %87 = vmatpush1.msra.mxu0 %v56
  %88 = vmatprep.subr.mxu0 0.0
  %89 = vmatpush1.msra.mxu0 %v57
  %90 = vmatprep.subr.mxu0 0.0
  %91 = vmatpush1.msra.mxu0 0.0
  %92 = vmatprep.subr.mxu0 0.0
  %93 = vmatpush1.msra.mxu0 0.0
  %94 = vmatprep.subr.mxu0 0.0
  %95 = vmatpush1.msra.mxu0 0.0
  %96 = vmatprep.subr.mxu0 0.0
  %97 = vmatpush1.msra.mxu0 0.0
  %98 = vmatprep.subr.mxu0 0.0
  %99 = vmatpush1.msra.mxu0 0.0
  %100 = vmatprep.subr.mxu0 0.0
  %101 = vmatpush1.msra.mxu0 0.0
  %102 = vmatprep.subr.mxu0 0.0
  %103 = vmatpush1.msra.mxu0 0.0
  %104 = vmatprep.subr.mxu0 0.0
  %105 = vmatpush1.msra.mxu0 0.0
  %106 = vmatprep.subr.mxu0 0.0
  %107 = vmatpush1.msra.mxu0 0.0
  %108 = vmatprep.subr.mxu0 0.0
  %109 = vmatpush1.msra.mxu0 0.0
  %110 = vmatprep.subr.mxu0 0.0
  %111 = vmatpush1.msra.mxu0 0.0
  %112 = vmatprep.subr.mxu0 0.0
  %113 = vmatpush1.msra.mxu0 0.0
  %114 = vmatprep.subr.mxu0 0.0
  %115 = vmatpush1.msra.mxu0 0.0
  %116 = vmatprep.subr.mxu0 0.0
  %117 = vmatpush1.msra.mxu0 0.0
  %118 = vmatprep.subr.mxu0 0.0
  %119 = vmatpush1.msra.mxu0 0.0
  %120 = vmatprep.subr.mxu0 0.0
  %121 = vmatpush1.msra.mxu0 0.0
  %122 = vmatprep.mubr.f32.mxu0 0.0
  %123 = vmatmul.mubr.f32.gmra.mrb[0].mxu0 %v40
  %v124 = vpop.f32.mrb[0].mxu0
  %v125 = vadd.f32 0.0, %v124
  %v126 = vpop.f32.mrb[0].mxu0
  %127 = vmatprep.mubr.f32.mxu0 0.0
  %128 = vmatmul.mubr.f32.gmra.mrb[0].mxu0 %v41
  %v129 = vpop.f32.mrb[0].mxu0
  %v130 = vadd.f32 0.0, %v129
  %v131 = vpop.f32.mrb[0].mxu0
  %132 = vdwg.mxu0
  %134 = vset.pattern.permute.xlu0 0
  %135 = vperm.xlu0 %134, %v38
  %v136 = vpop.permute.xlu0 %135
  %139 = vset.pattern.permute.xlu0 0
  %140 = vperm.xlu0 %139, %v39
  %v141 = vpop.permute.xlu0 %140
  %v143 = vadd.f32 %v136, %v125
  %v144 = vadd.f32 %v141, %v130
  %v145 = vld [vmem:[%s6] sm:$0xff]
  %v146 = vld [vmem:[%s6 + $0x8] sm:$0xf]
  %v147 = vld [vmem:[%s1] sm:$0xff]
  %v148 = vld [vmem:[%s1 + $0x8] sm:$0xff]
  %v149 = vld [vmem:[%s1 + $0x10] sm:$0xff]
  %v150 = vld [vmem:[%s1 + $0x18] sm:$0xff]
  %v151 = vld [vmem:[%s1 + $0x20] sm:$0xff]
  %v152 = vld [vmem:[%s1 + $0x28] sm:$0xff]
  %v153 = vld [vmem:[%s1 + $0x30] sm:$0xff]
  %v154 = vld [vmem:[%s1 + $0x38] sm:$0xff]
  %v155 = vld [vmem:[%s1 + $0x40] sm:$0xff]
  %vm156 = vcmask 588800
  %v158 = vsel %vm156, %v145, 0
  %v161 = vsel %vm156, %v146, 0
  %163 = vmatprep.subr.mxu0 0.0
  %164 = vmatpush1.msra.mxu0 %v147
  %165 = vmatprep.subr.mxu0 0.0
  %166 = vmatpush1.msra.mxu0 %v148
  %167 = vmatprep.subr.mxu0 0.0
  %168 = vmatpush1.msra.mxu0 %v149
  %169 = vmatprep.subr.mxu0 0.0
  %170 = vmatpush1.msra.mxu0 %v150
  %171 = vmatprep.subr.mxu0 0.0
  %172 = vmatpush1.msra.mxu0 %v151
  %173 = vmatprep.subr.mxu0 0.0
  %174 = vmatpush1.msra.mxu0 %v152
  %175 = vmatprep.subr.mxu0 0.0
  %176 = vmatpush1.msra.mxu0 %v153
  %177 = vmatprep.subr.mxu0 0.0
  %178 = vmatpush1.msra.mxu0 %v154
  %179 = vmatprep.subr.mxu0 0.0
  %180 = vmatpush1.msra.mxu0 %v155
  %181 = vmatprep.subr.mxu0 0.0
  %182 = vmatpush1.msra.mxu0 0.0
  %183 = vmatprep.subr.mxu0 0.0
  %184 = vmatpush1.msra.mxu0 0.0
  %185 = vmatprep.subr.mxu0 0.0
  %186 = vmatpush1.msra.mxu0 0.0
  %187 = vmatprep.subr.mxu0 0.0
  %188 = vmatpush1.msra.mxu0 0.0
  %189 = vmatprep.subr.mxu0 0.0
  %190 = vmatpush1.msra.mxu0 0.0
  %191 = vmatprep.subr.mxu0 0.0
  %192 = vmatpush1.msra.mxu0 0.0
  %193 = vmatprep.subr.mxu0 0.0
  %194 = vmatpush1.msra.mxu0 0.0
  %195 = vmatprep.subr.mxu0 0.0
  %196 = vmatpush1.msra.mxu0 0.0
  %197 = vmatprep.subr.mxu0 0.0
  %198 = vmatpush1.msra.mxu0 0.0
  %199 = vmatprep.subr.mxu0 0.0
  %200 = vmatpush1.msra.mxu0 0.0
  %201 = vmatprep.subr.mxu0 0.0
  %202 = vmatpush1.msra.mxu0 0.0
  %203 = vmatprep.subr.mxu0 0.0
  %204 = vmatpush1.msra.mxu0 0.0
  %205 = vmatprep.subr.mxu0 0.0
  %206 = vmatpush1.msra.mxu0 0.0
  %207 = vmatprep.subr.mxu0 0.0
  %208 = vmatpush1.msra.mxu0 0.0
  %209 = vmatprep.subr.mxu0 0.0
  %210 = vmatpush1.msra.mxu0 0.0
  %211 = vmatprep.subr.mxu0 0.0
  %212 = vmatpush1.msra.mxu0 0.0
  %213 = vmatprep.subr.mxu0 0.0
  %214 = vmatpush1.msra.mxu0 0.0
  %215 = vmatprep.subr.mxu0 0.0
  %216 = vmatpush1.msra.mxu0 0.0
  %217 = vmatprep.subr.mxu0 0.0
  %218 = vmatpush1.msra.mxu0 0.0
  %219 = vmatprep.subr.mxu0 0.0
  %220 = vmatpush1.msra.mxu0 0.0
  %221 = vmatprep.subr.mxu0 0.0
  %222 = vmatpush1.msra.mxu0 0.0
  %223 = vmatprep.subr.mxu0 0.0
  %224 = vmatpush1.msra.mxu0 0.0
  %225 = vmatprep.subr.mxu0 0.0
  %226 = vmatpush1.msra.mxu0 0.0
  %227 = vmatprep.mubr.f32.mxu0 0.0
  %228 = vmatmul.mubr.f32.gmra.mrb[0].mxu0 %v158
  %v229 = vpop.f32.mrb[0].mxu0
  %v230 = vadd.f32 0.0, %v229
  %v231 = vpop.f32.mrb[0].mxu0
  %232 = vmatprep.mubr.f32.mxu0 0.0
  %233 = vmatmul.mubr.f32.gmra.mrb[0].mxu0 %v161
  %v234 = vpop.f32.mrb[0].mxu0
  %v235 = vadd.f32 0.0, %v234
  %v236 = vpop.f32.mrb[0].mxu0
  %237 = vdwg.mxu0
  %v238 = vadd.f32 %v143, %v230
  %v239 = vadd.f32 %v144, %v235
  %v240 = vld [vmem:[%s7] sm:$0xff]
  %v241 = vld [vmem:[%s7 + $0x8] sm:$0xf]
  %v242 = vld [vmem:[%s2] sm:$0xff]
  %v243 = vld [vmem:[%s2 + $0x8] sm:$0xff]
  %v244 = vld [vmem:[%s2 + $0x10] sm:$0xff]
  %v245 = vld [vmem:[%s2 + $0x18] sm:$0xff]
  %v246 = vld [vmem:[%s2 + $0x20] sm:$0xff]
  %v247 = vld [vmem:[%s2 + $0x28] sm:$0xff]
  %v248 = vld [vmem:[%s2 + $0x30] sm:$0xff]
  %v249 = vld [vmem:[%s2 + $0x38] sm:$0xff]
  %v250 = vld [vmem:[%s2 + $0x40] sm:$0xff]
  %v252 = vsel %vm156, %v240, 0
  %v255 = vsel %vm156, %v241, 0
  %257 = vmatprep.subr.mxu0 0.0
  %258 = vmatpush1.msra.mxu0 %v242
  %259 = vmatprep.subr.mxu0 0.0
  %260 = vmatpush1.msra.mxu0 %v243
  %261 = vmatprep.subr.mxu0 0.0
  %262 = vmatpush1.msra.mxu0 %v244
  %263 = vmatprep.subr.mxu0 0.0
  %264 = vmatpush1.msra.mxu0 %v245
  %265 = vmatprep.subr.mxu0 0.0
  %266 = vmatpush1.msra.mxu0 %v246
  %267 = vmatprep.subr.mxu0 0.0
  %268 = vmatpush1.msra.mxu0 %v247
  %269 = vmatprep.subr.mxu0 0.0
  %270 = vmatpush1.msra.mxu0 %v248
  %271 = vmatprep.subr.mxu0 0.0
  %272 = vmatpush1.msra.mxu0 %v249
  %273 = vmatprep.subr.mxu0 0.0
  %274 = vmatpush1.msra.mxu0 %v250
  %275 = vmatprep.subr.mxu0 0.0
  %276 = vmatpush1.msra.mxu0 0.0
  %277 = vmatprep.subr.mxu0 0.0
  %278 = vmatpush1.msra.mxu0 0.0
  %279 = vmatprep.subr.mxu0 0.0
  %280 = vmatpush1.msra.mxu0 0.0
  %281 = vmatprep.subr.mxu0 0.0
  %282 = vmatpush1.msra.mxu0 0.0
  %283 = vmatprep.subr.mxu0 0.0
  %284 = vmatpush1.msra.mxu0 0.0
  %285 = vmatprep.subr.mxu0 0.0
  %286 = vmatpush1.msra.mxu0 0.0
  %287 = vmatprep.subr.mxu0 0.0
  %288 = vmatpush1.msra.mxu0 0.0
  %289 = vmatprep.subr.mxu0 0.0
  %290 = vmatpush1.msra.mxu0 0.0
  %291 = vmatprep.subr.mxu0 0.0
  %292 = vmatpush1.msra.mxu0 0.0
  %293 = vmatprep.subr.mxu0 0.0
  %294 = vmatpush1.msra.mxu0 0.0
  %295 = vmatprep.subr.mxu0 0.0
  %296 = vmatpush1.msra.mxu0 0.0
  %297 = vmatprep.subr.mxu0 0.0
  %298 = vmatpush1.msra.mxu0 0.0
  %299 = vmatprep.subr.mxu0 0.0
  %300 = vmatpush1.msra.mxu0 0.0
  %301 = vmatprep.subr.mxu0 0.0
  %302 = vmatpush1.msra.mxu0 0.0
  %303 = vmatprep.subr.mxu0 0.0
  %304 = vmatpush1.msra.mxu0 0.0
  %305 = vmatprep.subr.mxu0 0.0
  %306 = vmatpush1.msra.mxu0 0.0
  %307 = vmatprep.subr.mxu0 0.0
  %308 = vmatpush1.msra.mxu0 0.0
  %309 = vmatprep.subr.mxu0 0.0
  %310 = vmatpush1.msra.mxu0 0.0
  %311 = vmatprep.subr.mxu0 0.0
  %312 = vmatpush1.msra.mxu0 0.0
  %313 = vmatprep.subr.mxu0 0.0
  %314 = vmatpush1.msra.mxu0 0.0
  %315 = vmatprep.subr.mxu0 0.0
  %316 = vmatpush1.msra.mxu0 0.0
  %317 = vmatprep.subr.mxu0 0.0
  %318 = vmatpush1.msra.mxu0 0.0
  %319 = vmatprep.subr.mxu0 0.0
  %320 = vmatpush1.msra.mxu0 0.0
  %321 = vmatprep.mubr.f32.mxu0 0.0
  %322 = vmatmul.mubr.f32.gmra.mrb[0].mxu0 %v252
  %v323 = vpop.f32.mrb[0].mxu0
  %v324 = vadd.f32 0.0, %v323
  %v325 = vpop.f32.mrb[0].mxu0
  %326 = vmatprep.mubr.f32.mxu0 0.0
  %327 = vmatmul.mubr.f32.gmra.mrb[0].mxu0 %v255
  %v328 = vpop.f32.mrb[0].mxu0
  %v329 = vadd.f32 0.0, %v328
  %v330 = vpop.f32.mrb[0].mxu0
  %331 = vdwg.mxu0
  %v332 = vadd.f32 %v238, %v324
  %v333 = vadd.f32 %v239, %v329
  %v334 = vld [vmem:[%s8] sm:$0xff]
  %v335 = vld [vmem:[%s8 + $0x8] sm:$0xf]
  %v336 = vld [vmem:[%s3] sm:$0xff]
  %v337 = vld [vmem:[%s3 + $0x8] sm:$0xff]
  %v338 = vld [vmem:[%s3 + $0x10] sm:$0xff]
  %v339 = vld [vmem:[%s3 + $0x18] sm:$0xff]
  %v340 = vld [vmem:[%s3 + $0x20] sm:$0xff]
  %v341 = vld [vmem:[%s3 + $0x28] sm:$0xff]
  %v342 = vld [vmem:[%s3 + $0x30] sm:$0xff]
  %v343 = vld [vmem:[%s3 + $0x38] sm:$0xff]
  %v344 = vld [vmem:[%s3 + $0x40] sm:$0xff]
  %v346 = vsel %vm156, %v334, 0
  %v349 = vsel %vm156, %v335, 0
  %351 = vmatprep.subr.mxu0 0.0
  %352 = vmatpush1.msra.mxu0 %v336
  %353 = vmatprep.subr.mxu0 0.0
  %354 = vmatpush1.msra.mxu0 %v337
  %355 = vmatprep.subr.mxu0 0.0
  %356 = vmatpush1.msra.mxu0 %v338
  %357 = vmatprep.subr.mxu0 0.0
  %358 = vmatpush1.msra.mxu0 %v339
  %359 = vmatprep.subr.mxu0 0.0
  %360 = vmatpush1.msra.mxu0 %v340
  %361 = vmatprep.subr.mxu0 0.0
  %362 = vmatpush1.msra.mxu0 %v341
  %363 = vmatprep.subr.mxu0 0.0
  %364 = vmatpush1.msra.mxu0 %v342
  %365 = vmatprep.subr.mxu0 0.0
  %366 = vmatpush1.msra.mxu0 %v343
  %367 = vmatprep.subr.mxu0 0.0
  %368 = vmatpush1.msra.mxu0 %v344
  %369 = vmatprep.subr.mxu0 0.0
  %370 = vmatpush1.msra.mxu0 0.0
  %371 = vmatprep.subr.mxu0 0.0
  %372 = vmatpush1.msra.mxu0 0.0
  %373 = vmatprep.subr.mxu0 0.0
  %374 = vmatpush1.msra.mxu0 0.0
  %375 = vmatprep.subr.mxu0 0.0
  %376 = vmatpush1.msra.mxu0 0.0
  %377 = vmatprep.subr.mxu0 0.0
  %378 = vmatpush1.msra.mxu0 0.0
  %379 = vmatprep.subr.mxu0 0.0
  %380 = vmatpush1.msra.mxu0 0.0
  %381 = vmatprep.subr.mxu0 0.0
  %382 = vmatpush1.msra.mxu0 0.0
  %383 = vmatprep.subr.mxu0 0.0
  %384 = vmatpush1.msra.mxu0 0.0
  %385 = vmatprep.subr.mxu0 0.0
  %386 = vmatpush1.msra.mxu0 0.0
  %387 = vmatprep.subr.mxu0 0.0
  %388 = vmatpush1.msra.mxu0 0.0
  %389 = vmatprep.subr.mxu0 0.0
  %390 = vmatpush1.msra.mxu0 0.0
  %391 = vmatprep.subr.mxu0 0.0
  %392 = vmatpush1.msra.mxu0 0.0
  %393 = vmatprep.subr.mxu0 0.0
  %394 = vmatpush1.msra.mxu0 0.0
  %395 = vmatprep.subr.mxu0 0.0
  %396 = vmatpush1.msra.mxu0 0.0
  %397 = vmatprep.subr.mxu0 0.0
  %398 = vmatpush1.msra.mxu0 0.0
  %399 = vmatprep.subr.mxu0 0.0
  %400 = vmatpush1.msra.mxu0 0.0
  %401 = vmatprep.subr.mxu0 0.0
  %402 = vmatpush1.msra.mxu0 0.0
  %403 = vmatprep.subr.mxu0 0.0
  %404 = vmatpush1.msra.mxu0 0.0
  %405 = vmatprep.subr.mxu0 0.0
  %406 = vmatpush1.msra.mxu0 0.0
  %407 = vmatprep.subr.mxu0 0.0
  %408 = vmatpush1.msra.mxu0 0.0
  %409 = vmatprep.subr.mxu0 0.0
  %410 = vmatpush1.msra.mxu0 0.0
  %411 = vmatprep.subr.mxu0 0.0
  %412 = vmatpush1.msra.mxu0 0.0
  %413 = vmatprep.subr.mxu0 0.0
  %414 = vmatpush1.msra.mxu0 0.0
  %415 = vmatprep.mubr.f32.mxu0 0.0
  %416 = vmatmul.mubr.f32.gmra.mrb[0].mxu0 %v346
  %v417 = vpop.f32.mrb[0].mxu0
  %v418 = vadd.f32 0.0, %v417
  %v419 = vpop.f32.mrb[0].mxu0
  %420 = vmatprep.mubr.f32.mxu0 0.0
  %421 = vmatmul.mubr.f32.gmra.mrb[0].mxu0 %v349
  %v422 = vpop.f32.mrb[0].mxu0
  %v423 = vadd.f32 0.0, %v422
  %v424 = vpop.f32.mrb[0].mxu0
  %425 = vdwg.mxu0
  %v426 = vadd.f32 %v332, %v418
  %v427 = vadd.f32 %v333, %v423
  %v428 = vld [vmem:[%s9] sm:$0xff]
  %v429 = vld [vmem:[%s9 + $0x8] sm:$0xf]
  %v430 = vld [vmem:[%s4] sm:$0xff]
  %v431 = vld [vmem:[%s4 + $0x8] sm:$0xff]
  %v432 = vld [vmem:[%s4 + $0x10] sm:$0xff]
  %v433 = vld [vmem:[%s4 + $0x18] sm:$0xff]
  %v434 = vld [vmem:[%s4 + $0x20] sm:$0xff]
  %v435 = vld [vmem:[%s4 + $0x28] sm:$0xff]
  %v436 = vld [vmem:[%s4 + $0x30] sm:$0xff]
  %v437 = vld [vmem:[%s4 + $0x38] sm:$0xff]
  %v438 = vld [vmem:[%s4 + $0x40] sm:$0xff]
  %v440 = vsel %vm156, %v428, 0
  %v443 = vsel %vm156, %v429, 0
  %445 = vmatprep.subr.mxu0 0.0
  %446 = vmatpush1.msra.mxu0 %v430
  %447 = vmatprep.subr.mxu0 0.0
  %448 = vmatpush1.msra.mxu0 %v431
  %449 = vmatprep.subr.mxu0 0.0
  %450 = vmatpush1.msra.mxu0 %v432
  %451 = vmatprep.subr.mxu0 0.0
  %452 = vmatpush1.msra.mxu0 %v433
  %453 = vmatprep.subr.mxu0 0.0
  %454 = vmatpush1.msra.mxu0 %v434
  %455 = vmatprep.subr.mxu0 0.0
  %456 = vmatpush1.msra.mxu0 %v435
  %457 = vmatprep.subr.mxu0 0.0
  %458 = vmatpush1.msra.mxu0 %v436
  %459 = vmatprep.subr.mxu0 0.0
  %460 = vmatpush1.msra.mxu0 %v437
  %461 = vmatprep.subr.mxu0 0.0
  %462 = vmatpush1.msra.mxu0 %v438
  %463 = vmatprep.subr.mxu0 0.0
  %464 = vmatpush1.msra.mxu0 0.0
  %465 = vmatprep.subr.mxu0 0.0
  %466 = vmatpush1.msra.mxu0 0.0
  %467 = vmatprep.subr.mxu0 0.0
  %468 = vmatpush1.msra.mxu0 0.0
  %469 = vmatprep.subr.mxu0 0.0
  %470 = vmatpush1.msra.mxu0 0.0
  %471 = vmatprep.subr.mxu0 0.0
  %472 = vmatpush1.msra.mxu0 0.0
  %473 = vmatprep.subr.mxu0 0.0
  %474 = vmatpush1.msra.mxu0 0.0
  %475 = vmatprep.subr.mxu0 0.0
  %476 = vmatpush1.msra.mxu0 0.0
  %477 = vmatprep.subr.mxu0 0.0
  %478 = vmatpush1.msra.mxu0 0.0
  %479 = vmatprep.subr.mxu0 0.0
  %480 = vmatpush1.msra.mxu0 0.0
  %481 = vmatprep.subr.mxu0 0.0
  %482 = vmatpush1.msra.mxu0 0.0
  %483 = vmatprep.subr.mxu0 0.0
  %484 = vmatpush1.msra.mxu0 0.0
  %485 = vmatprep.subr.mxu0 0.0
  %486 = vmatpush1.msra.mxu0 0.0
  %487 = vmatprep.subr.mxu0 0.0
  %488 = vmatpush1.msra.mxu0 0.0
  %489 = vmatprep.subr.mxu0 0.0
  %490 = vmatpush1.msra.mxu0 0.0
  %491 = vmatprep.subr.mxu0 0.0
  %492 = vmatpush1.msra.mxu0 0.0
  %493 = vmatprep.subr.mxu0 0.0
  %494 = vmatpush1.msra.mxu0 0.0
  %495 = vmatprep.subr.mxu0 0.0
  %496 = vmatpush1.msra.mxu0 0.0
  %497 = vmatprep.subr.mxu0 0.0
  %498 = vmatpush1.msra.mxu0 0.0
  %499 = vmatprep.subr.mxu0 0.0
  %500 = vmatpush1.msra.mxu0 0.0
  %501 = vmatprep.subr.mxu0 0.0
  %502 = vmatpush1.msra.mxu0 0.0
  %503 = vmatprep.subr.mxu0 0.0
  %504 = vmatpush1.msra.mxu0 0.0
  %505 = vmatprep.subr.mxu0 0.0
  %506 = vmatpush1.msra.mxu0 0.0
  %507 = vmatprep.subr.mxu0 0.0
  %508 = vmatpush1.msra.mxu0 0.0
  %509 = vmatprep.mubr.f32.mxu0 0.0
  %510 = vmatmul.mubr.f32.gmra.mrb[0].mxu0 %v440
  %v511 = vpop.f32.mrb[0].mxu0
  %v512 = vadd.f32 0.0, %v511
  %v513 = vpop.f32.mrb[0].mxu0
  %514 = vmatprep.mubr.f32.mxu0 0.0
  %515 = vmatmul.mubr.f32.gmra.mrb[0].mxu0 %v443
  %v516 = vpop.f32.mrb[0].mxu0
  %v517 = vadd.f32 0.0, %v516
  %v518 = vpop.f32.mrb[0].mxu0
  %519 = vdwg.mxu0
  %v520 = vadd.f32 %v426, %v512
  %v521 = vadd.f32 %v427, %v517
  %v522 = vtanh.pop %v520
  %v523 = vtanh.pop %v521
  %524 = vst [vmem:[%s11] sm:$0xff] %v522
  %525 = vst [vmem:[%s11 + $0x8] sm:$0xf] %v523
  // Predicated region
  $region46: #{generator_forward.19} parent=0 // pred_check
    _
  $region47: #{generator_forward.19} parent=0 // pred_check_branch
    %527 = sbr.rel (0) target = $region49
  $region48: #{generator_forward.19} parent=0 // pred_region
    _
  $region49: #{generator_forward.19} parent=0 // pred_fallthru
    _
  // Predicated region
  $region50: #{generator_forward.19} parent=0 // pred_check
    _
  $region51: #{generator_forward.19} parent=0 // pred_check_branch
    %529 = sbr.rel (0) target = $region53
  $region52: #{generator_forward.19} parent=0 // pred_region
    _
  $region53: #{generator_forward.19} parent=0 // pred_fallthru
    _

</llo_original>
